<compile_context>
chip_gen: v5e
topology: v5e:2x2
jax: 0.10.0
libtpu: 0.0.40
codegen_flags: <defaults>
</compile_context>

<pallas_src>
import functools

import jax
import jax.numpy as jnp
from jax.experimental import pallas as pl
from jax.experimental.pallas import tpu as pltpu


def _attention_kernel(x_full_ref, x_tile_ref, wq_ref, wkv_ref, wout_ref,
                      bout_ref, o_ref, k_scratch, v_scratch, *, heads, dim_head):
    """One (batch, query-tile) grid step, channels-first (C, N) layout.

    x_full_ref: (1, C, N)        bf16  full sequence (for K/V projection)
    x_tile_ref: (1, C, tq)       bf16  query tile of the sequence
    wq_ref:     (hidden, C)      bf16  Q projection (softmax scale pre-folded)
    wkv_ref:    (2*hidden, C)    bf16  K/V projection
    wout_ref:   (C, hidden)      bf16  output projection
    bout_ref:   (C, 1)           f32   output bias
    o_ref:      (1, C, tq)       f32   output tile (lane-dense last dim)
    k_scratch / v_scratch: (hidden, N) bf16, carried across query tiles.
    """
    hidden = heads * dim_head
    tq = x_tile_ref.shape[-1]
    qi = pl.program_id(1)

    # --- K/V projection: once per batch element (first query tile); the
    # --- scratch persists across the sequential query-tile grid axis.
    @pl.when(qi == 0)
    def _():
        x_full = x_full_ref[0]                                   # (C, N) bf16
        kv = jnp.dot(wkv_ref[...], x_full,
                     preferred_element_type=jnp.float32)         # (2*hidden, N) f32
        k_scratch[...] = kv[:hidden].astype(k_scratch.dtype)
        v_scratch[...] = kv[hidden:].astype(v_scratch.dtype)

    # --- Q projection for this query tile (scale already folded into Wq). ---
    x_tile = x_tile_ref[0]                                       # (C, tq) bf16
    q = jnp.dot(wq_ref[...], x_tile,
                preferred_element_type=jnp.float32)              # (hidden, tq) f32
    # (hidden, tq) -> (heads, tq, dim_head).  Only the small per-tile Q is
    # transposed; K/V stay in their natural (heads, dim_head, N) layout so the
    # large operands are never relayouted.
    qh = jnp.swapaxes(q.reshape(heads, dim_head, tq), 1, 2).astype(jnp.bfloat16)
    kh = k_scratch[...].reshape(heads, dim_head, -1)             # (h, d, N) bf16
    vh = v_scratch[...].reshape(heads, dim_head, -1)             # (h, d, N) bf16

    # --- heads-batched attention, bf16 MXU operands, f32 accumulation. ---
    sim = jnp.einsum('hid,hdj->hij', qh, kh,
                     preferred_element_type=jnp.float32)         # (h, tq, N) f32
    m = jnp.max(sim, axis=-1, keepdims=True)
    p = jnp.exp(sim - m)
    inv = pl.reciprocal(jnp.sum(p, axis=-1, keepdims=True), approx=True)
    attn = (p * inv).astype(jnp.bfloat16)                        # (h, tq, N) bf16

    out = jnp.einsum('hdj,hij->hdi', vh, attn,
                     preferred_element_type=jnp.float32)         # (h, d, tq) f32
    out = out.reshape(hidden, tq).astype(jnp.bfloat16)           # (hidden, tq)

    # --- Output 1x1 conv + bias; lane-dense (C, tq) store. ---
    y = jnp.dot(wout_ref[...], out,
                preferred_element_type=jnp.float32) + bout_ref[...]
    o_ref[0] = y.astype(o_ref.dtype)


def attention_pallas(x_nchw, w_qkv, w_out, b_out, *, heads=4, dim_head=32, tq=128):
    """x_nchw: (B, C, H, W); w_qkv: (3*hidden, C); w_out: (C, hidden); b_out: (C,)."""
    B, C, H, W = x_nchw.shape
    N = H * W
    hidden = heads * dim_head
    scale = dim_head ** (-0.5)
    tq = min(tq, N)
    assert N % tq == 0, "spatial size must be divisible by the query tile"

    # NCHW -> channels-first sequence layout (B, C, N): pure reshape, no
    # transpose needed in either direction.
    x_seq = x_nchw.reshape(B, C, N).astype(jnp.bfloat16)

    # Split the fused QKV weight once; fold the softmax scale into Wq
    # (tiny constant transform done at trace time, not in the hot path).
    w_q = (w_qkv[:hidden] * scale).astype(jnp.bfloat16)          # (hidden, C)
    w_kv = w_qkv[hidden:].astype(jnp.bfloat16)                   # (2*hidden, C)
    w_o = w_out.astype(jnp.bfloat16)                             # (C, hidden)
    b_o = b_out.reshape(C, 1).astype(jnp.float32)

    kernel = functools.partial(_attention_kernel, heads=heads, dim_head=dim_head)

    flops = B * (2 * N * C * 3 * hidden          # QKV projection
                 + 4 * heads * N * N * dim_head  # QK^T and attn@V
                 + 2 * N * hidden * C)           # output projection
    cost = pl.CostEstimate(
        flops=flops,
        transcendentals=B * heads * N * N,
        bytes_accessed=(x_seq.size * 2 + B * C * N * 4
                        + (w_q.size + w_kv.size + w_o.size) * 2 + b_o.size * 4))

    out_seq = pl.pallas_call(
        kernel,
        out_shape=jax.ShapeDtypeStruct((B, C, N), x_nchw.dtype),
        grid_spec=pltpu.PrefetchScalarGridSpec(
            num_scalar_prefetch=0,
            grid=(B, N // tq),
            in_specs=[
                # Full sequence (only re-DMA'd when the batch index changes).
                pl.BlockSpec((1, C, N), lambda b, qi: (b, 0, 0)),
                # Query tile of the same array (lane-dense, pipelined per step).
                pl.BlockSpec((1, C, tq), lambda b, qi: (b, 0, qi)),
                pl.BlockSpec((hidden, C), lambda b, qi: (0, 0)),
                pl.BlockSpec((2 * hidden, C), lambda b, qi: (0, 0)),
                pl.BlockSpec((C, hidden), lambda b, qi: (0, 0)),
                pl.BlockSpec((C, 1), lambda b, qi: (0, 0)),
            ],
            out_specs=pl.BlockSpec((1, C, tq), lambda b, qi: (b, 0, qi)),
            scratch_shapes=[pltpu.VMEM((hidden, N), jnp.bfloat16),
                            pltpu.VMEM((hidden, N), jnp.bfloat16)],
        ),
        compiler_params=pltpu.CompilerParams(
            # Batch axis shards across TensorCores (v7x megacore); the
            # query-tile axis is sequential because K/V are carried in scratch
            # across it.  VMEM use per step is O(heads*tq*N) + O(hidden*N),
            # well under the 32 MiB default scoped limit at these shapes.
            dimension_semantics=("parallel", "arbitrary")),
        cost_estimate=cost,
    )(x_seq, x_seq, w_q, w_kv, w_o, b_o)

    # (B, C, N) -> NCHW: pure reshape.
    return out_seq.reshape(B, C, H, W)


def attention_reference(x_nchw, w_qkv, w_out, b_out, *, heads=4, dim_head=32):
    """Pure-JAX f32 reference matching the PyTorch forward exactly."""
    B, C, H, W = x_nchw.shape
    N = H * W
    hidden = heads * dim_head
    scale = dim_head ** (-0.5)

    qkv = jnp.einsum('oc,bchw->bohw', w_qkv, x_nchw)             # (B, 3*hidden, H, W)
    q, k, v = jnp.split(qkv, 3, axis=1)

    def to_heads(t):  # 'b (h c) x y -> b h c (x y)'
        return t.reshape(B, heads, dim_head, N)

    q, k, v = map(to_heads, (q, k, v))
    q = q * scale
    sim = jnp.einsum('bhdi,bhdj->bhij', q, k)
    sim = sim - jnp.max(sim, axis=-1, keepdims=True)
    attn = jax.nn.softmax(sim, axis=-1)
    out = jnp.einsum('bhij,bhdj->bhid', attn, v)                 # (B, heads, N, dim_head)
    out = jnp.transpose(out, (0, 1, 3, 2)).reshape(B, hidden, H, W)
    return jnp.einsum('oc,bchw->bohw', w_out, out) + b_out[None, :, None, None]


if __name__ == "__main__":
    # Small shapes consistent with the module: dim=4 channels, 16x16 spatial.
    B, C, H, W = 2, 4, 16, 16
    heads, dim_head = 4, 32
    hidden = heads * dim_head

    key = jax.random.PRNGKey(0)
    kx, kq, ko, kb = jax.random.split(key, 4)

    x = jax.random.normal(kx, (B, C, H, W), dtype=jnp.float32)
    # Deterministic synthetic parameters (shapes from nn.Conv2d 1x1 weights).
    w_qkv = 0.1 * jax.random.normal(kq, (3 * hidden, C), dtype=jnp.float32)   # to_qkv.weight
    w_out = 0.1 * jax.random.normal(ko, (C, hidden), dtype=jnp.float32)       # to_out.weight
    b_out = 0.1 * jax.random.normal(kb, (C,), dtype=jnp.float32)              # to_out.bias

    y = attention_pallas(x, w_qkv, w_out, b_out, heads=heads, dim_head=dim_head)
    y = jax.block_until_ready(y)

    y_ref = attention_reference(x, w_qkv, w_out, b_out, heads=heads, dim_head=dim_head)
    assert y.shape == (B, C, H, W)
    # bf16 MXU operands + approx reciprocal -> slightly looser tolerance than pure f32.
    assert jnp.allclose(y, y_ref, atol=1e-2, rtol=1e-2), "mismatch vs reference"

    print("KERNEL_OK")
</pallas_src>

<mosaic_0001>
module attributes {stable_mosaic.version = 11 : i64} {
  func.func @_attention_kernel(%arg0: i32, %arg1: i32, %arg2: memref<1x4x256xbf16, #tpu.memory_space<vmem>>, %arg3: memref<1x4x128xbf16, #tpu.memory_space<vmem>>, %arg4: memref<128x4xbf16, #tpu.memory_space<vmem>>, %arg5: memref<256x4xbf16, #tpu.memory_space<vmem>>, %arg6: memref<4x128xbf16, #tpu.memory_space<vmem>>, %arg7: memref<4x1xf32, #tpu.memory_space<vmem>>, %arg8: memref<1x4x128xf32, #tpu.memory_space<vmem>>, %arg9: memref<128x256xbf16, #tpu.memory_space<vmem>>, %arg10: memref<128x256xbf16, #tpu.memory_space<vmem>>) attributes {dimension_semantics = [#tpu.dimension_semantics<parallel>, #tpu.dimension_semantics<arbitrary>], iteration_bounds = array<i64: 2, 2>, scalar_prefetch = 0 : i64, scratch_operands = 2 : i64, tpu.core_type = #tpu.core_type<tc>, window_params = [{transform_indices = @transform_0, window_bounds = array<i64: 1, 4, 256>}, {transform_indices = @transform_1, window_bounds = array<i64: 1, 4, 128>}, {pipeline_mode = #tpu.pipeline_mode<synchronous>, transform_indices = @transform_2, window_bounds = array<i64: 128, 4>}, {pipeline_mode = #tpu.pipeline_mode<synchronous>, transform_indices = @transform_3, window_bounds = array<i64: 256, 4>}, {pipeline_mode = #tpu.pipeline_mode<synchronous>, transform_indices = @transform_4, window_bounds = array<i64: 4, 128>}, {pipeline_mode = #tpu.pipeline_mode<synchronous>, transform_indices = @transform_5, window_bounds = array<i64: 4, 1>}, {transform_indices = @transform_6, window_bounds = array<i64: 1, 4, 128>}]} {
    %c0_i32 = arith.constant 0 : i32
    %0 = arith.cmpi eq, %arg1, %c0_i32 : i32
    %1 = arith.extui %0 : i1 to i32
    %c0_i32_0 = arith.constant 0 : i32
    %2 = arith.cmpi ne, %1, %c0_i32_0 : i32
    scf.if %2 {
      %c0_21 = arith.constant 0 : index
      %c0_22 = arith.constant 0 : index
      %c0_23 = arith.constant 0 : index
      %37 = vector.load %arg2[%c0_21, %c0_22, %c0_23] : memref<1x4x256xbf16, #tpu.memory_space<vmem>>, vector<1x4x256xbf16>
      %38 = vector.shape_cast %37 : vector<1x4x256xbf16> to vector<4x256xbf16>
      %c0_24 = arith.constant 0 : index
      %c0_25 = arith.constant 0 : index
      %39 = vector.load %arg5[%c0_24, %c0_25] : memref<256x4xbf16, #tpu.memory_space<vmem>>, vector<256x4xbf16>
      %cst_26 = arith.constant dense<0.000000e+00> : vector<256x256xf32>
      %40 = tpu.matmul %39, %38, %cst_26 {dimension_numbers = #tpu.dot_dimension_numbers<[1], [0], [0], [1], [0, 0, 1, 1], [], []>} : vector<256x4xbf16>, vector<4x256xbf16>, vector<256x256xf32> -> vector<256x256xf32>
      %41 = vector.extract_strided_slice %40 {offsets = [0, 0], sizes = [128, 256], strides = [1, 1]} : vector<256x256xf32> to vector<128x256xf32>
      %42 = arith.truncf %41 : vector<128x256xf32> to vector<128x256xbf16>
      %c0_27 = arith.constant 0 : index
      %c0_28 = arith.constant 0 : index
      %43 = vector.load %arg9[%c0_27, %c0_28] : memref<128x256xbf16, #tpu.memory_space<vmem>>, vector<128x256xbf16>
      tpu.vector_store %arg9[%c0_27, %c0_28], %42 {strides = array<i32>} : memref<128x256xbf16, #tpu.memory_space<vmem>>, vector<128x256xbf16>,
      %44 = vector.extract_strided_slice %40 {offsets = [128, 0], sizes = [128, 256], strides = [1, 1]} : vector<256x256xf32> to vector<128x256xf32>
      %45 = arith.truncf %44 : vector<128x256xf32> to vector<128x256xbf16>
      %c0_29 = arith.constant 0 : index
      %c0_30 = arith.constant 0 : index
      %46 = vector.load %arg10[%c0_29, %c0_30] : memref<128x256xbf16, #tpu.memory_space<vmem>>, vector<128x256xbf16>
      tpu.vector_store %arg10[%c0_29, %c0_30], %45 {strides = array<i32>} : memref<128x256xbf16, #tpu.memory_space<vmem>>, vector<128x256xbf16>,
    } else {
    }
    %c0 = arith.constant 0 : index
    %c0_1 = arith.constant 0 : index
    %c0_2 = arith.constant 0 : index
    %3 = vector.load %arg3[%c0, %c0_1, %c0_2] : memref<1x4x128xbf16, #tpu.memory_space<vmem>>, vector<1x4x128xbf16>
    %4 = vector.shape_cast %3 : vector<1x4x128xbf16> to vector<4x128xbf16>
    %c0_3 = arith.constant 0 : index
    %c0_4 = arith.constant 0 : index
    %5 = vector.load %arg4[%c0_3, %c0_4] : memref<128x4xbf16, #tpu.memory_space<vmem>>, vector<128x4xbf16>
    %cst = arith.constant dense<0.000000e+00> : vector<128x128xf32>
    %6 = tpu.matmul %5, %4, %cst {dimension_numbers = #tpu.dot_dimension_numbers<[1], [0], [0], [1], [0, 0, 1, 1], [], []>} : vector<128x4xbf16>, vector<4x128xbf16>, vector<128x128xf32> -> vector<128x128xf32>
    %7 = vector.shape_cast %6 : vector<128x128xf32> to vector<4x32x128xf32>
    %8 = tpu.transpose %7, [0, 2, 1] : vector<4x32x128xf32> -> vector<4x128x32xf32>
    %9 = arith.truncf %8 : vector<4x128x32xf32> to vector<4x128x32xbf16>
    %c0_5 = arith.constant 0 : index
    %c0_6 = arith.constant 0 : index
    %10 = vector.load %arg9[%c0_5, %c0_6] : memref<128x256xbf16, #tpu.memory_space<vmem>>, vector<128x256xbf16>
    %11 = vector.shape_cast %10 : vector<128x256xbf16> to vector<4x32x256xbf16>
    %c0_7 = arith.constant 0 : index
    %c0_8 = arith.constant 0 : index
    %12 = vector.load %arg10[%c0_7, %c0_8] : memref<128x256xbf16, #tpu.memory_space<vmem>>, vector<128x256xbf16>
    %13 = vector.shape_cast %12 : vector<128x256xbf16> to vector<4x32x256xbf16>
    "tpu.trace_start"() <{level = 10 : i32, message = "hid,hdj->hij"}> : () -> ()
    %cst_9 = arith.constant dense<0.000000e+00> : vector<4x128x256xf32>
    %14 = tpu.matmul %9, %11, %cst_9 {dimension_numbers = #tpu.dot_dimension_numbers<[2], [1], [1], [2], [0, 0, 0, 1, 1, 2], [0], [0]>} : vector<4x128x32xbf16>, vector<4x32x256xbf16>, vector<4x128x256xf32> -> vector<4x128x256xf32>
    "tpu.trace_stop"() : () -> ()
    %cst_10 = arith.constant dense<0xFF800000> : vector<4x128xf32>
    %15 = vector.multi_reduction <maximumf>, %14, %cst_10 [2] : vector<4x128x256xf32> to vector<4x128xf32>
    %16 = vector.shape_cast %15 : vector<4x128xf32> to vector<4x128x1xf32>
    %17 = vector.broadcast %16 : vector<4x128x1xf32> to vector<4x128x256xf32>
    %18 = arith.subf %14, %17 : vector<4x128x256xf32>
    %19 = math.exp %18 : vector<4x128x256xf32>
    %cst_11 = arith.constant dense<0.000000e+00> : vector<4x128xf32>
    %20 = vector.multi_reduction <add>, %19, %cst_11 [2] : vector<4x128x256xf32> to vector<4x128xf32>
    %21 = vector.shape_cast %20 : vector<4x128xf32> to vector<4x128x1xf32>
    %22 = tpu.reciprocal %21 {approx = true} : vector<4x128x1xf32> -> vector<4x128x1xf32>
    %23 = vector.broadcast %22 : vector<4x128x1xf32> to vector<4x128x256xf32>
    %24 = arith.mulf %19, %23 : vector<4x128x256xf32>
    %25 = arith.truncf %24 : vector<4x128x256xf32> to vector<4x128x256xbf16>
    "tpu.trace_start"() <{level = 10 : i32, message = "hdj,hij->hdi"}> : () -> ()
    %cst_12 = arith.constant dense<0.000000e+00> : vector<4x32x128xf32>
    %26 = tpu.matmul %13, %25, %cst_12 {dimension_numbers = #tpu.dot_dimension_numbers<[2], [2], [1], [1], [0, 0, 0, 1, 1, 1], [0], [0]>} : vector<4x32x256xbf16>, vector<4x128x256xbf16>, vector<4x32x128xf32> -> vector<4x32x128xf32>
    "tpu.trace_stop"() : () -> ()
    %27 = vector.shape_cast %26 : vector<4x32x128xf32> to vector<128x128xf32>
    %28 = arith.truncf %27 : vector<128x128xf32> to vector<128x128xbf16>
    %c0_13 = arith.constant 0 : index
    %c0_14 = arith.constant 0 : index
    %29 = vector.load %arg6[%c0_13, %c0_14] : memref<4x128xbf16, #tpu.memory_space<vmem>>, vector<4x128xbf16>
    %cst_15 = arith.constant dense<0.000000e+00> : vector<4x128xf32>
    %30 = tpu.matmul %29, %28, %cst_15 {dimension_numbers = #tpu.dot_dimension_numbers<[1], [0], [0], [1], [0, 0, 1, 1], [], []>} : vector<4x128xbf16>, vector<128x128xbf16>, vector<4x128xf32> -> vector<4x128xf32>
    %c0_16 = arith.constant 0 : index
    %c0_17 = arith.constant 0 : index
    %31 = vector.load %arg7[%c0_16, %c0_17] : memref<4x1xf32, #tpu.memory_space<vmem>>, vector<4x1xf32>
    %32 = vector.broadcast %31 : vector<4x1xf32> to vector<4x128xf32>
    %33 = arith.addf %30, %32 : vector<4x128xf32>
    %c0_18 = arith.constant 0 : index
    %c0_19 = arith.constant 0 : index
    %c0_20 = arith.constant 0 : index
    %34 = vector.load %arg8[%c0_18, %c0_19, %c0_20] : memref<1x4x128xf32, #tpu.memory_space<vmem>>, vector<1x4x128xf32>
    %35 = vector.shape_cast %34 : vector<1x4x128xf32> to vector<4x128xf32>
    %36 = vector.shape_cast %33 : vector<4x128xf32> to vector<1x4x128xf32>
    tpu.vector_store %arg8[%c0_18, %c0_19, %c0_20], %36 {strides = array<i32>} : memref<1x4x128xf32, #tpu.memory_space<vmem>>, vector<1x4x128xf32>,
    return
  }
  func.func @transform_0(%arg0: i32, %arg1: i32) -> (i32, i32, i32) {
    %c0_i32 = arith.constant 0 : i32
    %c0_i32_0 = arith.constant 0 : i32
    %c0_i32_1 = arith.constant 0 : i32
    return %arg0, %c0_i32, %c0_i32_0 : i32, i32, i32
  }
  func.func @transform_1(%arg0: i32, %arg1: i32) -> (i32, i32, i32) {
    %c0_i32 = arith.constant 0 : i32
    %c0_i32_0 = arith.constant 0 : i32
    return %arg0, %c0_i32, %arg1 : i32, i32, i32
  }
  func.func @transform_2(%arg0: i32, %arg1: i32) -> (i32, i32) {
    %c0_i32 = arith.constant 0 : i32
    %c0_i32_0 = arith.constant 0 : i32
    %c0_i32_1 = arith.constant 0 : i32
    return %c0_i32, %c0_i32_0 : i32, i32
  }
  func.func @transform_3(%arg0: i32, %arg1: i32) -> (i32, i32) {
    %c0_i32 = arith.constant 0 : i32
    %c0_i32_0 = arith.constant 0 : i32
    %c0_i32_1 = arith.constant 0 : i32
    return %c0_i32, %c0_i32_0 : i32, i32
  }
  func.func @transform_4(%arg0: i32, %arg1: i32) -> (i32, i32) {
    %c0_i32 = arith.constant 0 : i32
    %c0_i32_0 = arith.constant 0 : i32
    %c0_i32_1 = arith.constant 0 : i32
    return %c0_i32, %c0_i32_0 : i32, i32
  }
  func.func @transform_5(%arg0: i32, %arg1: i32) -> (i32, i32) {
    %c0_i32 = arith.constant 0 : i32
    %c0_i32_0 = arith.constant 0 : i32
    %c0_i32_1 = arith.constant 0 : i32
    return %c0_i32, %c0_i32_0 : i32, i32
  }
  func.func @transform_6(%arg0: i32, %arg1: i32) -> (i32, i32, i32) {
    %c0_i32 = arith.constant 0 : i32
    %c0_i32_0 = arith.constant 0 : i32
    return %arg0, %c0_i32, %arg1 : i32, i32, i32
  }
}

</mosaic_0001>

<llo_original>
// kernel: tpu_custom_call.1
$region0: #{tpu_custom_call.1}
  #allocation0 [shape = 'u32[]', space=smem, size = 0x4, offset = 0x4, fixed_abs, tag = 'smem constant byte address 0x4 - core index']
  #allocation1 [shape = 'u32[72,128]{1,0:T(1,128)}', space=vmem, size = 0x9000, scoped, tag = 'internal scratch']
  #allocation2 [shape = 'bf16[128,256]{1,0:T(8,128)(2,1)}', space=vmem, size = 0x10000, scoped, tag = 'scratch operand']
  #allocation3 [shape = 'bf16[128,256]{1,0:T(8,128)(2,1)}', space=vmem, size = 0x10000, scoped, tag = 'scratch operand']
  %s0 = inlined_call_operand.vmem [shape: bf16[2,4,256], index: 0, kind: input, shape index: {}]
  %s1 = inlined_call_operand.vmem [shape: bf16[2,4,256], index: 1, kind: input, shape index: {}]
  %s2 = inlined_call_operand.vmem [shape: bf16[128,4], index: 2, kind: input, shape index: {}]
  %s3 = inlined_call_operand.vmem [shape: bf16[256,4], index: 3, kind: input, shape index: {}]
  %s4 = inlined_call_operand.vmem [shape: bf16[4,128], index: 4, kind: input, shape index: {}]
  %s5 = inlined_call_operand.vmem [shape: f32[4,1], index: 5, kind: input, shape index: {}]
  %s6 = inlined_call_operand.hbm [shape: f32[2,4,256], index: 6, kind: output, shape index: {}]
  %s7 = sld [smem:[#allocation0]]
  $region61: #{tpu_custom_call.1} parent=0
    _
  %s9 = ssub.s32 1, %s7
  %s10 = scalar_select 0, %s9, %s7
  $region1: #{tpu_custom_call.1} parent=0
    #allocation4 [shape = 'u8[4096]{0}', space=vmem, size = 0x1000, scoped, tag = 'output window, operand 0']
    #allocation5 [shape = 's32[2]{0}', space=sflag, size = 0x8, scoped, tag = 'scoped memory for tpu_custom_call.1']
    %11 = vsyncpa [#allocation5], 0
    %s12 = scalar_lea.sflag [#allocation5], 1
    %13 = vsyncpa %s12, 0
    loop: start=0, step=1, limit=6
    $region2: #{tpu_custom_call.1} parent=1 // loop_pre_header
      _
    $region3: #{tpu_custom_call.1} parent=1 // loop_header
      %s15 = sphi 0, %s19
      %p16 = scmp.ge.s32.totalorder %s15, 6
      %s22 = sphi 0, %s34
      %s23 = sphi 0, %s30
      %s24 = sphi 0, %s22
      %s25 = sphi 0, %s23
      %s26 = sphi 0, %s24
      %s27 = sphi 0, %s25
      %s37 = sphi 0, %s39
      %s40 = sphi 0, %s37
      %s41 = sphi 0, %s40
      %s57 = sphi 0, %s41
      %s65 = sphi 0, %s67
      %s68 = sphi 0, %s65
      %s69 = sphi 0, %s68
      %s85 = sphi 0, %s69
      %s89 = sphi 0, %s89
      %s91 = sphi 0, %s89
      %s92 = sphi 0, %s91
      %s106 = sphi 0, %s92
      %s110 = sphi 0, %s110
      %s112 = sphi 0, %s110
      %s113 = sphi 0, %s112
      %s127 = sphi 0, %s113
      %s131 = sphi 0, %s131
      %s133 = sphi 0, %s131
      %s134 = sphi 0, %s133
      %s148 = sphi 0, %s134
      %s152 = sphi 0, %s152
      %s154 = sphi 0, %s152
      %s155 = sphi 0, %s154
      %s169 = sphi 0, %s155
      %s177 = sphi 0, %s179
      %s180 = sphi 0, %s177
      %s181 = sphi 0, %s180
      %s197 = sphi 0, %s181
    $region4: #{tpu_custom_call.1} parent=1 // loop_header_branch
      %18 = sbr.rel (%p16) target = $region8
    $region5: #{tpu_custom_call.1} parent=1 // loop_body
      %s20 = ssub.s32 %s15, 1
      %s21 = ssub.s32 %s15, 2
      %s28 = sadd.s32 1, %s23
      %p29 = scmp.ge.s32.totalorder %s28, 2
      %s30 = scalar_select %p29, 0, %s28
      %s31 = sadd.s32 1, %s22
      %s32 = scalar_select %p29, %s31, %s22
      %p33 = scmp.ge.s32.totalorder %s32, 2
      %s34 = scalar_select %p33, 0, %s32
      %s35 = ssub.s32 %s22, %s34
      %p36 = scmp.eq.s32.totalorder %s35, 0
      %s38 = sadd.s32 %s37, 1
      %s39 = scalar_select %p36, %s37, %s38
      %p42 = pneg %p36
      %p43 = scmp.eq.s32.totalorder %s15, 3
      %p44 = por %p42, %p43
      %p45 = scmp.ne.s32.totalorder %s37, %s40
      %p46 = scmp.eq.s32.totalorder %s15, 0
      %p47 = por %p45, %p46
      %p48 = scmp.ne.s32.totalorder %s37, %s40
      %p49 = scmp.eq.s32.totalorder %s20, 3
      %p50 = por %p48, %p49
      %p51 = scmp.ne.s32.totalorder %s40, %s41
      %p52 = scmp.eq.s32.totalorder %s20, 0
      %p53 = por %p51, %p52
      %p54 = scmp.ne.s32.totalorder %s40, %s41
      %p55 = scmp.eq.s32.totalorder %s21, 3
      %p56 = por %p54, %p55
      %p58 = scmp.ne.s32.totalorder %s41, %s57
      %p59 = scmp.eq.s32.totalorder %s21, 0
      %p60 = por %p58, %p59
      %s61 = ssub.s32 %s22, %s34
      %s62 = ssub.s32 %s23, %s30
      %s63 = sor.u32 %s61, %s62
      %p64 = scmp.eq.s32.totalorder %s63, 0
      %s66 = sadd.s32 %s65, 1
      %s67 = scalar_select %p64, %s65, %s66
      %p70 = pneg %p64
      %p71 = scmp.eq.s32.totalorder %s15, 3
      %p72 = por %p70, %p71
      %p73 = scmp.ne.s32.totalorder %s65, %s68
      %p74 = scmp.eq.s32.totalorder %s15, 0
      %p75 = por %p73, %p74
      %p76 = scmp.ne.s32.totalorder %s65, %s68
      %p77 = scmp.eq.s32.totalorder %s20, 3
      %p78 = por %p76, %p77
      %p79 = scmp.ne.s32.totalorder %s68, %s69
      %p80 = scmp.eq.s32.totalorder %s20, 0
      %p81 = por %p79, %p80
      %p82 = scmp.ne.s32.totalorder %s68, %s69
      %p83 = scmp.eq.s32.totalorder %s21, 3
      %p84 = por %p82, %p83
      %p86 = scmp.ne.s32.totalorder %s69, %s85
      %p87 = scmp.eq.s32.totalorder %s21, 0
      %p88 = por %p86, %p87
      %s90 = sadd.s32 %s89, 1
      %p93 = scmp.eq.s32.totalorder %s15, 3
      %p94 = scmp.ne.s32.totalorder %s89, %s91
      %p95 = scmp.eq.s32.totalorder %s15, 0
      %p96 = por %p94, %p95
      %p97 = scmp.ne.s32.totalorder %s89, %s91
      %p98 = scmp.eq.s32.totalorder %s20, 3
      %p99 = por %p97, %p98
      %p100 = scmp.ne.s32.totalorder %s91, %s92
      %p101 = scmp.eq.s32.totalorder %s20, 0
      %p102 = por %p100, %p101
      %p103 = scmp.ne.s32.totalorder %s91, %s92
      %p104 = scmp.eq.s32.totalorder %s21, 3
      %p105 = por %p103, %p104
      %p107 = scmp.ne.s32.totalorder %s92, %s106
      %p108 = scmp.eq.s32.totalorder %s21, 0
      %p109 = por %p107, %p108
      %s111 = sadd.s32 %s110, 1
      %p114 = scmp.eq.s32.totalorder %s15, 3
      %p115 = scmp.ne.s32.totalorder %s110, %s112
      %p116 = scmp.eq.s32.totalorder %s15, 0
      %p117 = por %p115, %p116
      %p118 = scmp.ne.s32.totalorder %s110, %s112
      %p119 = scmp.eq.s32.totalorder %s20, 3
      %p120 = por %p118, %p119
      %p121 = scmp.ne.s32.totalorder %s112, %s113
      %p122 = scmp.eq.s32.totalorder %s20, 0
      %p123 = por %p121, %p122
      %p124 = scmp.ne.s32.totalorder %s112, %s113
      %p125 = scmp.eq.s32.totalorder %s21, 3
      %p126 = por %p124, %p125
      %p128 = scmp.ne.s32.totalorder %s113, %s127
      %p129 = scmp.eq.s32.totalorder %s21, 0
      %p130 = por %p128, %p129
      %s132 = sadd.s32 %s131, 1
      %p135 = scmp.eq.s32.totalorder %s15, 3
      %p136 = scmp.ne.s32.totalorder %s131, %s133
      %p137 = scmp.eq.s32.totalorder %s15, 0
      %p138 = por %p136, %p137
      %p139 = scmp.ne.s32.totalorder %s131, %s133
      %p140 = scmp.eq.s32.totalorder %s20, 3
      %p141 = por %p139, %p140
      %p142 = scmp.ne.s32.totalorder %s133, %s134
      %p143 = scmp.eq.s32.totalorder %s20, 0
      %p144 = por %p142, %p143
      %p145 = scmp.ne.s32.totalorder %s133, %s134
      %p146 = scmp.eq.s32.totalorder %s21, 3
      %p147 = por %p145, %p146
      %p149 = scmp.ne.s32.totalorder %s134, %s148
      %p150 = scmp.eq.s32.totalorder %s21, 0
      %p151 = por %p149, %p150
      %s153 = sadd.s32 %s152, 1
      %p156 = scmp.eq.s32.totalorder %s15, 3
      %p157 = scmp.ne.s32.totalorder %s152, %s154
      %p158 = scmp.eq.s32.totalorder %s15, 0
      %p159 = por %p157, %p158
      %p160 = scmp.ne.s32.totalorder %s152, %s154
      %p161 = scmp.eq.s32.totalorder %s20, 3
      %p162 = por %p160, %p161
      %p163 = scmp.ne.s32.totalorder %s154, %s155
      %p164 = scmp.eq.s32.totalorder %s20, 0
      %p165 = por %p163, %p164
      %p166 = scmp.ne.s32.totalorder %s154, %s155
      %p167 = scmp.eq.s32.totalorder %s21, 3
      %p168 = por %p166, %p167
      %p170 = scmp.ne.s32.totalorder %s155, %s169
      %p171 = scmp.eq.s32.totalorder %s21, 0
      %p172 = por %p170, %p171
      %s173 = ssub.s32 %s22, %s34
      %s174 = ssub.s32 %s23, %s30
      %s175 = sor.u32 %s173, %s174
      %p176 = scmp.eq.s32.totalorder %s175, 0
      %s178 = sadd.s32 %s177, 1
      %s179 = scalar_select %p176, %s177, %s178
      %p182 = pneg %p176
      %p183 = scmp.eq.s32.totalorder %s15, 3
      %p184 = por %p182, %p183
      %p185 = scmp.ne.s32.totalorder %s177, %s180
      %p186 = scmp.eq.s32.totalorder %s15, 0
      %p187 = por %p185, %p186
      %p188 = scmp.ne.s32.totalorder %s177, %s180
      %p189 = scmp.eq.s32.totalorder %s20, 3
      %p190 = por %p188, %p189
      %p191 = scmp.ne.s32.totalorder %s180, %s181
      %p192 = scmp.eq.s32.totalorder %s20, 0
      %p193 = por %p191, %p192
      %p194 = scmp.ne.s32.totalorder %s180, %s181
      %p195 = scmp.eq.s32.totalorder %s21, 3
      %p196 = por %p194, %p195
      %p198 = scmp.ne.s32.totalorder %s181, %s197
      %p199 = scmp.eq.s32.totalorder %s21, 0
      %p200 = por %p198, %p199
      %p201 = scmp.le.s32.totalorder 1, %s15
      %p202 = scmp.lt.s32.totalorder %s15, 5
      %p203 = pnand %p201, %p202
      %p204 = pneg %p203
      // Predicated region
      $region9: #{tpu_custom_call.1} parent=5 // pred_check
        _
      $region10: #{tpu_custom_call.1} parent=5 // pred_check_branch
        %206 = sbr.rel (%p203) target = $region12
      $region11: #{tpu_custom_call.1} parent=5 // pred_region
        %s207 = ssub.s32 %s15, 1
        // Predicated region
        $region13: #{tpu_custom_call.1} parent=11 // pred_check
          %p208 = pneg %p102
        $region14: #{tpu_custom_call.1} parent=11 // pred_check_branch
          %210 = sbr.rel (%p208) target = $region16
        $region15: #{tpu_custom_call.1} parent=11 // pred_region
          _
        $region16: #{tpu_custom_call.1} parent=11 // pred_fallthru
          _
        // Predicated region
        $region17: #{tpu_custom_call.1} parent=11 // pred_check
          %p211 = pneg %p123
        $region18: #{tpu_custom_call.1} parent=11 // pred_check_branch
          %213 = sbr.rel (%p211) target = $region20
        $region19: #{tpu_custom_call.1} parent=11 // pred_region
          _
        $region20: #{tpu_custom_call.1} parent=11 // pred_fallthru
          _
        // Predicated region
        $region21: #{tpu_custom_call.1} parent=11 // pred_check
          %p214 = pneg %p144
        $region22: #{tpu_custom_call.1} parent=11 // pred_check_branch
          %216 = sbr.rel (%p214) target = $region24
        $region23: #{tpu_custom_call.1} parent=11 // pred_region
          _
        $region24: #{tpu_custom_call.1} parent=11 // pred_fallthru
          _
        // Predicated region
        $region25: #{tpu_custom_call.1} parent=11 // pred_check
          %p217 = pneg %p165
        $region26: #{tpu_custom_call.1} parent=11 // pred_check_branch
          %219 = sbr.rel (%p217) target = $region28
        $region27: #{tpu_custom_call.1} parent=11 // pred_region
          _
        $region28: #{tpu_custom_call.1} parent=11 // pred_fallthru
          _
      $region12: #{tpu_custom_call.1} parent=5 // pred_fallthru
        _
      %p220 = scmp.lt.s32.totalorder %s15, 4
      // Predicated region
      $region29: #{tpu_custom_call.1} parent=5 // pred_check
        %p221 = pneg %p220
      $region30: #{tpu_custom_call.1} parent=5 // pred_check_branch
        %223 = sbr.rel (%p221) target = $region32
      $region31: #{tpu_custom_call.1} parent=5 // pred_region
        // Predicated region
        $region33: #{tpu_custom_call.1} parent=31 // pred_check
          %p224 = pneg %p47
        $region34: #{tpu_custom_call.1} parent=31 // pred_check_branch
          %226 = sbr.rel (%p224) target = $region36
        $region35: #{tpu_custom_call.1} parent=31 // pred_region
          %p227 = scmp.lt.s32.totalorder %s22, 1
          %s228 = scalar_select %p227, %s22, 1
          %s229 = smul.addr %s228, 2
          %s230 = smul.addr %s229, 2
          %s231 = scalar_lea.vmem %s0, %s230
        $region36: #{tpu_custom_call.1} parent=31 // pred_fallthru
          _
        // Predicated region
        $region37: #{tpu_custom_call.1} parent=31 // pred_check
          %p232 = pneg %p75
        $region38: #{tpu_custom_call.1} parent=31 // pred_check_branch
          %234 = sbr.rel (%p232) target = $region40
        $region39: #{tpu_custom_call.1} parent=31 // pred_region
          %p235 = scmp.lt.s32.totalorder %s22, 1
          %s236 = scalar_select %p235, %s22, 1
          %p237 = scmp.lt.s32.totalorder %s23, 1
          %s238 = scalar_select %p237, %s23, 1
          %s239 = smul.addr %s236, 2
          %s240 = sadd.s32 %s238, %s239
          %s241 = smul.addr %s240, 2
          %s242 = scalar_lea.vmem %s1, %s241
        $region40: #{tpu_custom_call.1} parent=31 // pred_fallthru
          _
      $region32: #{tpu_custom_call.1} parent=5 // pred_fallthru
        _
      %p243 = scmp.le.s32.totalorder 1, %s15
      %p244 = scmp.lt.s32.totalorder %s15, 5
      %p245 = pnand %p243, %p244
      %p246 = pneg %p245
      // Predicated region
      $region41: #{tpu_custom_call.1} parent=5 // pred_check
        _
      $region42: #{tpu_custom_call.1} parent=5 // pred_check_branch
        %248 = sbr.rel (%p245) target = $region44
      $region43: #{tpu_custom_call.1} parent=5 // pred_region
        %s249 = ssub.s32 %s15, 1
        %p250 = scmp.lt.s32.totalorder %s24, 1
        %s251 = scalar_select %p250, %s24, 1
        %s252 = smul.addr %s251, 2
        %s253 = smul.addr %s252, 2
        %s254 = scalar_lea.vmem %s0, %s253
        %p255 = pneg %p53
        %p256 = pneg %p50
        %p257 = scmp.lt.s32.totalorder %s24, 1
        %s258 = scalar_select %p257, %s24, 1
        %p259 = scmp.lt.s32.totalorder %s25, 1
        %s260 = scalar_select %p259, %s25, 1
        %s261 = smul.addr %s258, 2
        %s262 = sadd.s32 %s260, %s261
        %s263 = smul.addr %s262, 2
        %s264 = scalar_lea.vmem %s1, %s263
        %p265 = pneg %p81
        %p266 = pneg %p78
        %p267 = pneg %p102
        %p268 = pneg %p99
        %p269 = pneg %p123
        %p270 = pneg %p120
        %p271 = pneg %p144
        %p272 = pneg %p141
        %p273 = pneg %p165
        %p274 = pneg %p162
        %p275 = pneg %p193
        %p276 = pneg %p190
        %s277 = sand.u32 %s180, 1
        %s278 = scalar_lea.sflag [#allocation5], %s277
        %s279 = sand.u32 %s180, 1
        %s280 = smul.addr %s279, 4
        %s281 = scalar_lea.vmem [#allocation4], %s280
        %p282 = scmp.lt.s32.totalorder %s24, 1
        %s283 = scalar_select %p282, %s24, 1
        %s284 = smul.addr %s283, 2
        %s285 = smul.addr %s284, 2
        %s286 = scalar_lea.vmem %s0, %s285
        %p287 = scmp.lt.s32.totalorder %s24, 1
        %s288 = scalar_select %p287, %s24, 1
        %p289 = scmp.lt.s32.totalorder %s25, 1
        %s290 = scalar_select %p289, %s25, 1
        %s291 = smul.addr %s288, 2
        %s292 = sadd.s32 %s290, %s291
        %s293 = smul.addr %s292, 2
        %s294 = scalar_lea.vmem %s1, %s293
        %p296 = scmp.eq.s32.totalorder %s25, 0
        // Predicated region
        $region45: #{tpu_custom_call.1} parent=43 // pred_check
          %p297 = pneg %p296
        $region46: #{tpu_custom_call.1} parent=43 // pred_check_branch
          %299 = sbr.rel (%p297) target = $region48
        $region47: #{tpu_custom_call.1} parent=43 // pred_region
          %v300 = vld [vmem:[%s286] sm:$0xf]
          %v301 = vld [vmem:[%s3] sm:$0xf]
          %v302 = vld [vmem:[%s3 + $0x4] sm:$0xf]
          %v303 = vld [vmem:[%s3 + $0x8] sm:$0xf]
          %v304 = vld [vmem:[%s3 + $0xc] sm:$0xf]
          %v305 = vld [vmem:[%s3 + $0x10] sm:$0xf]
          %v306 = vld [vmem:[%s3 + $0x14] sm:$0xf]
          %v307 = vld [vmem:[%s3 + $0x18] sm:$0xf]
          %v308 = vld [vmem:[%s3 + $0x1c] sm:$0xf]
          %v309 = vld [vmem:[%s3 + $0x20] sm:$0xf]
          %v310 = vld [vmem:[%s3 + $0x24] sm:$0xf]
          %v311 = vld [vmem:[%s3 + $0x28] sm:$0xf]
          %v312 = vld [vmem:[%s3 + $0x2c] sm:$0xf]
          %v313 = vld [vmem:[%s3 + $0x30] sm:$0xf]
          %v314 = vld [vmem:[%s3 + $0x34] sm:$0xf]
          %v315 = vld [vmem:[%s3 + $0x38] sm:$0xf]
          %v316 = vld [vmem:[%s3 + $0x3c] sm:$0xf]
          %v317 = vld [vmem:[%s3 + $0x40] sm:$0xf]
          %v318 = vld [vmem:[%s3 + $0x44] sm:$0xf]
          %v319 = vld [vmem:[%s3 + $0x48] sm:$0xf]
          %v320 = vld [vmem:[%s3 + $0x4c] sm:$0xf]
          %v321 = vld [vmem:[%s3 + $0x50] sm:$0xf]
          %v322 = vld [vmem:[%s3 + $0x54] sm:$0xf]
          %v323 = vld [vmem:[%s3 + $0x58] sm:$0xf]
          %v324 = vld [vmem:[%s3 + $0x5c] sm:$0xf]
          %v325 = vld [vmem:[%s3 + $0x60] sm:$0xf]
          %v326 = vld [vmem:[%s3 + $0x64] sm:$0xf]
          %v327 = vld [vmem:[%s3 + $0x68] sm:$0xf]
          %v328 = vld [vmem:[%s3 + $0x6c] sm:$0xf]
          %v329 = vld [vmem:[%s3 + $0x70] sm:$0xf]
          %v330 = vld [vmem:[%s3 + $0x74] sm:$0xf]
          %v331 = vld [vmem:[%s3 + $0x78] sm:$0xf]
          %v332 = vld [vmem:[%s3 + $0x7c] sm:$0xf]
          %v365 = vunpack.c.l.b16 %v301
          %v366 = vunpack.c.l.b16 %v302
          %v367 = vunpack.c.l.b16 %v303
          %v368 = vunpack.c.l.b16 %v304
          %v369 = vunpack.c.l.b16 %v305
          %v370 = vunpack.c.l.b16 %v306
          %v371 = vunpack.c.l.b16 %v307
          %v372 = vunpack.c.l.b16 %v308
          %v373 = vunpack.c.l.b16 %v309
          %v374 = vunpack.c.l.b16 %v310
          %v375 = vunpack.c.l.b16 %v311
          %v376 = vunpack.c.l.b16 %v312
          %v377 = vunpack.c.l.b16 %v313
          %v378 = vunpack.c.l.b16 %v314
          %v379 = vunpack.c.l.b16 %v315
          %v380 = vunpack.c.l.b16 %v316
          %v381 = vunpack.c.l.b16 %v317
          %v382 = vunpack.c.l.b16 %v318
          %v383 = vunpack.c.l.b16 %v319
          %v384 = vunpack.c.l.b16 %v320
          %v385 = vunpack.c.l.b16 %v321
          %v386 = vunpack.c.l.b16 %v322
          %v387 = vunpack.c.l.b16 %v323
          %v388 = vunpack.c.l.b16 %v324
          %v389 = vunpack.c.l.b16 %v325
          %v390 = vunpack.c.l.b16 %v326
          %v391 = vunpack.c.l.b16 %v327
          %v392 = vunpack.c.l.b16 %v328
          %v393 = vunpack.c.l.b16 %v329
          %v394 = vunpack.c.l.b16 %v330
          %v395 = vunpack.c.l.b16 %v331
          %v396 = vunpack.c.l.b16 %v332
          %v397 = vpack.c.b16 %v366, %v365
          %v398 = vpack.c.b16 %v368, %v367
          %v399 = vpack.c.b16 %v370, %v369
          %v400 = vpack.c.b16 %v372, %v371
          %v401 = vpack.c.b16 %v374, %v373
          %v402 = vpack.c.b16 %v376, %v375
          %v403 = vpack.c.b16 %v378, %v377
          %v404 = vpack.c.b16 %v380, %v379
          %v405 = vpack.c.b16 %v382, %v381
          %v406 = vpack.c.b16 %v384, %v383
          %v407 = vpack.c.b16 %v386, %v385
          %v408 = vpack.c.b16 %v388, %v387
          %v409 = vpack.c.b16 %v390, %v389
          %v410 = vpack.c.b16 %v392, %v391
          %v411 = vpack.c.b16 %v394, %v393
          %v412 = vpack.c.b16 %v396, %v395
          %414 = vst [vmem:[#allocation1] ss:$4 sm:$0xff] %v300
          %v415 = vld.sshfl [vmem:[#allocation1] sm:$0xff pattern:$0x73625140]
          %v416 = vld.sshfl [vmem:[#allocation1 + $0x8] sm:$0xff pattern:$0x73625140]
          %vm417 = vcmask 31744
          %v419 = vsel %vm417, %v397, 0
          %v422 = vsel %vm417, %v398, 0
          %v425 = vsel %vm417, %v399, 0
          %v428 = vsel %vm417, %v400, 0
          %v431 = vsel %vm417, %v401, 0
          %v434 = vsel %vm417, %v402, 0
          %v437 = vsel %vm417, %v403, 0
          %v440 = vsel %vm417, %v404, 0
          %v443 = vsel %vm417, %v405, 0
          %v446 = vsel %vm417, %v406, 0
          %v449 = vsel %vm417, %v407, 0
          %v452 = vsel %vm417, %v408, 0
          %v455 = vsel %vm417, %v409, 0
          %v458 = vsel %vm417, %v410, 0
          %v461 = vsel %vm417, %v411, 0
          %v464 = vsel %vm417, %v412, 0
          %vm466 = vcmask 1041408
          %v467 = vsel %vm466, %v415, 0
          %v469 = vsel %vm466, %v416, 0
          %471 = vmatpush.bf16.msra.mxu0 0
          %472 = vmatpush.bf16.msra.mxu0 0
          %473 = vmatpush.bf16.msra.mxu0 0
          %474 = vmatpush.bf16.msra.mxu0 0
          %475 = vmatpush.bf16.msra.mxu0 0
          %476 = vmatpush.bf16.msra.mxu0 0
          %477 = vmatpush.bf16.msra.mxu0 0
          %478 = vmatpush.bf16.msra.mxu0 %v467
          %479 = vmatmul.bf16.gmra.mxu0 %v419
          %v480 = vpop.f32.mrf.mxu0
          %v481 = vadd.f32 0.0, %v480
          %v482 = vpop.f32.mrf.mxu0
          %v483 = vadd.f32 0.0, %v482
          %484 = vmatmul.bf16.gmra.mxu0 %v422
          %v485 = vpop.f32.mrf.mxu0
          %v486 = vadd.f32 0.0, %v485
          %v487 = vpop.f32.mrf.mxu0
          %v488 = vadd.f32 0.0, %v487
          %489 = vmatmul.bf16.gmra.mxu0 %v425
          %v490 = vpop.f32.mrf.mxu0
          %v491 = vadd.f32 0.0, %v490
          %v492 = vpop.f32.mrf.mxu0
          %v493 = vadd.f32 0.0, %v492
          %494 = vmatmul.bf16.gmra.mxu0 %v428
          %v495 = vpop.f32.mrf.mxu0
          %v496 = vadd.f32 0.0, %v495
          %v497 = vpop.f32.mrf.mxu0
          %v498 = vadd.f32 0.0, %v497
          %499 = vmatmul.bf16.gmra.mxu0 %v431
          %v500 = vpop.f32.mrf.mxu0
          %v501 = vadd.f32 0.0, %v500
          %v502 = vpop.f32.mrf.mxu0
          %v503 = vadd.f32 0.0, %v502
          %504 = vmatmul.bf16.gmra.mxu0 %v434
          %v505 = vpop.f32.mrf.mxu0
          %v506 = vadd.f32 0.0, %v505
          %v507 = vpop.f32.mrf.mxu0
          %v508 = vadd.f32 0.0, %v507
          %509 = vmatmul.bf16.gmra.mxu0 %v437
          %v510 = vpop.f32.mrf.mxu0
          %v511 = vadd.f32 0.0, %v510
          %v512 = vpop.f32.mrf.mxu0
          %v513 = vadd.f32 0.0, %v512
          %514 = vmatmul.bf16.gmra.mxu0 %v440
          %v515 = vpop.f32.mrf.mxu0
          %v516 = vadd.f32 0.0, %v515
          %v517 = vpop.f32.mrf.mxu0
          %v518 = vadd.f32 0.0, %v517
          %519 = vmatmul.bf16.gmra.mxu0 %v443
          %v520 = vpop.f32.mrf.mxu0
          %v521 = vadd.f32 0.0, %v520
          %v522 = vpop.f32.mrf.mxu0
          %v523 = vadd.f32 0.0, %v522
          %524 = vmatmul.bf16.gmra.mxu0 %v446
          %v525 = vpop.f32.mrf.mxu0
          %v526 = vadd.f32 0.0, %v525
          %v527 = vpop.f32.mrf.mxu0
          %v528 = vadd.f32 0.0, %v527
          %529 = vmatmul.bf16.gmra.mxu0 %v449
          %v530 = vpop.f32.mrf.mxu0
          %v531 = vadd.f32 0.0, %v530
          %v532 = vpop.f32.mrf.mxu0
          %v533 = vadd.f32 0.0, %v532
          %534 = vmatmul.bf16.gmra.mxu0 %v452
          %v535 = vpop.f32.mrf.mxu0
          %v536 = vadd.f32 0.0, %v535
          %v537 = vpop.f32.mrf.mxu0
          %v538 = vadd.f32 0.0, %v537
          %539 = vmatmul.bf16.gmra.mxu0 %v455
          %v540 = vpop.f32.mrf.mxu0
          %v541 = vadd.f32 0.0, %v540
          %v542 = vpop.f32.mrf.mxu0
          %v543 = vadd.f32 0.0, %v542
          %544 = vmatmul.bf16.gmra.mxu0 %v458
          %v545 = vpop.f32.mrf.mxu0
          %v546 = vadd.f32 0.0, %v545
          %v547 = vpop.f32.mrf.mxu0
          %v548 = vadd.f32 0.0, %v547
          %549 = vmatmul.bf16.gmra.mxu0 %v461
          %v550 = vpop.f32.mrf.mxu0
          %v551 = vadd.f32 0.0, %v550
          %v552 = vpop.f32.mrf.mxu0
          %v553 = vadd.f32 0.0, %v552
          %554 = vmatmul.bf16.gmra.mxu0 %v464
          %v555 = vpop.f32.mrf.mxu0
          %v556 = vadd.f32 0.0, %v555
          %v557 = vpop.f32.mrf.mxu0
          %v558 = vadd.f32 0.0, %v557
          %559 = vdwg.mxu0
          %560 = vmatpush.bf16.msra.mxu0 0
          %561 = vmatpush.bf16.msra.mxu0 0
          %562 = vmatpush.bf16.msra.mxu0 0
          %563 = vmatpush.bf16.msra.mxu0 0
          %564 = vmatpush.bf16.msra.mxu0 0
          %565 = vmatpush.bf16.msra.mxu0 0
          %566 = vmatpush.bf16.msra.mxu0 0
          %567 = vmatpush.bf16.msra.mxu0 %v469
          %568 = vmatmul.bf16.gmra.mxu0 %v419
          %v569 = vpop.f32.mrf.mxu0
          %v570 = vadd.f32 0.0, %v569
          %v571 = vpop.f32.mrf.mxu0
          %v572 = vadd.f32 0.0, %v571
          %573 = vmatmul.bf16.gmra.mxu0 %v422
          %v574 = vpop.f32.mrf.mxu0
          %v575 = vadd.f32 0.0, %v574
          %v576 = vpop.f32.mrf.mxu0
          %v577 = vadd.f32 0.0, %v576
          %578 = vmatmul.bf16.gmra.mxu0 %v425
          %v579 = vpop.f32.mrf.mxu0
          %v580 = vadd.f32 0.0, %v579
          %v581 = vpop.f32.mrf.mxu0
          %v582 = vadd.f32 0.0, %v581
          %583 = vmatmul.bf16.gmra.mxu0 %v428
          %v584 = vpop.f32.mrf.mxu0
          %v585 = vadd.f32 0.0, %v584
          %v586 = vpop.f32.mrf.mxu0
          %v587 = vadd.f32 0.0, %v586
          %588 = vmatmul.bf16.gmra.mxu0 %v431
          %v589 = vpop.f32.mrf.mxu0
          %v590 = vadd.f32 0.0, %v589
          %v591 = vpop.f32.mrf.mxu0
          %v592 = vadd.f32 0.0, %v591
          %593 = vmatmul.bf16.gmra.mxu0 %v434
          %v594 = vpop.f32.mrf.mxu0
          %v595 = vadd.f32 0.0, %v594
          %v596 = vpop.f32.mrf.mxu0
          %v597 = vadd.f32 0.0, %v596
          %598 = vmatmul.bf16.gmra.mxu0 %v437
          %v599 = vpop.f32.mrf.mxu0
          %v600 = vadd.f32 0.0, %v599
          %v601 = vpop.f32.mrf.mxu0
          %v602 = vadd.f32 0.0, %v601
          %603 = vmatmul.bf16.gmra.mxu0 %v440
          %v604 = vpop.f32.mrf.mxu0
          %v605 = vadd.f32 0.0, %v604
          %v606 = vpop.f32.mrf.mxu0
          %v607 = vadd.f32 0.0, %v606
          %608 = vmatmul.bf16.gmra.mxu0 %v443
          %v609 = vpop.f32.mrf.mxu0
          %v610 = vadd.f32 0.0, %v609
          %v611 = vpop.f32.mrf.mxu0
          %v612 = vadd.f32 0.0, %v611
          %613 = vmatmul.bf16.gmra.mxu0 %v446
          %v614 = vpop.f32.mrf.mxu0
          %v615 = vadd.f32 0.0, %v614
          %v616 = vpop.f32.mrf.mxu0
          %v617 = vadd.f32 0.0, %v616
          %618 = vmatmul.bf16.gmra.mxu0 %v449
          %v619 = vpop.f32.mrf.mxu0
          %v620 = vadd.f32 0.0, %v619
          %v621 = vpop.f32.mrf.mxu0
          %v622 = vadd.f32 0.0, %v621
          %623 = vmatmul.bf16.gmra.mxu0 %v452
          %v624 = vpop.f32.mrf.mxu0
          %v625 = vadd.f32 0.0, %v624
          %v626 = vpop.f32.mrf.mxu0
          %v627 = vadd.f32 0.0, %v626
          %628 = vmatmul.bf16.gmra.mxu0 %v455
          %v629 = vpop.f32.mrf.mxu0
          %v630 = vadd.f32 0.0, %v629
          %v631 = vpop.f32.mrf.mxu0
          %v632 = vadd.f32 0.0, %v631
          %633 = vmatmul.bf16.gmra.mxu0 %v458
          %v634 = vpop.f32.mrf.mxu0
          %v635 = vadd.f32 0.0, %v634
          %v636 = vpop.f32.mrf.mxu0
          %v637 = vadd.f32 0.0, %v636
          %638 = vmatmul.bf16.gmra.mxu0 %v461
          %v639 = vpop.f32.mrf.mxu0
          %v640 = vadd.f32 0.0, %v639
          %v641 = vpop.f32.mrf.mxu0
          %v642 = vadd.f32 0.0, %v641
          %643 = vmatmul.bf16.gmra.mxu0 %v464
          %v644 = vpop.f32.mrf.mxu0
          %v645 = vadd.f32 0.0, %v644
          %v646 = vpop.f32.mrf.mxu0
          %v647 = vadd.f32 0.0, %v646
          %648 = vdwg.mxu0
          %v649 = vpack.c.bf16 %v570, %v481
          %v650 = vpack.c.bf16 %v572, %v483
          %v651 = vpack.c.bf16 %v575, %v486
          %v652 = vpack.c.bf16 %v577, %v488
          %v653 = vpack.c.bf16 %v580, %v491
          %v654 = vpack.c.bf16 %v582, %v493
          %v655 = vpack.c.bf16 %v585, %v496
          %v656 = vpack.c.bf16 %v587, %v498
          %v657 = vpack.c.bf16 %v590, %v501
          %v658 = vpack.c.bf16 %v592, %v503
          %v659 = vpack.c.bf16 %v595, %v506
          %v660 = vpack.c.bf16 %v597, %v508
          %v661 = vpack.c.bf16 %v600, %v511
          %v662 = vpack.c.bf16 %v602, %v513
          %v663 = vpack.c.bf16 %v605, %v516
          %v664 = vpack.c.bf16 %v607, %v518
          %665 = vst [vmem:[#allocation2] sm:$0xff] %v649
          %666 = vst [vmem:[#allocation2 + $0x8] sm:$0xff] %v650
          %667 = vst [vmem:[#allocation2 + $0x10] sm:$0xff] %v651
          %668 = vst [vmem:[#allocation2 + $0x18] sm:$0xff] %v652
          %669 = vst [vmem:[#allocation2 + $0x20] sm:$0xff] %v653
          %670 = vst [vmem:[#allocation2 + $0x28] sm:$0xff] %v654
          %671 = vst [vmem:[#allocation2 + $0x30] sm:$0xff] %v655
          %672 = vst [vmem:[#allocation2 + $0x38] sm:$0xff] %v656
          %673 = vst [vmem:[#allocation2 + $0x40] sm:$0xff] %v657
          %674 = vst [vmem:[#allocation2 + $0x48] sm:$0xff] %v658
          %675 = vst [vmem:[#allocation2 + $0x50] sm:$0xff] %v659
          %676 = vst [vmem:[#allocation2 + $0x58] sm:$0xff] %v660
          %677 = vst [vmem:[#allocation2 + $0x60] sm:$0xff] %v661
          %678 = vst [vmem:[#allocation2 + $0x68] sm:$0xff] %v662
          %679 = vst [vmem:[#allocation2 + $0x70] sm:$0xff] %v663
          %680 = vst [vmem:[#allocation2 + $0x78] sm:$0xff] %v664
          %v681 = vpack.c.bf16 %v610, %v521
          %v682 = vpack.c.bf16 %v612, %v523
          %v683 = vpack.c.bf16 %v615, %v526
          %v684 = vpack.c.bf16 %v617, %v528
          %v685 = vpack.c.bf16 %v620, %v531
          %v686 = vpack.c.bf16 %v622, %v533
          %v687 = vpack.c.bf16 %v625, %v536
          %v688 = vpack.c.bf16 %v627, %v538
          %v689 = vpack.c.bf16 %v630, %v541
          %v690 = vpack.c.bf16 %v632, %v543
          %v691 = vpack.c.bf16 %v635, %v546
          %v692 = vpack.c.bf16 %v637, %v548
          %v693 = vpack.c.bf16 %v640, %v551
          %v694 = vpack.c.bf16 %v642, %v553
          %v695 = vpack.c.bf16 %v645, %v556
          %v696 = vpack.c.bf16 %v647, %v558
          %697 = vst [vmem:[#allocation3] sm:$0xff] %v681
          %698 = vst [vmem:[#allocation3 + $0x8] sm:$0xff] %v682
          %699 = vst [vmem:[#allocation3 + $0x10] sm:$0xff] %v683
          %700 = vst [vmem:[#allocation3 + $0x18] sm:$0xff] %v684
          %701 = vst [vmem:[#allocation3 + $0x20] sm:$0xff] %v685
          %702 = vst [vmem:[#allocation3 + $0x28] sm:$0xff] %v686
          %703 = vst [vmem:[#allocation3 + $0x30] sm:$0xff] %v687
          %704 = vst [vmem:[#allocation3 + $0x38] sm:$0xff] %v688
          %705 = vst [vmem:[#allocation3 + $0x40] sm:$0xff] %v689
          %706 = vst [vmem:[#allocation3 + $0x48] sm:$0xff] %v690
          %707 = vst [vmem:[#allocation3 + $0x50] sm:$0xff] %v691
          %708 = vst [vmem:[#allocation3 + $0x58] sm:$0xff] %v692
          %709 = vst [vmem:[#allocation3 + $0x60] sm:$0xff] %v693
          %710 = vst [vmem:[#allocation3 + $0x68] sm:$0xff] %v694
          %711 = vst [vmem:[#allocation3 + $0x70] sm:$0xff] %v695
          %712 = vst [vmem:[#allocation3 + $0x78] sm:$0xff] %v696
        $region48: #{tpu_custom_call.1} parent=43 // pred_fallthru
          _
        %v713 = vld [vmem:[%s294] sm:$0x3]
        %v714 = vld [vmem:[%s2] sm:$0xf]
        %v715 = vld [vmem:[%s2 + $0x4] sm:$0xf]
        %v716 = vld [vmem:[%s2 + $0x8] sm:$0xf]
        %v717 = vld [vmem:[%s2 + $0xc] sm:$0xf]
        %v718 = vld [vmem:[%s2 + $0x10] sm:$0xf]
        %v719 = vld [vmem:[%s2 + $0x14] sm:$0xf]
        %v720 = vld [vmem:[%s2 + $0x18] sm:$0xf]
        %v721 = vld [vmem:[%s2 + $0x1c] sm:$0xf]
        %v722 = vld [vmem:[%s2 + $0x20] sm:$0xf]
        %v723 = vld [vmem:[%s2 + $0x24] sm:$0xf]
        %v724 = vld [vmem:[%s2 + $0x28] sm:$0xf]
        %v725 = vld [vmem:[%s2 + $0x2c] sm:$0xf]
        %v726 = vld [vmem:[%s2 + $0x30] sm:$0xf]
        %v727 = vld [vmem:[%s2 + $0x34] sm:$0xf]
        %v728 = vld [vmem:[%s2 + $0x38] sm:$0xf]
        %v729 = vld [vmem:[%s2 + $0x3c] sm:$0xf]
        %v746 = vunpack.c.l.b16 %v714
        %v747 = vunpack.c.l.b16 %v715
        %v748 = vunpack.c.l.b16 %v716
        %v749 = vunpack.c.l.b16 %v717
        %v750 = vunpack.c.l.b16 %v718
        %v751 = vunpack.c.l.b16 %v719
        %v752 = vunpack.c.l.b16 %v720
        %v753 = vunpack.c.l.b16 %v721
        %v754 = vunpack.c.l.b16 %v722
        %v755 = vunpack.c.l.b16 %v723
        %v756 = vunpack.c.l.b16 %v724
        %v757 = vunpack.c.l.b16 %v725
        %v758 = vunpack.c.l.b16 %v726
        %v759 = vunpack.c.l.b16 %v727
        %v760 = vunpack.c.l.b16 %v728
        %v761 = vunpack.c.l.b16 %v729
        %v762 = vpack.c.b16 %v747, %v746
        %v763 = vpack.c.b16 %v749, %v748
        %v764 = vpack.c.b16 %v751, %v750
        %v765 = vpack.c.b16 %v753, %v752
        %v766 = vpack.c.b16 %v755, %v754
        %v767 = vpack.c.b16 %v757, %v756
        %v768 = vpack.c.b16 %v759, %v758
        %v769 = vpack.c.b16 %v761, %v760
        %vm770 = vcmask 31744
        %v772 = vsel %vm770, %v762, 0
        %v775 = vsel %vm770, %v763, 0
        %v778 = vsel %vm770, %v764, 0
        %v781 = vsel %vm770, %v765, 0
        %v784 = vsel %vm770, %v766, 0
        %v787 = vsel %vm770, %v767, 0
        %v790 = vsel %vm770, %v768, 0
        %v793 = vsel %vm770, %v769, 0
        %vm795 = vcmask 1041408
        %v797 = vsel %vm795, %v713, 0
        %799 = vmatpush.bf16.msra.mxu0 0
        %800 = vmatpush.bf16.msra.mxu0 0
        %801 = vmatpush.bf16.msra.mxu0 0
        %802 = vmatpush.bf16.msra.mxu0 0
        %803 = vmatpush.bf16.msra.mxu0 0
        %804 = vmatpush.bf16.msra.mxu0 0
        %805 = vmatpush.bf16.msra.mxu0 0
        %806 = vmatpush.bf16.msra.mxu0 %v797
        %807 = vmatmul.bf16.gmra.mxu0 %v772
        %v808 = vpop.f32.mrf.mxu0
        %v809 = vadd.f32 0.0, %v808
        %v810 = vpop.f32.mrf.mxu0
        %v811 = vadd.f32 0.0, %v810
        %812 = vmatmul.bf16.gmra.mxu0 %v775
        %v813 = vpop.f32.mrf.mxu0
        %v814 = vadd.f32 0.0, %v813
        %v815 = vpop.f32.mrf.mxu0
        %v816 = vadd.f32 0.0, %v815
        %817 = vmatmul.bf16.gmra.mxu0 %v778
        %v818 = vpop.f32.mrf.mxu0
        %v819 = vadd.f32 0.0, %v818
        %v820 = vpop.f32.mrf.mxu0
        %v821 = vadd.f32 0.0, %v820
        %822 = vmatmul.bf16.gmra.mxu0 %v781
        %v823 = vpop.f32.mrf.mxu0
        %v824 = vadd.f32 0.0, %v823
        %v825 = vpop.f32.mrf.mxu0
        %v826 = vadd.f32 0.0, %v825
        %827 = vmatmul.bf16.gmra.mxu0 %v784
        %v828 = vpop.f32.mrf.mxu0
        %v829 = vadd.f32 0.0, %v828
        %v830 = vpop.f32.mrf.mxu0
        %v831 = vadd.f32 0.0, %v830
        %832 = vmatmul.bf16.gmra.mxu0 %v787
        %v833 = vpop.f32.mrf.mxu0
        %v834 = vadd.f32 0.0, %v833
        %v835 = vpop.f32.mrf.mxu0
        %v836 = vadd.f32 0.0, %v835
        %837 = vmatmul.bf16.gmra.mxu0 %v790
        %v838 = vpop.f32.mrf.mxu0
        %v839 = vadd.f32 0.0, %v838
        %v840 = vpop.f32.mrf.mxu0
        %v841 = vadd.f32 0.0, %v840
        %842 = vmatmul.bf16.gmra.mxu0 %v793
        %v843 = vpop.f32.mrf.mxu0
        %v844 = vadd.f32 0.0, %v843
        %v845 = vpop.f32.mrf.mxu0
        %v846 = vadd.f32 0.0, %v845
        %847 = vdwg.mxu0
        %848 = vxpose.xlu0.b32.start [1/16] %v809, 128
        %849 = vxpose.xlu0.b32.cont [2/16] %v811, 128
        %850 = vxpose.xlu0.b32.cont [3/16] %v814, 128
        %851 = vxpose.xlu0.b32.cont [4/16] %v816, 128
        %852 = vxpose.xlu0.b32.cont [5/16] 0.0, 128
        %853 = vxpose.xlu0.b32.cont [6/16] 0.0, 128
        %854 = vxpose.xlu0.b32.cont [7/16] 0.0, 128
        %855 = vxpose.xlu0.b32.cont [8/16] 0.0, 128
        %856 = vxpose.xlu0.b32.cont [9/16] 0.0, 128
        %857 = vxpose.xlu0.b32.cont [10/16] 0.0, 128
        %858 = vxpose.xlu0.b32.cont [11/16] 0.0, 128
        %859 = vxpose.xlu0.b32.cont [12/16] 0.0, 128
        %860 = vxpose.xlu0.b32.cont [13/16] 0.0, 128
        %861 = vxpose.xlu0.b32.cont [14/16] 0.0, 128
        %862 = vxpose.xlu0.b32.cont [15/16] 0.0, 128
        %863 = vxpose.xlu0.b32.end [16/16] 0.0, 128
        %v864 = vpop.trf.xlu0
        %v865 = vpop.trf.xlu0
        %v866 = vpop.trf.xlu0
        %v867 = vpop.trf.xlu0
        %v868 = vpop.trf.xlu0
        %v869 = vpop.trf.xlu0
        %v870 = vpop.trf.xlu0
        %v871 = vpop.trf.xlu0
        %v872 = vpop.trf.xlu0
        %v873 = vpop.trf.xlu0
        %v874 = vpop.trf.xlu0
        %v875 = vpop.trf.xlu0
        %v876 = vpop.trf.xlu0
        %v877 = vpop.trf.xlu0
        %v878 = vpop.trf.xlu0
        %v879 = vpop.trf.xlu0
        %880 = vxpose.xlu0.b32.start [1/16] %v819, 128
        %881 = vxpose.xlu0.b32.cont [2/16] %v821, 128
        %882 = vxpose.xlu0.b32.cont [3/16] %v824, 128
        %883 = vxpose.xlu0.b32.cont [4/16] %v826, 128
        %884 = vxpose.xlu0.b32.cont [5/16] 0.0, 128
        %885 = vxpose.xlu0.b32.cont [6/16] 0.0, 128
        %886 = vxpose.xlu0.b32.cont [7/16] 0.0, 128
        %887 = vxpose.xlu0.b32.cont [8/16] 0.0, 128
        %888 = vxpose.xlu0.b32.cont [9/16] 0.0, 128
        %889 = vxpose.xlu0.b32.cont [10/16] 0.0, 128
        %890 = vxpose.xlu0.b32.cont [11/16] 0.0, 128
        %891 = vxpose.xlu0.b32.cont [12/16] 0.0, 128
        %892 = vxpose.xlu0.b32.cont [13/16] 0.0, 128
        %893 = vxpose.xlu0.b32.cont [14/16] 0.0, 128
        %894 = vxpose.xlu0.b32.cont [15/16] 0.0, 128
        %895 = vxpose.xlu0.b32.end [16/16] 0.0, 128
        %v896 = vpop.trf.xlu0
        %v897 = vpop.trf.xlu0
        %v898 = vpop.trf.xlu0
        %v899 = vpop.trf.xlu0
        %v900 = vpop.trf.xlu0
        %v901 = vpop.trf.xlu0
        %v902 = vpop.trf.xlu0
        %v903 = vpop.trf.xlu0
        %v904 = vpop.trf.xlu0
        %v905 = vpop.trf.xlu0
        %v906 = vpop.trf.xlu0
        %v907 = vpop.trf.xlu0
        %v908 = vpop.trf.xlu0
        %v909 = vpop.trf.xlu0
        %v910 = vpop.trf.xlu0
        %v911 = vpop.trf.xlu0
        %912 = vxpose.xlu0.b32.start [1/16] %v829, 128
        %913 = vxpose.xlu0.b32.cont [2/16] %v831, 128
        %914 = vxpose.xlu0.b32.cont [3/16] %v834, 128
        %915 = vxpose.xlu0.b32.cont [4/16] %v836, 128
        %916 = vxpose.xlu0.b32.cont [5/16] 0.0, 128
        %917 = vxpose.xlu0.b32.cont [6/16] 0.0, 128
        %918 = vxpose.xlu0.b32.cont [7/16] 0.0, 128
        %919 = vxpose.xlu0.b32.cont [8/16] 0.0, 128
        %920 = vxpose.xlu0.b32.cont [9/16] 0.0, 128
        %921 = vxpose.xlu0.b32.cont [10/16] 0.0, 128
        %922 = vxpose.xlu0.b32.cont [11/16] 0.0, 128
        %923 = vxpose.xlu0.b32.cont [12/16] 0.0, 128
        %924 = vxpose.xlu0.b32.cont [13/16] 0.0, 128
        %925 = vxpose.xlu0.b32.cont [14/16] 0.0, 128
        %926 = vxpose.xlu0.b32.cont [15/16] 0.0, 128
        %927 = vxpose.xlu0.b32.end [16/16] 0.0, 128
        %v928 = vpop.trf.xlu0
        %v929 = vpop.trf.xlu0
        %v930 = vpop.trf.xlu0
        %v931 = vpop.trf.xlu0
        %v932 = vpop.trf.xlu0
        %v933 = vpop.trf.xlu0
        %v934 = vpop.trf.xlu0
        %v935 = vpop.trf.xlu0
        %v936 = vpop.trf.xlu0
        %v937 = vpop.trf.xlu0
        %v938 = vpop.trf.xlu0
        %v939 = vpop.trf.xlu0
        %v940 = vpop.trf.xlu0
        %v941 = vpop.trf.xlu0
        %v942 = vpop.trf.xlu0
        %v943 = vpop.trf.xlu0
        %944 = vxpose.xlu0.b32.start [1/16] %v839, 128
        %945 = vxpose.xlu0.b32.cont [2/16] %v841, 128
        %946 = vxpose.xlu0.b32.cont [3/16] %v844, 128
        %947 = vxpose.xlu0.b32.cont [4/16] %v846, 128
        %948 = vxpose.xlu0.b32.cont [5/16] 0.0, 128
        %949 = vxpose.xlu0.b32.cont [6/16] 0.0, 128
        %950 = vxpose.xlu0.b32.cont [7/16] 0.0, 128
        %951 = vxpose.xlu0.b32.cont [8/16] 0.0, 128
        %952 = vxpose.xlu0.b32.cont [9/16] 0.0, 128
        %953 = vxpose.xlu0.b32.cont [10/16] 0.0, 128
        %954 = vxpose.xlu0.b32.cont [11/16] 0.0, 128
        %955 = vxpose.xlu0.b32.cont [12/16] 0.0, 128
        %956 = vxpose.xlu0.b32.cont [13/16] 0.0, 128
        %957 = vxpose.xlu0.b32.cont [14/16] 0.0, 128
        %958 = vxpose.xlu0.b32.cont [15/16] 0.0, 128
        %959 = vxpose.xlu0.b32.end [16/16] 0.0, 128
        %v960 = vpop.trf.xlu0
        %v961 = vpop.trf.xlu0
        %v962 = vpop.trf.xlu0
        %v963 = vpop.trf.xlu0
        %v964 = vpop.trf.xlu0
        %v965 = vpop.trf.xlu0
        %v966 = vpop.trf.xlu0
        %v967 = vpop.trf.xlu0
        %v968 = vpop.trf.xlu0
        %v969 = vpop.trf.xlu0
        %v970 = vpop.trf.xlu0
        %v971 = vpop.trf.xlu0
        %v972 = vpop.trf.xlu0
        %v973 = vpop.trf.xlu0
        %v974 = vpop.trf.xlu0
        %v975 = vpop.trf.xlu0
        %v976 = vpack.c.bf16 %v864, %v864
        %v977 = vpack.c.bf16 %v865, %v865
        %v978 = vpack.c.bf16 %v866, %v866
        %v979 = vpack.c.bf16 %v867, %v867
        %v980 = vpack.c.bf16 %v868, %v868
        %v981 = vpack.c.bf16 %v869, %v869
        %v982 = vpack.c.bf16 %v870, %v870
        %v983 = vpack.c.bf16 %v871, %v871
        %v984 = vpack.c.bf16 %v872, %v872
        %v985 = vpack.c.bf16 %v873, %v873
        %v986 = vpack.c.bf16 %v874, %v874
        %v987 = vpack.c.bf16 %v875, %v875
        %v988 = vpack.c.bf16 %v876, %v876
        %v989 = vpack.c.bf16 %v877, %v877
        %v990 = vpack.c.bf16 %v878, %v878
        %v991 = vpack.c.bf16 %v879, %v879
        %v992 = vpack.c.bf16 %v896, %v896
        %v993 = vpack.c.bf16 %v897, %v897
        %v994 = vpack.c.bf16 %v898, %v898
        %v995 = vpack.c.bf16 %v899, %v899
        %v996 = vpack.c.bf16 %v900, %v900
        %v997 = vpack.c.bf16 %v901, %v901
        %v998 = vpack.c.bf16 %v902, %v902
        %v999 = vpack.c.bf16 %v903, %v903
        %v1000 = vpack.c.bf16 %v904, %v904
        %v1001 = vpack.c.bf16 %v905, %v905
        %v1002 = vpack.c.bf16 %v906, %v906
        %v1003 = vpack.c.bf16 %v907, %v907
        %v1004 = vpack.c.bf16 %v908, %v908
        %v1005 = vpack.c.bf16 %v909, %v909
        %v1006 = vpack.c.bf16 %v910, %v910
        %v1007 = vpack.c.bf16 %v911, %v911
        %v1008 = vpack.c.bf16 %v928, %v928
        %v1009 = vpack.c.bf16 %v929, %v929
        %v1010 = vpack.c.bf16 %v930, %v930
        %v1011 = vpack.c.bf16 %v931, %v931
        %v1012 = vpack.c.bf16 %v932, %v932
        %v1013 = vpack.c.bf16 %v933, %v933
        %v1014 = vpack.c.bf16 %v934, %v934
        %v1015 = vpack.c.bf16 %v935, %v935
        %v1016 = vpack.c.bf16 %v936, %v936
        %v1017 = vpack.c.bf16 %v937, %v937
        %v1018 = vpack.c.bf16 %v938, %v938
        %v1019 = vpack.c.bf16 %v939, %v939
        %v1020 = vpack.c.bf16 %v940, %v940
        %v1021 = vpack.c.bf16 %v941, %v941
        %v1022 = vpack.c.bf16 %v942, %v942
        %v1023 = vpack.c.bf16 %v943, %v943
        %v1024 = vpack.c.bf16 %v960, %v960
        %v1025 = vpack.c.bf16 %v961, %v961
        %v1026 = vpack.c.bf16 %v962, %v962
        %v1027 = vpack.c.bf16 %v963, %v963
        %v1028 = vpack.c.bf16 %v964, %v964
        %v1029 = vpack.c.bf16 %v965, %v965
        %v1030 = vpack.c.bf16 %v966, %v966
        %v1031 = vpack.c.bf16 %v967, %v967
        %v1032 = vpack.c.bf16 %v968, %v968
        %v1033 = vpack.c.bf16 %v969, %v969
        %v1034 = vpack.c.bf16 %v970, %v970
        %v1035 = vpack.c.bf16 %v971, %v971
        %v1036 = vpack.c.bf16 %v972, %v972
        %v1037 = vpack.c.bf16 %v973, %v973
        %v1038 = vpack.c.bf16 %v974, %v974
        %v1039 = vpack.c.bf16 %v975, %v975
        %v1040 = vld [vmem:[#allocation2] sm:$0xff]
        %v1041 = vld [vmem:[#allocation2 + $0x8] sm:$0xff]
        %v1042 = vld [vmem:[#allocation2 + $0x10] sm:$0xff]
        %v1043 = vld [vmem:[#allocation2 + $0x18] sm:$0xff]
        %v1044 = vld [vmem:[#allocation2 + $0x20] sm:$0xff]
        %v1045 = vld [vmem:[#allocation2 + $0x28] sm:$0xff]
        %v1046 = vld [vmem:[#allocation2 + $0x30] sm:$0xff]
        %v1047 = vld [vmem:[#allocation2 + $0x38] sm:$0xff]
        %v1048 = vld [vmem:[#allocation2 + $0x40] sm:$0xff]
        %v1049 = vld [vmem:[#allocation2 + $0x48] sm:$0xff]
        %v1050 = vld [vmem:[#allocation2 + $0x50] sm:$0xff]
        %v1051 = vld [vmem:[#allocation2 + $0x58] sm:$0xff]
        %v1052 = vld [vmem:[#allocation2 + $0x60] sm:$0xff]
        %v1053 = vld [vmem:[#allocation2 + $0x68] sm:$0xff]
        %v1054 = vld [vmem:[#allocation2 + $0x70] sm:$0xff]
        %v1055 = vld [vmem:[#allocation2 + $0x78] sm:$0xff]
        %v1056 = vld [vmem:[#allocation3] sm:$0xff]
        %v1057 = vld [vmem:[#allocation3 + $0x8] sm:$0xff]
        %v1058 = vld [vmem:[#allocation3 + $0x10] sm:$0xff]
        %v1059 = vld [vmem:[#allocation3 + $0x18] sm:$0xff]
        %v1060 = vld [vmem:[#allocation3 + $0x20] sm:$0xff]
        %v1061 = vld [vmem:[#allocation3 + $0x28] sm:$0xff]
        %v1062 = vld [vmem:[#allocation3 + $0x30] sm:$0xff]
        %v1063 = vld [vmem:[#allocation3 + $0x38] sm:$0xff]
        %v1064 = vld [vmem:[#allocation3 + $0x40] sm:$0xff]
        %v1065 = vld [vmem:[#allocation3 + $0x48] sm:$0xff]
        %v1066 = vld [vmem:[#allocation3 + $0x50] sm:$0xff]
        %v1067 = vld [vmem:[#allocation3 + $0x58] sm:$0xff]
        %v1068 = vld [vmem:[#allocation3 + $0x60] sm:$0xff]
        %v1069 = vld [vmem:[#allocation3 + $0x68] sm:$0xff]
        %v1070 = vld [vmem:[#allocation3 + $0x70] sm:$0xff]
        %v1071 = vld [vmem:[#allocation3 + $0x78] sm:$0xff]
        %v1088 = vunpack.c.l.b16 %v976
        %v1089 = vunpack.c.l.b16 %v977
        %v1090 = vunpack.c.l.b16 %v978
        %v1091 = vunpack.c.l.b16 %v979
        %v1092 = vunpack.c.l.b16 %v980
        %v1093 = vunpack.c.l.b16 %v981
        %v1094 = vunpack.c.l.b16 %v982
        %v1095 = vunpack.c.l.b16 %v983
        %v1096 = vunpack.c.l.b16 %v984
        %v1097 = vunpack.c.l.b16 %v985
        %v1098 = vunpack.c.l.b16 %v986
        %v1099 = vunpack.c.l.b16 %v987
        %v1100 = vunpack.c.l.b16 %v988
        %v1101 = vunpack.c.l.b16 %v989
        %v1102 = vunpack.c.l.b16 %v990
        %v1103 = vunpack.c.l.b16 %v991
        %v1104 = vpack.c.b16 %v1089, %v1088
        %v1105 = vpack.c.b16 %v1091, %v1090
        %v1106 = vpack.c.b16 %v1093, %v1092
        %v1107 = vpack.c.b16 %v1095, %v1094
        %v1108 = vpack.c.b16 %v1097, %v1096
        %v1109 = vpack.c.b16 %v1099, %v1098
        %v1110 = vpack.c.b16 %v1101, %v1100
        %v1111 = vpack.c.b16 %v1103, %v1102
        %v1116 = vunpack.c.l.b16 %v1040
        %v1117 = vunpack.c.h.b16 %v1040
        %v1118 = vunpack.c.l.b16 %v1041
        %v1119 = vunpack.c.h.b16 %v1041
        %v1120 = vunpack.c.l.b16 %v1042
        %v1121 = vunpack.c.h.b16 %v1042
        %v1122 = vunpack.c.l.b16 %v1043
        %v1123 = vunpack.c.h.b16 %v1043
        %v1124 = vpack.c.b16 %v1118, %v1116
        %v1125 = vpack.c.b16 %v1119, %v1117
        %v1126 = vpack.c.b16 %v1122, %v1120
        %v1127 = vpack.c.b16 %v1123, %v1121
        %vm1132 = vcmask 261120
        %v1134 = vsel %vm1132, %v1104, 0
        %v1137 = vsel %vm1132, %v1105, 0
        %v1140 = vsel %vm1132, %v1106, 0
        %v1143 = vsel %vm1132, %v1107, 0
        %v1146 = vsel %vm1132, %v1108, 0
        %v1149 = vsel %vm1132, %v1109, 0
        %v1152 = vsel %vm1132, %v1110, 0
        %v1155 = vsel %vm1132, %v1111, 0
        %1157 = vmatpush.bf16.msra.mxu0 0
        %1158 = vmatpush.bf16.msra.mxu0 0
        %1159 = vmatpush.bf16.msra.mxu0 0
        %1160 = vmatpush.bf16.msra.mxu0 0
        %1161 = vmatpush.bf16.msra.mxu0 0
        %1162 = vmatpush.bf16.msra.mxu0 0
        %1163 = vmatpush.bf16.msra.mxu0 %v1126
        %1164 = vmatpush.bf16.msra.mxu0 %v1124
        %1165 = vmatmul.bf16.gmra.mxu0 %v1134
        %v1166 = vpop.f32.mrf.mxu0
        %v1167 = vadd.f32 0.0, %v1166
        %v1168 = vpop.f32.mrf.mxu0
        %v1169 = vadd.f32 0.0, %v1168
        %1170 = vmatmul.bf16.gmra.mxu0 %v1137
        %v1171 = vpop.f32.mrf.mxu0
        %v1172 = vadd.f32 0.0, %v1171
        %v1173 = vpop.f32.mrf.mxu0
        %v1174 = vadd.f32 0.0, %v1173
        %1175 = vmatmul.bf16.gmra.mxu0 %v1140
        %v1176 = vpop.f32.mrf.mxu0
        %v1177 = vadd.f32 0.0, %v1176
        %v1178 = vpop.f32.mrf.mxu0
        %v1179 = vadd.f32 0.0, %v1178
        %1180 = vmatmul.bf16.gmra.mxu0 %v1143
        %v1181 = vpop.f32.mrf.mxu0
        %v1182 = vadd.f32 0.0, %v1181
        %v1183 = vpop.f32.mrf.mxu0
        %v1184 = vadd.f32 0.0, %v1183
        %1185 = vmatmul.bf16.gmra.mxu0 %v1146
        %v1186 = vpop.f32.mrf.mxu0
        %v1187 = vadd.f32 0.0, %v1186
        %v1188 = vpop.f32.mrf.mxu0
        %v1189 = vadd.f32 0.0, %v1188
        %1190 = vmatmul.bf16.gmra.mxu0 %v1149
        %v1191 = vpop.f32.mrf.mxu0
        %v1192 = vadd.f32 0.0, %v1191
        %v1193 = vpop.f32.mrf.mxu0
        %v1194 = vadd.f32 0.0, %v1193
        %1195 = vmatmul.bf16.gmra.mxu0 %v1152
        %v1196 = vpop.f32.mrf.mxu0
        %v1197 = vadd.f32 0.0, %v1196
        %v1198 = vpop.f32.mrf.mxu0
        %v1199 = vadd.f32 0.0, %v1198
        %1200 = vmatmul.bf16.gmra.mxu0 %v1155
        %v1201 = vpop.f32.mrf.mxu0
        %v1202 = vadd.f32 0.0, %v1201
        %v1203 = vpop.f32.mrf.mxu0
        %v1204 = vadd.f32 0.0, %v1203
        %1205 = vdwg.mxu0
        %1206 = vmatpush.bf16.msra.mxu0 0
        %1207 = vmatpush.bf16.msra.mxu0 0
        %1208 = vmatpush.bf16.msra.mxu0 0
        %1209 = vmatpush.bf16.msra.mxu0 0
        %1210 = vmatpush.bf16.msra.mxu0 0
        %1211 = vmatpush.bf16.msra.mxu0 0
        %1212 = vmatpush.bf16.msra.mxu0 %v1127
        %1213 = vmatpush.bf16.msra.mxu0 %v1125
        %1214 = vmatmul.bf16.gmra.mxu0 %v1134
        %v1215 = vpop.f32.mrf.mxu0
        %v1216 = vadd.f32 0.0, %v1215
        %v1217 = vpop.f32.mrf.mxu0
        %v1218 = vadd.f32 0.0, %v1217
        %1219 = vmatmul.bf16.gmra.mxu0 %v1137
        %v1220 = vpop.f32.mrf.mxu0
        %v1221 = vadd.f32 0.0, %v1220
        %v1222 = vpop.f32.mrf.mxu0
        %v1223 = vadd.f32 0.0, %v1222
        %1224 = vmatmul.bf16.gmra.mxu0 %v1140
        %v1225 = vpop.f32.mrf.mxu0
        %v1226 = vadd.f32 0.0, %v1225
        %v1227 = vpop.f32.mrf.mxu0
        %v1228 = vadd.f32 0.0, %v1227
        %1229 = vmatmul.bf16.gmra.mxu0 %v1143
        %v1230 = vpop.f32.mrf.mxu0
        %v1231 = vadd.f32 0.0, %v1230
        %v1232 = vpop.f32.mrf.mxu0
        %v1233 = vadd.f32 0.0, %v1232
        %1234 = vmatmul.bf16.gmra.mxu0 %v1146
        %v1235 = vpop.f32.mrf.mxu0
        %v1236 = vadd.f32 0.0, %v1235
        %v1237 = vpop.f32.mrf.mxu0
        %v1238 = vadd.f32 0.0, %v1237
        %1239 = vmatmul.bf16.gmra.mxu0 %v1149
        %v1240 = vpop.f32.mrf.mxu0
        %v1241 = vadd.f32 0.0, %v1240
        %v1242 = vpop.f32.mrf.mxu0
        %v1243 = vadd.f32 0.0, %v1242
        %1244 = vmatmul.bf16.gmra.mxu0 %v1152
        %v1245 = vpop.f32.mrf.mxu0
        %v1246 = vadd.f32 0.0, %v1245
        %v1247 = vpop.f32.mrf.mxu0
        %v1248 = vadd.f32 0.0, %v1247
        %1249 = vmatmul.bf16.gmra.mxu0 %v1155
        %v1250 = vpop.f32.mrf.mxu0
        %v1251 = vadd.f32 0.0, %v1250
        %v1252 = vpop.f32.mrf.mxu0
        %v1253 = vadd.f32 0.0, %v1252
        %1254 = vdwg.mxu0
        %v1271 = vunpack.c.l.b16 %v992
        %v1272 = vunpack.c.l.b16 %v993
        %v1273 = vunpack.c.l.b16 %v994
        %v1274 = vunpack.c.l.b16 %v995
        %v1275 = vunpack.c.l.b16 %v996
        %v1276 = vunpack.c.l.b16 %v997
        %v1277 = vunpack.c.l.b16 %v998
        %v1278 = vunpack.c.l.b16 %v999
        %v1279 = vunpack.c.l.b16 %v1000
        %v1280 = vunpack.c.l.b16 %v1001
        %v1281 = vunpack.c.l.b16 %v1002
        %v1282 = vunpack.c.l.b16 %v1003
        %v1283 = vunpack.c.l.b16 %v1004
        %v1284 = vunpack.c.l.b16 %v1005
        %v1285 = vunpack.c.l.b16 %v1006
        %v1286 = vunpack.c.l.b16 %v1007
        %v1287 = vpack.c.b16 %v1272, %v1271
        %v1288 = vpack.c.b16 %v1274, %v1273
        %v1289 = vpack.c.b16 %v1276, %v1275
        %v1290 = vpack.c.b16 %v1278, %v1277
        %v1291 = vpack.c.b16 %v1280, %v1279
        %v1292 = vpack.c.b16 %v1282, %v1281
        %v1293 = vpack.c.b16 %v1284, %v1283
        %v1294 = vpack.c.b16 %v1286, %v1285
        %v1299 = vunpack.c.l.b16 %v1044
        %v1300 = vunpack.c.h.b16 %v1044
        %v1301 = vunpack.c.l.b16 %v1045
        %v1302 = vunpack.c.h.b16 %v1045
        %v1303 = vunpack.c.l.b16 %v1046
        %v1304 = vunpack.c.h.b16 %v1046
        %v1305 = vunpack.c.l.b16 %v1047
        %v1306 = vunpack.c.h.b16 %v1047
        %v1307 = vpack.c.b16 %v1301, %v1299
        %v1308 = vpack.c.b16 %v1302, %v1300
        %v1309 = vpack.c.b16 %v1305, %v1303
        %v1310 = vpack.c.b16 %v1306, %v1304
        %v1316 = vsel %vm1132, %v1287, 0
        %v1319 = vsel %vm1132, %v1288, 0
        %v1322 = vsel %vm1132, %v1289, 0
        %v1325 = vsel %vm1132, %v1290, 0
        %v1328 = vsel %vm1132, %v1291, 0
        %v1331 = vsel %vm1132, %v1292, 0
        %v1334 = vsel %vm1132, %v1293, 0
        %v1337 = vsel %vm1132, %v1294, 0
        %1339 = vmatpush.bf16.msra.mxu0 0
        %1340 = vmatpush.bf16.msra.mxu0 0
        %1341 = vmatpush.bf16.msra.mxu0 0
        %1342 = vmatpush.bf16.msra.mxu0 0
        %1343 = vmatpush.bf16.msra.mxu0 0
        %1344 = vmatpush.bf16.msra.mxu0 0
        %1345 = vmatpush.bf16.msra.mxu0 %v1309
        %1346 = vmatpush.bf16.msra.mxu0 %v1307
        %1347 = vmatmul.bf16.gmra.mxu0 %v1316
        %v1348 = vpop.f32.mrf.mxu0
        %v1349 = vadd.f32 0.0, %v1348
        %v1350 = vpop.f32.mrf.mxu0
        %v1351 = vadd.f32 0.0, %v1350
        %1352 = vmatmul.bf16.gmra.mxu0 %v1319
        %v1353 = vpop.f32.mrf.mxu0
        %v1354 = vadd.f32 0.0, %v1353
        %v1355 = vpop.f32.mrf.mxu0
        %v1356 = vadd.f32 0.0, %v1355
        %1357 = vmatmul.bf16.gmra.mxu0 %v1322
        %v1358 = vpop.f32.mrf.mxu0
        %v1359 = vadd.f32 0.0, %v1358
        %v1360 = vpop.f32.mrf.mxu0
        %v1361 = vadd.f32 0.0, %v1360
        %1362 = vmatmul.bf16.gmra.mxu0 %v1325
        %v1363 = vpop.f32.mrf.mxu0
        %v1364 = vadd.f32 0.0, %v1363
        %v1365 = vpop.f32.mrf.mxu0
        %v1366 = vadd.f32 0.0, %v1365
        %1367 = vmatmul.bf16.gmra.mxu0 %v1328
        %v1368 = vpop.f32.mrf.mxu0
        %v1369 = vadd.f32 0.0, %v1368
        %v1370 = vpop.f32.mrf.mxu0
        %v1371 = vadd.f32 0.0, %v1370
        %1372 = vmatmul.bf16.gmra.mxu0 %v1331
        %v1373 = vpop.f32.mrf.mxu0
        %v1374 = vadd.f32 0.0, %v1373
        %v1375 = vpop.f32.mrf.mxu0
        %v1376 = vadd.f32 0.0, %v1375
        %1377 = vmatmul.bf16.gmra.mxu0 %v1334
        %v1378 = vpop.f32.mrf.mxu0
        %v1379 = vadd.f32 0.0, %v1378
        %v1380 = vpop.f32.mrf.mxu0
        %v1381 = vadd.f32 0.0, %v1380
        %1382 = vmatmul.bf16.gmra.mxu0 %v1337
        %v1383 = vpop.f32.mrf.mxu0
        %v1384 = vadd.f32 0.0, %v1383
        %v1385 = vpop.f32.mrf.mxu0
        %v1386 = vadd.f32 0.0, %v1385
        %1387 = vdwg.mxu0
        %1388 = vmatpush.bf16.msra.mxu0 0
        %1389 = vmatpush.bf16.msra.mxu0 0
        %1390 = vmatpush.bf16.msra.mxu0 0
        %1391 = vmatpush.bf16.msra.mxu0 0
        %1392 = vmatpush.bf16.msra.mxu0 0
        %1393 = vmatpush.bf16.msra.mxu0 0
        %1394 = vmatpush.bf16.msra.mxu0 %v1310
        %1395 = vmatpush.bf16.msra.mxu0 %v1308
        %1396 = vmatmul.bf16.gmra.mxu0 %v1316
        %v1397 = vpop.f32.mrf.mxu0
        %v1398 = vadd.f32 0.0, %v1397
        %v1399 = vpop.f32.mrf.mxu0
        %v1400 = vadd.f32 0.0, %v1399
        %1401 = vmatmul.bf16.gmra.mxu0 %v1319
        %v1402 = vpop.f32.mrf.mxu0
        %v1403 = vadd.f32 0.0, %v1402
        %v1404 = vpop.f32.mrf.mxu0
        %v1405 = vadd.f32 0.0, %v1404
        %1406 = vmatmul.bf16.gmra.mxu0 %v1322
        %v1407 = vpop.f32.mrf.mxu0
        %v1408 = vadd.f32 0.0, %v1407
        %v1409 = vpop.f32.mrf.mxu0
        %v1410 = vadd.f32 0.0, %v1409
        %1411 = vmatmul.bf16.gmra.mxu0 %v1325
        %v1412 = vpop.f32.mrf.mxu0
        %v1413 = vadd.f32 0.0, %v1412
        %v1414 = vpop.f32.mrf.mxu0
        %v1415 = vadd.f32 0.0, %v1414
        %1416 = vmatmul.bf16.gmra.mxu0 %v1328
        %v1417 = vpop.f32.mrf.mxu0
        %v1418 = vadd.f32 0.0, %v1417
        %v1419 = vpop.f32.mrf.mxu0
        %v1420 = vadd.f32 0.0, %v1419
        %1421 = vmatmul.bf16.gmra.mxu0 %v1331
        %v1422 = vpop.f32.mrf.mxu0
        %v1423 = vadd.f32 0.0, %v1422
        %v1424 = vpop.f32.mrf.mxu0
        %v1425 = vadd.f32 0.0, %v1424
        %1426 = vmatmul.bf16.gmra.mxu0 %v1334
        %v1427 = vpop.f32.mrf.mxu0
        %v1428 = vadd.f32 0.0, %v1427
        %v1429 = vpop.f32.mrf.mxu0
        %v1430 = vadd.f32 0.0, %v1429
        %1431 = vmatmul.bf16.gmra.mxu0 %v1337
        %v1432 = vpop.f32.mrf.mxu0
        %v1433 = vadd.f32 0.0, %v1432
        %v1434 = vpop.f32.mrf.mxu0
        %v1435 = vadd.f32 0.0, %v1434
        %1436 = vdwg.mxu0
        %v1453 = vunpack.c.l.b16 %v1008
        %v1454 = vunpack.c.l.b16 %v1009
        %v1455 = vunpack.c.l.b16 %v1010
        %v1456 = vunpack.c.l.b16 %v1011
        %v1457 = vunpack.c.l.b16 %v1012
        %v1458 = vunpack.c.l.b16 %v1013
        %v1459 = vunpack.c.l.b16 %v1014
        %v1460 = vunpack.c.l.b16 %v1015
        %v1461 = vunpack.c.l.b16 %v1016
        %v1462 = vunpack.c.l.b16 %v1017
        %v1463 = vunpack.c.l.b16 %v1018
        %v1464 = vunpack.c.l.b16 %v1019
        %v1465 = vunpack.c.l.b16 %v1020
        %v1466 = vunpack.c.l.b16 %v1021
        %v1467 = vunpack.c.l.b16 %v1022
        %v1468 = vunpack.c.l.b16 %v1023
        %v1469 = vpack.c.b16 %v1454, %v1453
        %v1470 = vpack.c.b16 %v1456, %v1455
        %v1471 = vpack.c.b16 %v1458, %v1457
        %v1472 = vpack.c.b16 %v1460, %v1459
        %v1473 = vpack.c.b16 %v1462, %v1461
        %v1474 = vpack.c.b16 %v1464, %v1463
        %v1475 = vpack.c.b16 %v1466, %v1465
        %v1476 = vpack.c.b16 %v1468, %v1467
        %v1481 = vunpack.c.l.b16 %v1048
        %v1482 = vunpack.c.h.b16 %v1048
        %v1483 = vunpack.c.l.b16 %v1049
        %v1484 = vunpack.c.h.b16 %v1049
        %v1485 = vunpack.c.l.b16 %v1050
        %v1486 = vunpack.c.h.b16 %v1050
        %v1487 = vunpack.c.l.b16 %v1051
        %v1488 = vunpack.c.h.b16 %v1051
        %v1489 = vpack.c.b16 %v1483, %v1481
        %v1490 = vpack.c.b16 %v1484, %v1482
        %v1491 = vpack.c.b16 %v1487, %v1485
        %v1492 = vpack.c.b16 %v1488, %v1486
        %v1498 = vsel %vm1132, %v1469, 0
        %v1501 = vsel %vm1132, %v1470, 0
        %v1504 = vsel %vm1132, %v1471, 0
        %v1507 = vsel %vm1132, %v1472, 0
        %v1510 = vsel %vm1132, %v1473, 0
        %v1513 = vsel %vm1132, %v1474, 0
        %v1516 = vsel %vm1132, %v1475, 0
        %v1519 = vsel %vm1132, %v1476, 0
        %1521 = vmatpush.bf16.msra.mxu0 0
        %1522 = vmatpush.bf16.msra.mxu0 0
        %1523 = vmatpush.bf16.msra.mxu0 0
        %1524 = vmatpush.bf16.msra.mxu0 0
        %1525 = vmatpush.bf16.msra.mxu0 0
        %1526 = vmatpush.bf16.msra.mxu0 0
        %1527 = vmatpush.bf16.msra.mxu0 %v1491
        %1528 = vmatpush.bf16.msra.mxu0 %v1489
        %1529 = vmatmul.bf16.gmra.mxu0 %v1498
        %v1530 = vpop.f32.mrf.mxu0
        %v1531 = vadd.f32 0.0, %v1530
        %v1532 = vpop.f32.mrf.mxu0
        %v1533 = vadd.f32 0.0, %v1532
        %1534 = vmatmul.bf16.gmra.mxu0 %v1501
        %v1535 = vpop.f32.mrf.mxu0
        %v1536 = vadd.f32 0.0, %v1535
        %v1537 = vpop.f32.mrf.mxu0
        %v1538 = vadd.f32 0.0, %v1537
        %1539 = vmatmul.bf16.gmra.mxu0 %v1504
        %v1540 = vpop.f32.mrf.mxu0
        %v1541 = vadd.f32 0.0, %v1540
        %v1542 = vpop.f32.mrf.mxu0
        %v1543 = vadd.f32 0.0, %v1542
        %1544 = vmatmul.bf16.gmra.mxu0 %v1507
        %v1545 = vpop.f32.mrf.mxu0
        %v1546 = vadd.f32 0.0, %v1545
        %v1547 = vpop.f32.mrf.mxu0
        %v1548 = vadd.f32 0.0, %v1547
        %1549 = vmatmul.bf16.gmra.mxu0 %v1510
        %v1550 = vpop.f32.mrf.mxu0
        %v1551 = vadd.f32 0.0, %v1550
        %v1552 = vpop.f32.mrf.mxu0
        %v1553 = vadd.f32 0.0, %v1552
        %1554 = vmatmul.bf16.gmra.mxu0 %v1513
        %v1555 = vpop.f32.mrf.mxu0
        %v1556 = vadd.f32 0.0, %v1555
        %v1557 = vpop.f32.mrf.mxu0
        %v1558 = vadd.f32 0.0, %v1557
        %1559 = vmatmul.bf16.gmra.mxu0 %v1516
        %v1560 = vpop.f32.mrf.mxu0
        %v1561 = vadd.f32 0.0, %v1560
        %v1562 = vpop.f32.mrf.mxu0
        %v1563 = vadd.f32 0.0, %v1562
        %1564 = vmatmul.bf16.gmra.mxu0 %v1519
        %v1565 = vpop.f32.mrf.mxu0
        %v1566 = vadd.f32 0.0, %v1565
        %v1567 = vpop.f32.mrf.mxu0
        %v1568 = vadd.f32 0.0, %v1567
        %1569 = vdwg.mxu0
        %1570 = vmatpush.bf16.msra.mxu0 0
        %1571 = vmatpush.bf16.msra.mxu0 0
        %1572 = vmatpush.bf16.msra.mxu0 0
        %1573 = vmatpush.bf16.msra.mxu0 0
        %1574 = vmatpush.bf16.msra.mxu0 0
        %1575 = vmatpush.bf16.msra.mxu0 0
        %1576 = vmatpush.bf16.msra.mxu0 %v1492
        %1577 = vmatpush.bf16.msra.mxu0 %v1490
        %1578 = vmatmul.bf16.gmra.mxu0 %v1498
        %v1579 = vpop.f32.mrf.mxu0
        %v1580 = vadd.f32 0.0, %v1579
        %v1581 = vpop.f32.mrf.mxu0
        %v1582 = vadd.f32 0.0, %v1581
        %1583 = vmatmul.bf16.gmra.mxu0 %v1501
        %v1584 = vpop.f32.mrf.mxu0
        %v1585 = vadd.f32 0.0, %v1584
        %v1586 = vpop.f32.mrf.mxu0
        %v1587 = vadd.f32 0.0, %v1586
        %1588 = vmatmul.bf16.gmra.mxu0 %v1504
        %v1589 = vpop.f32.mrf.mxu0
        %v1590 = vadd.f32 0.0, %v1589
        %v1591 = vpop.f32.mrf.mxu0
        %v1592 = vadd.f32 0.0, %v1591
        %1593 = vmatmul.bf16.gmra.mxu0 %v1507
        %v1594 = vpop.f32.mrf.mxu0
        %v1595 = vadd.f32 0.0, %v1594
        %v1596 = vpop.f32.mrf.mxu0
        %v1597 = vadd.f32 0.0, %v1596
        %1598 = vmatmul.bf16.gmra.mxu0 %v1510
        %v1599 = vpop.f32.mrf.mxu0
        %v1600 = vadd.f32 0.0, %v1599
        %v1601 = vpop.f32.mrf.mxu0
        %v1602 = vadd.f32 0.0, %v1601
        %1603 = vmatmul.bf16.gmra.mxu0 %v1513
        %v1604 = vpop.f32.mrf.mxu0
        %v1605 = vadd.f32 0.0, %v1604
        %v1606 = vpop.f32.mrf.mxu0
        %v1607 = vadd.f32 0.0, %v1606
        %1608 = vmatmul.bf16.gmra.mxu0 %v1516
        %v1609 = vpop.f32.mrf.mxu0
        %v1610 = vadd.f32 0.0, %v1609
        %v1611 = vpop.f32.mrf.mxu0
        %v1612 = vadd.f32 0.0, %v1611
        %1613 = vmatmul.bf16.gmra.mxu0 %v1519
        %v1614 = vpop.f32.mrf.mxu0
        %v1615 = vadd.f32 0.0, %v1614
        %v1616 = vpop.f32.mrf.mxu0
        %v1617 = vadd.f32 0.0, %v1616
        %1618 = vdwg.mxu0
        %v1635 = vunpack.c.l.b16 %v1024
        %v1636 = vunpack.c.l.b16 %v1025
        %v1637 = vunpack.c.l.b16 %v1026
        %v1638 = vunpack.c.l.b16 %v1027
        %v1639 = vunpack.c.l.b16 %v1028
        %v1640 = vunpack.c.l.b16 %v1029
        %v1641 = vunpack.c.l.b16 %v1030
        %v1642 = vunpack.c.l.b16 %v1031
        %v1643 = vunpack.c.l.b16 %v1032
        %v1644 = vunpack.c.l.b16 %v1033
        %v1645 = vunpack.c.l.b16 %v1034
        %v1646 = vunpack.c.l.b16 %v1035
        %v1647 = vunpack.c.l.b16 %v1036
        %v1648 = vunpack.c.l.b16 %v1037
        %v1649 = vunpack.c.l.b16 %v1038
        %v1650 = vunpack.c.l.b16 %v1039
        %v1651 = vpack.c.b16 %v1636, %v1635
        %v1652 = vpack.c.b16 %v1638, %v1637
        %v1653 = vpack.c.b16 %v1640, %v1639
        %v1654 = vpack.c.b16 %v1642, %v1641
        %v1655 = vpack.c.b16 %v1644, %v1643
        %v1656 = vpack.c.b16 %v1646, %v1645
        %v1657 = vpack.c.b16 %v1648, %v1647
        %v1658 = vpack.c.b16 %v1650, %v1649
        %v1663 = vunpack.c.l.b16 %v1052
        %v1664 = vunpack.c.h.b16 %v1052
        %v1665 = vunpack.c.l.b16 %v1053
        %v1666 = vunpack.c.h.b16 %v1053
        %v1667 = vunpack.c.l.b16 %v1054
        %v1668 = vunpack.c.h.b16 %v1054
        %v1669 = vunpack.c.l.b16 %v1055
        %v1670 = vunpack.c.h.b16 %v1055
        %v1671 = vpack.c.b16 %v1665, %v1663
        %v1672 = vpack.c.b16 %v1666, %v1664
        %v1673 = vpack.c.b16 %v1669, %v1667
        %v1674 = vpack.c.b16 %v1670, %v1668
        %v1680 = vsel %vm1132, %v1651, 0
        %v1683 = vsel %vm1132, %v1652, 0
        %v1686 = vsel %vm1132, %v1653, 0
        %v1689 = vsel %vm1132, %v1654, 0
        %v1692 = vsel %vm1132, %v1655, 0
        %v1695 = vsel %vm1132, %v1656, 0
        %v1698 = vsel %vm1132, %v1657, 0
        %v1701 = vsel %vm1132, %v1658, 0
        %1703 = vmatpush.bf16.msra.mxu0 0
        %1704 = vmatpush.bf16.msra.mxu0 0
        %1705 = vmatpush.bf16.msra.mxu0 0
        %1706 = vmatpush.bf16.msra.mxu0 0
        %1707 = vmatpush.bf16.msra.mxu0 0
        %1708 = vmatpush.bf16.msra.mxu0 0
        %1709 = vmatpush.bf16.msra.mxu0 %v1673
        %1710 = vmatpush.bf16.msra.mxu0 %v1671
        %1711 = vmatmul.bf16.gmra.mxu0 %v1680
        %v1712 = vpop.f32.mrf.mxu0
        %v1713 = vadd.f32 0.0, %v1712
        %v1714 = vpop.f32.mrf.mxu0
        %v1715 = vadd.f32 0.0, %v1714
        %1716 = vmatmul.bf16.gmra.mxu0 %v1683
        %v1717 = vpop.f32.mrf.mxu0
        %v1718 = vadd.f32 0.0, %v1717
        %v1719 = vpop.f32.mrf.mxu0
        %v1720 = vadd.f32 0.0, %v1719
        %1721 = vmatmul.bf16.gmra.mxu0 %v1686
        %v1722 = vpop.f32.mrf.mxu0
        %v1723 = vadd.f32 0.0, %v1722
        %v1724 = vpop.f32.mrf.mxu0
        %v1725 = vadd.f32 0.0, %v1724
        %1726 = vmatmul.bf16.gmra.mxu0 %v1689
        %v1727 = vpop.f32.mrf.mxu0
        %v1728 = vadd.f32 0.0, %v1727
        %v1729 = vpop.f32.mrf.mxu0
        %v1730 = vadd.f32 0.0, %v1729
        %1731 = vmatmul.bf16.gmra.mxu0 %v1692
        %v1732 = vpop.f32.mrf.mxu0
        %v1733 = vadd.f32 0.0, %v1732
        %v1734 = vpop.f32.mrf.mxu0
        %v1735 = vadd.f32 0.0, %v1734
        %1736 = vmatmul.bf16.gmra.mxu0 %v1695
        %v1737 = vpop.f32.mrf.mxu0
        %v1738 = vadd.f32 0.0, %v1737
        %v1739 = vpop.f32.mrf.mxu0
        %v1740 = vadd.f32 0.0, %v1739
        %1741 = vmatmul.bf16.gmra.mxu0 %v1698
        %v1742 = vpop.f32.mrf.mxu0
        %v1743 = vadd.f32 0.0, %v1742
        %v1744 = vpop.f32.mrf.mxu0
        %v1745 = vadd.f32 0.0, %v1744
        %1746 = vmatmul.bf16.gmra.mxu0 %v1701
        %v1747 = vpop.f32.mrf.mxu0
        %v1748 = vadd.f32 0.0, %v1747
        %v1749 = vpop.f32.mrf.mxu0
        %v1750 = vadd.f32 0.0, %v1749
        %1751 = vdwg.mxu0
        %1752 = vmatpush.bf16.msra.mxu0 0
        %1753 = vmatpush.bf16.msra.mxu0 0
        %1754 = vmatpush.bf16.msra.mxu0 0
        %1755 = vmatpush.bf16.msra.mxu0 0
        %1756 = vmatpush.bf16.msra.mxu0 0
        %1757 = vmatpush.bf16.msra.mxu0 0
        %1758 = vmatpush.bf16.msra.mxu0 %v1674
        %1759 = vmatpush.bf16.msra.mxu0 %v1672
        %1760 = vmatmul.bf16.gmra.mxu0 %v1680
        %v1761 = vpop.f32.mrf.mxu0
        %v1762 = vadd.f32 0.0, %v1761
        %v1763 = vpop.f32.mrf.mxu0
        %v1764 = vadd.f32 0.0, %v1763
        %1765 = vmatmul.bf16.gmra.mxu0 %v1683
        %v1766 = vpop.f32.mrf.mxu0
        %v1767 = vadd.f32 0.0, %v1766
        %v1768 = vpop.f32.mrf.mxu0
        %v1769 = vadd.f32 0.0, %v1768
        %1770 = vmatmul.bf16.gmra.mxu0 %v1686
        %v1771 = vpop.f32.mrf.mxu0
        %v1772 = vadd.f32 0.0, %v1771
        %v1773 = vpop.f32.mrf.mxu0
        %v1774 = vadd.f32 0.0, %v1773
        %1775 = vmatmul.bf16.gmra.mxu0 %v1689
        %v1776 = vpop.f32.mrf.mxu0
        %v1777 = vadd.f32 0.0, %v1776
        %v1778 = vpop.f32.mrf.mxu0
        %v1779 = vadd.f32 0.0, %v1778
        %1780 = vmatmul.bf16.gmra.mxu0 %v1692
        %v1781 = vpop.f32.mrf.mxu0
        %v1782 = vadd.f32 0.0, %v1781
        %v1783 = vpop.f32.mrf.mxu0
        %v1784 = vadd.f32 0.0, %v1783
        %1785 = vmatmul.bf16.gmra.mxu0 %v1695
        %v1786 = vpop.f32.mrf.mxu0
        %v1787 = vadd.f32 0.0, %v1786
        %v1788 = vpop.f32.mrf.mxu0
        %v1789 = vadd.f32 0.0, %v1788
        %1790 = vmatmul.bf16.gmra.mxu0 %v1698
        %v1791 = vpop.f32.mrf.mxu0
        %v1792 = vadd.f32 0.0, %v1791
        %v1793 = vpop.f32.mrf.mxu0
        %v1794 = vadd.f32 0.0, %v1793
        %1795 = vmatmul.bf16.gmra.mxu0 %v1701
        %v1796 = vpop.f32.mrf.mxu0
        %v1797 = vadd.f32 0.0, %v1796
        %v1798 = vpop.f32.mrf.mxu0
        %v1799 = vadd.f32 0.0, %v1798
        %1800 = vdwg.mxu0
        %v1801 = vmax.f32 %v1167, %v1216
        %1802 = vmax.xlane.f32.xlu0 %v1801
        %v1803 = vpop.xlane.xlu0 %1802
        %v1804 = vmax.f32 %v1169, %v1218
        %1805 = vmax.xlane.f32.xlu0 %v1804
        %v1806 = vpop.xlane.xlu0 %1805
        %v1807 = vmax.f32 %v1172, %v1221
        %1808 = vmax.xlane.f32.xlu0 %v1807
        %v1809 = vpop.xlane.xlu0 %1808
        %v1810 = vmax.f32 %v1174, %v1223
        %1811 = vmax.xlane.f32.xlu0 %v1810
        %v1812 = vpop.xlane.xlu0 %1811
        %v1813 = vmax.f32 %v1177, %v1226
        %1814 = vmax.xlane.f32.xlu0 %v1813
        %v1815 = vpop.xlane.xlu0 %1814
        %v1816 = vmax.f32 %v1179, %v1228
        %1817 = vmax.xlane.f32.xlu0 %v1816
        %v1818 = vpop.xlane.xlu0 %1817
        %v1819 = vmax.f32 %v1182, %v1231
        %1820 = vmax.xlane.f32.xlu0 %v1819
        %v1821 = vpop.xlane.xlu0 %1820
        %v1822 = vmax.f32 %v1184, %v1233
        %1823 = vmax.xlane.f32.xlu0 %v1822
        %v1824 = vpop.xlane.xlu0 %1823
        %v1825 = vmax.f32 %v1187, %v1236
        %1826 = vmax.xlane.f32.xlu0 %v1825
        %v1827 = vpop.xlane.xlu0 %1826
        %v1828 = vmax.f32 %v1189, %v1238
        %1829 = vmax.xlane.f32.xlu0 %v1828
        %v1830 = vpop.xlane.xlu0 %1829
        %v1831 = vmax.f32 %v1192, %v1241
        %1832 = vmax.xlane.f32.xlu0 %v1831
        %v1833 = vpop.xlane.xlu0 %1832
        %v1834 = vmax.f32 %v1194, %v1243
        %1835 = vmax.xlane.f32.xlu0 %v1834
        %v1836 = vpop.xlane.xlu0 %1835
        %v1837 = vmax.f32 %v1197, %v1246
        %1838 = vmax.xlane.f32.xlu0 %v1837
        %v1839 = vpop.xlane.xlu0 %1838
        %v1840 = vmax.f32 %v1199, %v1248
        %1841 = vmax.xlane.f32.xlu0 %v1840
        %v1842 = vpop.xlane.xlu0 %1841
        %v1843 = vmax.f32 %v1202, %v1251
        %1844 = vmax.xlane.f32.xlu0 %v1843
        %v1845 = vpop.xlane.xlu0 %1844
        %v1846 = vmax.f32 %v1204, %v1253
        %1847 = vmax.xlane.f32.xlu0 %v1846
        %v1848 = vpop.xlane.xlu0 %1847
        %v1849 = vmax.f32 %v1349, %v1398
        %1850 = vmax.xlane.f32.xlu0 %v1849
        %v1851 = vpop.xlane.xlu0 %1850
        %v1852 = vmax.f32 %v1351, %v1400
        %1853 = vmax.xlane.f32.xlu0 %v1852
        %v1854 = vpop.xlane.xlu0 %1853
        %v1855 = vmax.f32 %v1354, %v1403
        %1856 = vmax.xlane.f32.xlu0 %v1855
        %v1857 = vpop.xlane.xlu0 %1856
        %v1858 = vmax.f32 %v1356, %v1405
        %1859 = vmax.xlane.f32.xlu0 %v1858
        %v1860 = vpop.xlane.xlu0 %1859
        %v1861 = vmax.f32 %v1359, %v1408
        %1862 = vmax.xlane.f32.xlu0 %v1861
        %v1863 = vpop.xlane.xlu0 %1862
        %v1864 = vmax.f32 %v1361, %v1410
        %1865 = vmax.xlane.f32.xlu0 %v1864
        %v1866 = vpop.xlane.xlu0 %1865
        %v1867 = vmax.f32 %v1364, %v1413
        %1868 = vmax.xlane.f32.xlu0 %v1867
        %v1869 = vpop.xlane.xlu0 %1868
        %v1870 = vmax.f32 %v1366, %v1415
        %1871 = vmax.xlane.f32.xlu0 %v1870
        %v1872 = vpop.xlane.xlu0 %1871
        %v1873 = vmax.f32 %v1369, %v1418
        %1874 = vmax.xlane.f32.xlu0 %v1873
        %v1875 = vpop.xlane.xlu0 %1874
        %v1876 = vmax.f32 %v1371, %v1420
        %1877 = vmax.xlane.f32.xlu0 %v1876
        %v1878 = vpop.xlane.xlu0 %1877
        %v1879 = vmax.f32 %v1374, %v1423
        %1880 = vmax.xlane.f32.xlu0 %v1879
        %v1881 = vpop.xlane.xlu0 %1880
        %v1882 = vmax.f32 %v1376, %v1425
        %1883 = vmax.xlane.f32.xlu0 %v1882
        %v1884 = vpop.xlane.xlu0 %1883
        %v1885 = vmax.f32 %v1379, %v1428
        %1886 = vmax.xlane.f32.xlu0 %v1885
        %v1887 = vpop.xlane.xlu0 %1886
        %v1888 = vmax.f32 %v1381, %v1430
        %1889 = vmax.xlane.f32.xlu0 %v1888
        %v1890 = vpop.xlane.xlu0 %1889
        %v1891 = vmax.f32 %v1384, %v1433
        %1892 = vmax.xlane.f32.xlu0 %v1891
        %v1893 = vpop.xlane.xlu0 %1892
        %v1894 = vmax.f32 %v1386, %v1435
        %1895 = vmax.xlane.f32.xlu0 %v1894
        %v1896 = vpop.xlane.xlu0 %1895
        %v1897 = vmax.f32 %v1531, %v1580
        %1898 = vmax.xlane.f32.xlu0 %v1897
        %v1899 = vpop.xlane.xlu0 %1898
        %v1900 = vmax.f32 %v1533, %v1582
        %1901 = vmax.xlane.f32.xlu0 %v1900
        %v1902 = vpop.xlane.xlu0 %1901
        %v1903 = vmax.f32 %v1536, %v1585
        %1904 = vmax.xlane.f32.xlu0 %v1903
        %v1905 = vpop.xlane.xlu0 %1904
        %v1906 = vmax.f32 %v1538, %v1587
        %1907 = vmax.xlane.f32.xlu0 %v1906
        %v1908 = vpop.xlane.xlu0 %1907
        %v1909 = vmax.f32 %v1541, %v1590
        %1910 = vmax.xlane.f32.xlu0 %v1909
        %v1911 = vpop.xlane.xlu0 %1910
        %v1912 = vmax.f32 %v1543, %v1592
        %1913 = vmax.xlane.f32.xlu0 %v1912
        %v1914 = vpop.xlane.xlu0 %1913
        %v1915 = vmax.f32 %v1546, %v1595
        %1916 = vmax.xlane.f32.xlu0 %v1915
        %v1917 = vpop.xlane.xlu0 %1916
        %v1918 = vmax.f32 %v1548, %v1597
        %1919 = vmax.xlane.f32.xlu0 %v1918
        %v1920 = vpop.xlane.xlu0 %1919
        %v1921 = vmax.f32 %v1551, %v1600
        %1922 = vmax.xlane.f32.xlu0 %v1921
        %v1923 = vpop.xlane.xlu0 %1922
        %v1924 = vmax.f32 %v1553, %v1602
        %1925 = vmax.xlane.f32.xlu0 %v1924
        %v1926 = vpop.xlane.xlu0 %1925
        %v1927 = vmax.f32 %v1556, %v1605
        %1928 = vmax.xlane.f32.xlu0 %v1927
        %v1929 = vpop.xlane.xlu0 %1928
        %v1930 = vmax.f32 %v1558, %v1607
        %1931 = vmax.xlane.f32.xlu0 %v1930
        %v1932 = vpop.xlane.xlu0 %1931
        %v1933 = vmax.f32 %v1561, %v1610
        %1934 = vmax.xlane.f32.xlu0 %v1933
        %v1935 = vpop.xlane.xlu0 %1934
        %v1936 = vmax.f32 %v1563, %v1612
        %1937 = vmax.xlane.f32.xlu0 %v1936
        %v1938 = vpop.xlane.xlu0 %1937
        %v1939 = vmax.f32 %v1566, %v1615
        %1940 = vmax.xlane.f32.xlu0 %v1939
        %v1941 = vpop.xlane.xlu0 %1940
        %v1942 = vmax.f32 %v1568, %v1617
        %1943 = vmax.xlane.f32.xlu0 %v1942
        %v1944 = vpop.xlane.xlu0 %1943
        %v1945 = vmax.f32 %v1713, %v1762
        %1946 = vmax.xlane.f32.xlu0 %v1945
        %v1947 = vpop.xlane.xlu0 %1946
        %v1948 = vmax.f32 %v1715, %v1764
        %1949 = vmax.xlane.f32.xlu0 %v1948
        %v1950 = vpop.xlane.xlu0 %1949
        %v1951 = vmax.f32 %v1718, %v1767
        %1952 = vmax.xlane.f32.xlu0 %v1951
        %v1953 = vpop.xlane.xlu0 %1952
        %v1954 = vmax.f32 %v1720, %v1769
        %1955 = vmax.xlane.f32.xlu0 %v1954
        %v1956 = vpop.xlane.xlu0 %1955
        %v1957 = vmax.f32 %v1723, %v1772
        %1958 = vmax.xlane.f32.xlu0 %v1957
        %v1959 = vpop.xlane.xlu0 %1958
        %v1960 = vmax.f32 %v1725, %v1774
        %1961 = vmax.xlane.f32.xlu0 %v1960
        %v1962 = vpop.xlane.xlu0 %1961
        %v1963 = vmax.f32 %v1728, %v1777
        %1964 = vmax.xlane.f32.xlu0 %v1963
        %v1965 = vpop.xlane.xlu0 %1964
        %v1966 = vmax.f32 %v1730, %v1779
        %1967 = vmax.xlane.f32.xlu0 %v1966
        %v1968 = vpop.xlane.xlu0 %1967
        %v1969 = vmax.f32 %v1733, %v1782
        %1970 = vmax.xlane.f32.xlu0 %v1969
        %v1971 = vpop.xlane.xlu0 %1970
        %v1972 = vmax.f32 %v1735, %v1784
        %1973 = vmax.xlane.f32.xlu0 %v1972
        %v1974 = vpop.xlane.xlu0 %1973
        %v1975 = vmax.f32 %v1738, %v1787
        %1976 = vmax.xlane.f32.xlu0 %v1975
        %v1977 = vpop.xlane.xlu0 %1976
        %v1978 = vmax.f32 %v1740, %v1789
        %1979 = vmax.xlane.f32.xlu0 %v1978
        %v1980 = vpop.xlane.xlu0 %1979
        %v1981 = vmax.f32 %v1743, %v1792
        %1982 = vmax.xlane.f32.xlu0 %v1981
        %v1983 = vpop.xlane.xlu0 %1982
        %v1984 = vmax.f32 %v1745, %v1794
        %1985 = vmax.xlane.f32.xlu0 %v1984
        %v1986 = vpop.xlane.xlu0 %1985
        %v1987 = vmax.f32 %v1748, %v1797
        %1988 = vmax.xlane.f32.xlu0 %v1987
        %v1989 = vpop.xlane.xlu0 %1988
        %v1990 = vmax.f32 %v1750, %v1799
        %1991 = vmax.xlane.f32.xlu0 %v1990
        %v1992 = vpop.xlane.xlu0 %1991
        %v1993 = vsub.f32 %v1167, %v1803
        %v1994 = vsub.f32 %v1216, %v1803
        %v1995 = vsub.f32 %v1169, %v1806
        %v1996 = vsub.f32 %v1218, %v1806
        %v1997 = vsub.f32 %v1172, %v1809
        %v1998 = vsub.f32 %v1221, %v1809
        %v1999 = vsub.f32 %v1174, %v1812
        %v2000 = vsub.f32 %v1223, %v1812
        %v2001 = vsub.f32 %v1177, %v1815
        %v2002 = vsub.f32 %v1226, %v1815
        %v2003 = vsub.f32 %v1179, %v1818
        %v2004 = vsub.f32 %v1228, %v1818
        %v2005 = vsub.f32 %v1182, %v1821
        %v2006 = vsub.f32 %v1231, %v1821
        %v2007 = vsub.f32 %v1184, %v1824
        %v2008 = vsub.f32 %v1233, %v1824
        %v2009 = vsub.f32 %v1187, %v1827
        %v2010 = vsub.f32 %v1236, %v1827
        %v2011 = vsub.f32 %v1189, %v1830
        %v2012 = vsub.f32 %v1238, %v1830
        %v2013 = vsub.f32 %v1192, %v1833
        %v2014 = vsub.f32 %v1241, %v1833
        %v2015 = vsub.f32 %v1194, %v1836
        %v2016 = vsub.f32 %v1243, %v1836
        %v2017 = vsub.f32 %v1197, %v1839
        %v2018 = vsub.f32 %v1246, %v1839
        %v2019 = vsub.f32 %v1199, %v1842
        %v2020 = vsub.f32 %v1248, %v1842
        %v2021 = vsub.f32 %v1202, %v1845
        %v2022 = vsub.f32 %v1251, %v1845
        %v2023 = vsub.f32 %v1204, %v1848
        %v2024 = vsub.f32 %v1253, %v1848
        %v2025 = vsub.f32 %v1349, %v1851
        %v2026 = vsub.f32 %v1398, %v1851
        %v2027 = vsub.f32 %v1351, %v1854
        %v2028 = vsub.f32 %v1400, %v1854
        %v2029 = vsub.f32 %v1354, %v1857
        %v2030 = vsub.f32 %v1403, %v1857
        %v2031 = vsub.f32 %v1356, %v1860
        %v2032 = vsub.f32 %v1405, %v1860
        %v2033 = vsub.f32 %v1359, %v1863
        %v2034 = vsub.f32 %v1408, %v1863
        %v2035 = vsub.f32 %v1361, %v1866
        %v2036 = vsub.f32 %v1410, %v1866
        %v2037 = vsub.f32 %v1364, %v1869
        %v2038 = vsub.f32 %v1413, %v1869
        %v2039 = vsub.f32 %v1366, %v1872
        %v2040 = vsub.f32 %v1415, %v1872
        %v2041 = vsub.f32 %v1369, %v1875
        %v2042 = vsub.f32 %v1418, %v1875
        %v2043 = vsub.f32 %v1371, %v1878
        %v2044 = vsub.f32 %v1420, %v1878
        %v2045 = vsub.f32 %v1374, %v1881
        %v2046 = vsub.f32 %v1423, %v1881
        %v2047 = vsub.f32 %v1376, %v1884
        %v2048 = vsub.f32 %v1425, %v1884
        %v2049 = vsub.f32 %v1379, %v1887
        %v2050 = vsub.f32 %v1428, %v1887
        %v2051 = vsub.f32 %v1381, %v1890
        %v2052 = vsub.f32 %v1430, %v1890
        %v2053 = vsub.f32 %v1384, %v1893
        %v2054 = vsub.f32 %v1433, %v1893
        %v2055 = vsub.f32 %v1386, %v1896
        %v2056 = vsub.f32 %v1435, %v1896
        %v2057 = vsub.f32 %v1531, %v1899
        %v2058 = vsub.f32 %v1580, %v1899
        %v2059 = vsub.f32 %v1533, %v1902
        %v2060 = vsub.f32 %v1582, %v1902
        %v2061 = vsub.f32 %v1536, %v1905
        %v2062 = vsub.f32 %v1585, %v1905
        %v2063 = vsub.f32 %v1538, %v1908
        %v2064 = vsub.f32 %v1587, %v1908
        %v2065 = vsub.f32 %v1541, %v1911
        %v2066 = vsub.f32 %v1590, %v1911
        %v2067 = vsub.f32 %v1543, %v1914
        %v2068 = vsub.f32 %v1592, %v1914
        %v2069 = vsub.f32 %v1546, %v1917
        %v2070 = vsub.f32 %v1595, %v1917
        %v2071 = vsub.f32 %v1548, %v1920
        %v2072 = vsub.f32 %v1597, %v1920
        %v2073 = vsub.f32 %v1551, %v1923
        %v2074 = vsub.f32 %v1600, %v1923
        %v2075 = vsub.f32 %v1553, %v1926
        %v2076 = vsub.f32 %v1602, %v1926
        %v2077 = vsub.f32 %v1556, %v1929
        %v2078 = vsub.f32 %v1605, %v1929
        %v2079 = vsub.f32 %v1558, %v1932
        %v2080 = vsub.f32 %v1607, %v1932
        %v2081 = vsub.f32 %v1561, %v1935
        %v2082 = vsub.f32 %v1610, %v1935
        %v2083 = vsub.f32 %v1563, %v1938
        %v2084 = vsub.f32 %v1612, %v1938
        %v2085 = vsub.f32 %v1566, %v1941
        %v2086 = vsub.f32 %v1615, %v1941
        %v2087 = vsub.f32 %v1568, %v1944
        %v2088 = vsub.f32 %v1617, %v1944
        %v2089 = vsub.f32 %v1713, %v1947
        %v2090 = vsub.f32 %v1762, %v1947
        %v2091 = vsub.f32 %v1715, %v1950
        %v2092 = vsub.f32 %v1764, %v1950
        %v2093 = vsub.f32 %v1718, %v1953
        %v2094 = vsub.f32 %v1767, %v1953
        %v2095 = vsub.f32 %v1720, %v1956
        %v2096 = vsub.f32 %v1769, %v1956
        %v2097 = vsub.f32 %v1723, %v1959
        %v2098 = vsub.f32 %v1772, %v1959
        %v2099 = vsub.f32 %v1725, %v1962
        %v2100 = vsub.f32 %v1774, %v1962
        %v2101 = vsub.f32 %v1728, %v1965
        %v2102 = vsub.f32 %v1777, %v1965
        %v2103 = vsub.f32 %v1730, %v1968
        %v2104 = vsub.f32 %v1779, %v1968
        %v2105 = vsub.f32 %v1733, %v1971
        %v2106 = vsub.f32 %v1782, %v1971
        %v2107 = vsub.f32 %v1735, %v1974
        %v2108 = vsub.f32 %v1784, %v1974
        %v2109 = vsub.f32 %v1738, %v1977
        %v2110 = vsub.f32 %v1787, %v1977
        %v2111 = vsub.f32 %v1740, %v1980
        %v2112 = vsub.f32 %v1789, %v1980
        %v2113 = vsub.f32 %v1743, %v1983
        %v2114 = vsub.f32 %v1792, %v1983
        %v2115 = vsub.f32 %v1745, %v1986
        %v2116 = vsub.f32 %v1794, %v1986
        %v2117 = vsub.f32 %v1748, %v1989
        %v2118 = vsub.f32 %v1797, %v1989
        %v2119 = vsub.f32 %v1750, %v1992
        %v2120 = vsub.f32 %v1799, %v1992
        %v2121 = vmul.f32 %v1993, 1.442695
        %v2122 = vpow.pop %v2121
        %v2123 = vmul.f32 %v1994, 1.442695
        %v2124 = vpow.pop %v2123
        %v2125 = vmul.f32 %v1995, 1.442695
        %v2126 = vpow.pop %v2125
        %v2127 = vmul.f32 %v1996, 1.442695
        %v2128 = vpow.pop %v2127
        %v2129 = vmul.f32 %v1997, 1.442695
        %v2130 = vpow.pop %v2129
        %v2131 = vmul.f32 %v1998, 1.442695
        %v2132 = vpow.pop %v2131
        %v2133 = vmul.f32 %v1999, 1.442695
        %v2134 = vpow.pop %v2133
        %v2135 = vmul.f32 %v2000, 1.442695
        %v2136 = vpow.pop %v2135
        %v2137 = vmul.f32 %v2001, 1.442695
        %v2138 = vpow.pop %v2137
        %v2139 = vmul.f32 %v2002, 1.442695
        %v2140 = vpow.pop %v2139
        %v2141 = vmul.f32 %v2003, 1.442695
        %v2142 = vpow.pop %v2141
        %v2143 = vmul.f32 %v2004, 1.442695
        %v2144 = vpow.pop %v2143
        %v2145 = vmul.f32 %v2005, 1.442695
        %v2146 = vpow.pop %v2145
        %v2147 = vmul.f32 %v2006, 1.442695
        %v2148 = vpow.pop %v2147
        %v2149 = vmul.f32 %v2007, 1.442695
        %v2150 = vpow.pop %v2149
        %v2151 = vmul.f32 %v2008, 1.442695
        %v2152 = vpow.pop %v2151
        %v2153 = vmul.f32 %v2009, 1.442695
        %v2154 = vpow.pop %v2153
        %v2155 = vmul.f32 %v2010, 1.442695
        %v2156 = vpow.pop %v2155
        %v2157 = vmul.f32 %v2011, 1.442695
        %v2158 = vpow.pop %v2157
        %v2159 = vmul.f32 %v2012, 1.442695
        %v2160 = vpow.pop %v2159
        %v2161 = vmul.f32 %v2013, 1.442695
        %v2162 = vpow.pop %v2161
        %v2163 = vmul.f32 %v2014, 1.442695
        %v2164 = vpow.pop %v2163
        %v2165 = vmul.f32 %v2015, 1.442695
        %v2166 = vpow.pop %v2165
        %v2167 = vmul.f32 %v2016, 1.442695
        %v2168 = vpow.pop %v2167
        %v2169 = vmul.f32 %v2017, 1.442695
        %v2170 = vpow.pop %v2169
        %v2171 = vmul.f32 %v2018, 1.442695
        %v2172 = vpow.pop %v2171
        %v2173 = vmul.f32 %v2019, 1.442695
        %v2174 = vpow.pop %v2173
        %v2175 = vmul.f32 %v2020, 1.442695
        %v2176 = vpow.pop %v2175
        %v2177 = vmul.f32 %v2021, 1.442695
        %v2178 = vpow.pop %v2177
        %v2179 = vmul.f32 %v2022, 1.442695
        %v2180 = vpow.pop %v2179
        %v2181 = vmul.f32 %v2023, 1.442695
        %v2182 = vpow.pop %v2181
        %v2183 = vmul.f32 %v2024, 1.442695
        %v2184 = vpow.pop %v2183
        %v2185 = vmul.f32 %v2025, 1.442695
        %v2186 = vpow.pop %v2185
        %v2187 = vmul.f32 %v2026, 1.442695
        %v2188 = vpow.pop %v2187
        %v2189 = vmul.f32 %v2027, 1.442695
        %v2190 = vpow.pop %v2189
        %v2191 = vmul.f32 %v2028, 1.442695
        %v2192 = vpow.pop %v2191
        %v2193 = vmul.f32 %v2029, 1.442695
        %v2194 = vpow.pop %v2193
        %v2195 = vmul.f32 %v2030, 1.442695
        %v2196 = vpow.pop %v2195
        %v2197 = vmul.f32 %v2031, 1.442695
        %v2198 = vpow.pop %v2197
        %v2199 = vmul.f32 %v2032, 1.442695
        %v2200 = vpow.pop %v2199
        %v2201 = vmul.f32 %v2033, 1.442695
        %v2202 = vpow.pop %v2201
        %v2203 = vmul.f32 %v2034, 1.442695
        %v2204 = vpow.pop %v2203
        %v2205 = vmul.f32 %v2035, 1.442695
        %v2206 = vpow.pop %v2205
        %v2207 = vmul.f32 %v2036, 1.442695
        %v2208 = vpow.pop %v2207
        %v2209 = vmul.f32 %v2037, 1.442695
        %v2210 = vpow.pop %v2209
        %v2211 = vmul.f32 %v2038, 1.442695
        %v2212 = vpow.pop %v2211
        %v2213 = vmul.f32 %v2039, 1.442695
        %v2214 = vpow.pop %v2213
        %v2215 = vmul.f32 %v2040, 1.442695
        %v2216 = vpow.pop %v2215
        %v2217 = vmul.f32 %v2041, 1.442695
        %v2218 = vpow.pop %v2217
        %v2219 = vmul.f32 %v2042, 1.442695
        %v2220 = vpow.pop %v2219
        %v2221 = vmul.f32 %v2043, 1.442695
        %v2222 = vpow.pop %v2221
        %v2223 = vmul.f32 %v2044, 1.442695
        %v2224 = vpow.pop %v2223
        %v2225 = vmul.f32 %v2045, 1.442695
        %v2226 = vpow.pop %v2225
        %v2227 = vmul.f32 %v2046, 1.442695
        %v2228 = vpow.pop %v2227
        %v2229 = vmul.f32 %v2047, 1.442695
        %v2230 = vpow.pop %v2229
        %v2231 = vmul.f32 %v2048, 1.442695
        %v2232 = vpow.pop %v2231
        %v2233 = vmul.f32 %v2049, 1.442695
        %v2234 = vpow.pop %v2233
        %v2235 = vmul.f32 %v2050, 1.442695
        %v2236 = vpow.pop %v2235
        %v2237 = vmul.f32 %v2051, 1.442695
        %v2238 = vpow.pop %v2237
        %v2239 = vmul.f32 %v2052, 1.442695
        %v2240 = vpow.pop %v2239
        %v2241 = vmul.f32 %v2053, 1.442695
        %v2242 = vpow.pop %v2241
        %v2243 = vmul.f32 %v2054, 1.442695
        %v2244 = vpow.pop %v2243
        %v2245 = vmul.f32 %v2055, 1.442695
        %v2246 = vpow.pop %v2245
        %v2247 = vmul.f32 %v2056, 1.442695
        %v2248 = vpow.pop %v2247
        %v2249 = vmul.f32 %v2057, 1.442695
        %v2250 = vpow.pop %v2249
        %v2251 = vmul.f32 %v2058, 1.442695
        %v2252 = vpow.pop %v2251
        %v2253 = vmul.f32 %v2059, 1.442695
        %v2254 = vpow.pop %v2253
        %v2255 = vmul.f32 %v2060, 1.442695
        %v2256 = vpow.pop %v2255
        %v2257 = vmul.f32 %v2061, 1.442695
        %v2258 = vpow.pop %v2257
        %v2259 = vmul.f32 %v2062, 1.442695
        %v2260 = vpow.pop %v2259
        %v2261 = vmul.f32 %v2063, 1.442695
        %v2262 = vpow.pop %v2261
        %v2263 = vmul.f32 %v2064, 1.442695
        %v2264 = vpow.pop %v2263
        %v2265 = vmul.f32 %v2065, 1.442695
        %v2266 = vpow.pop %v2265
        %v2267 = vmul.f32 %v2066, 1.442695
        %v2268 = vpow.pop %v2267
        %v2269 = vmul.f32 %v2067, 1.442695
        %v2270 = vpow.pop %v2269
        %v2271 = vmul.f32 %v2068, 1.442695
        %v2272 = vpow.pop %v2271
        %v2273 = vmul.f32 %v2069, 1.442695
        %v2274 = vpow.pop %v2273
        %v2275 = vmul.f32 %v2070, 1.442695
        %v2276 = vpow.pop %v2275
        %v2277 = vmul.f32 %v2071, 1.442695
        %v2278 = vpow.pop %v2277
        %v2279 = vmul.f32 %v2072, 1.442695
        %v2280 = vpow.pop %v2279
        %v2281 = vmul.f32 %v2073, 1.442695
        %v2282 = vpow.pop %v2281
        %v2283 = vmul.f32 %v2074, 1.442695
        %v2284 = vpow.pop %v2283
        %v2285 = vmul.f32 %v2075, 1.442695
        %v2286 = vpow.pop %v2285
        %v2287 = vmul.f32 %v2076, 1.442695
        %v2288 = vpow.pop %v2287
        %v2289 = vmul.f32 %v2077, 1.442695
        %v2290 = vpow.pop %v2289
        %v2291 = vmul.f32 %v2078, 1.442695
        %v2292 = vpow.pop %v2291
        %v2293 = vmul.f32 %v2079, 1.442695
        %v2294 = vpow.pop %v2293
        %v2295 = vmul.f32 %v2080, 1.442695
        %v2296 = vpow.pop %v2295
        %v2297 = vmul.f32 %v2081, 1.442695
        %v2298 = vpow.pop %v2297
        %v2299 = vmul.f32 %v2082, 1.442695
        %v2300 = vpow.pop %v2299
        %v2301 = vmul.f32 %v2083, 1.442695
        %v2302 = vpow.pop %v2301
        %v2303 = vmul.f32 %v2084, 1.442695
        %v2304 = vpow.pop %v2303
        %v2305 = vmul.f32 %v2085, 1.442695
        %v2306 = vpow.pop %v2305
        %v2307 = vmul.f32 %v2086, 1.442695
        %v2308 = vpow.pop %v2307
        %v2309 = vmul.f32 %v2087, 1.442695
        %v2310 = vpow.pop %v2309
        %v2311 = vmul.f32 %v2088, 1.442695
        %v2312 = vpow.pop %v2311
        %v2313 = vmul.f32 %v2089, 1.442695
        %v2314 = vpow.pop %v2313
        %v2315 = vmul.f32 %v2090, 1.442695
        %v2316 = vpow.pop %v2315
        %v2317 = vmul.f32 %v2091, 1.442695
        %v2318 = vpow.pop %v2317
        %v2319 = vmul.f32 %v2092, 1.442695
        %v2320 = vpow.pop %v2319
        %v2321 = vmul.f32 %v2093, 1.442695
        %v2322 = vpow.pop %v2321
        %v2323 = vmul.f32 %v2094, 1.442695
        %v2324 = vpow.pop %v2323
        %v2325 = vmul.f32 %v2095, 1.442695
        %v2326 = vpow.pop %v2325
        %v2327 = vmul.f32 %v2096, 1.442695
        %v2328 = vpow.pop %v2327
        %v2329 = vmul.f32 %v2097, 1.442695
        %v2330 = vpow.pop %v2329
        %v2331 = vmul.f32 %v2098, 1.442695
        %v2332 = vpow.pop %v2331
        %v2333 = vmul.f32 %v2099, 1.442695
        %v2334 = vpow.pop %v2333
        %v2335 = vmul.f32 %v2100, 1.442695
        %v2336 = vpow.pop %v2335
        %v2337 = vmul.f32 %v2101, 1.442695
        %v2338 = vpow.pop %v2337
        %v2339 = vmul.f32 %v2102, 1.442695
        %v2340 = vpow.pop %v2339
        %v2341 = vmul.f32 %v2103, 1.442695
        %v2342 = vpow.pop %v2341
        %v2343 = vmul.f32 %v2104, 1.442695
        %v2344 = vpow.pop %v2343
        %v2345 = vmul.f32 %v2105, 1.442695
        %v2346 = vpow.pop %v2345
        %v2347 = vmul.f32 %v2106, 1.442695
        %v2348 = vpow.pop %v2347
        %v2349 = vmul.f32 %v2107, 1.442695
        %v2350 = vpow.pop %v2349
        %v2351 = vmul.f32 %v2108, 1.442695
        %v2352 = vpow.pop %v2351
        %v2353 = vmul.f32 %v2109, 1.442695
        %v2354 = vpow.pop %v2353
        %v2355 = vmul.f32 %v2110, 1.442695
        %v2356 = vpow.pop %v2355
        %v2357 = vmul.f32 %v2111, 1.442695
        %v2358 = vpow.pop %v2357
        %v2359 = vmul.f32 %v2112, 1.442695
        %v2360 = vpow.pop %v2359
        %v2361 = vmul.f32 %v2113, 1.442695
        %v2362 = vpow.pop %v2361
        %v2363 = vmul.f32 %v2114, 1.442695
        %v2364 = vpow.pop %v2363
        %v2365 = vmul.f32 %v2115, 1.442695
        %v2366 = vpow.pop %v2365
        %v2367 = vmul.f32 %v2116, 1.442695
        %v2368 = vpow.pop %v2367
        %v2369 = vmul.f32 %v2117, 1.442695
        %v2370 = vpow.pop %v2369
        %v2371 = vmul.f32 %v2118, 1.442695
        %v2372 = vpow.pop %v2371
        %v2373 = vmul.f32 %v2119, 1.442695
        %v2374 = vpow.pop %v2373
        %v2375 = vmul.f32 %v2120, 1.442695
        %v2376 = vpow.pop %v2375
        %v2377 = vadd.f32 %v2122, %v2124
        %2378 = vadd.xlane.f32.xlu0 %v2377
        %v2379 = vpop.xlane.xlu0 %2378
        %v2380 = vadd.f32 %v2126, %v2128
        %2381 = vadd.xlane.f32.xlu0 %v2380
        %v2382 = vpop.xlane.xlu0 %2381
        %v2383 = vadd.f32 %v2130, %v2132
        %2384 = vadd.xlane.f32.xlu0 %v2383
        %v2385 = vpop.xlane.xlu0 %2384
        %v2386 = vadd.f32 %v2134, %v2136
        %2387 = vadd.xlane.f32.xlu0 %v2386
        %v2388 = vpop.xlane.xlu0 %2387
        %v2389 = vadd.f32 %v2138, %v2140
        %2390 = vadd.xlane.f32.xlu0 %v2389
        %v2391 = vpop.xlane.xlu0 %2390
        %v2392 = vadd.f32 %v2142, %v2144
        %2393 = vadd.xlane.f32.xlu0 %v2392
        %v2394 = vpop.xlane.xlu0 %2393
        %v2395 = vadd.f32 %v2146, %v2148
        %2396 = vadd.xlane.f32.xlu0 %v2395
        %v2397 = vpop.xlane.xlu0 %2396
        %v2398 = vadd.f32 %v2150, %v2152
        %2399 = vadd.xlane.f32.xlu0 %v2398
        %v2400 = vpop.xlane.xlu0 %2399
        %v2401 = vadd.f32 %v2154, %v2156
        %2402 = vadd.xlane.f32.xlu0 %v2401
        %v2403 = vpop.xlane.xlu0 %2402
        %v2404 = vadd.f32 %v2158, %v2160
        %2405 = vadd.xlane.f32.xlu0 %v2404
        %v2406 = vpop.xlane.xlu0 %2405
        %v2407 = vadd.f32 %v2162, %v2164
        %2408 = vadd.xlane.f32.xlu0 %v2407
        %v2409 = vpop.xlane.xlu0 %2408
        %v2410 = vadd.f32 %v2166, %v2168
        %2411 = vadd.xlane.f32.xlu0 %v2410
        %v2412 = vpop.xlane.xlu0 %2411
        %v2413 = vadd.f32 %v2170, %v2172
        %2414 = vadd.xlane.f32.xlu0 %v2413
        %v2415 = vpop.xlane.xlu0 %2414
        %v2416 = vadd.f32 %v2174, %v2176
        %2417 = vadd.xlane.f32.xlu0 %v2416
        %v2418 = vpop.xlane.xlu0 %2417
        %v2419 = vadd.f32 %v2178, %v2180
        %2420 = vadd.xlane.f32.xlu0 %v2419
        %v2421 = vpop.xlane.xlu0 %2420
        %v2422 = vadd.f32 %v2182, %v2184
        %2423 = vadd.xlane.f32.xlu0 %v2422
        %v2424 = vpop.xlane.xlu0 %2423
        %v2425 = vadd.f32 %v2186, %v2188
        %2426 = vadd.xlane.f32.xlu0 %v2425
        %v2427 = vpop.xlane.xlu0 %2426
        %v2428 = vadd.f32 %v2190, %v2192
        %2429 = vadd.xlane.f32.xlu0 %v2428
        %v2430 = vpop.xlane.xlu0 %2429
        %v2431 = vadd.f32 %v2194, %v2196
        %2432 = vadd.xlane.f32.xlu0 %v2431
        %v2433 = vpop.xlane.xlu0 %2432
        %v2434 = vadd.f32 %v2198, %v2200
        %2435 = vadd.xlane.f32.xlu0 %v2434
        %v2436 = vpop.xlane.xlu0 %2435
        %v2437 = vadd.f32 %v2202, %v2204
        %2438 = vadd.xlane.f32.xlu0 %v2437
        %v2439 = vpop.xlane.xlu0 %2438
        %v2440 = vadd.f32 %v2206, %v2208
        %2441 = vadd.xlane.f32.xlu0 %v2440
        %v2442 = vpop.xlane.xlu0 %2441
        %v2443 = vadd.f32 %v2210, %v2212
        %2444 = vadd.xlane.f32.xlu0 %v2443
        %v2445 = vpop.xlane.xlu0 %2444
        %v2446 = vadd.f32 %v2214, %v2216
        %2447 = vadd.xlane.f32.xlu0 %v2446
        %v2448 = vpop.xlane.xlu0 %2447
        %v2449 = vadd.f32 %v2218, %v2220
        %2450 = vadd.xlane.f32.xlu0 %v2449
        %v2451 = vpop.xlane.xlu0 %2450
        %v2452 = vadd.f32 %v2222, %v2224
        %2453 = vadd.xlane.f32.xlu0 %v2452
        %v2454 = vpop.xlane.xlu0 %2453
        %v2455 = vadd.f32 %v2226, %v2228
        %2456 = vadd.xlane.f32.xlu0 %v2455
        %v2457 = vpop.xlane.xlu0 %2456
        %v2458 = vadd.f32 %v2230, %v2232
        %2459 = vadd.xlane.f32.xlu0 %v2458
        %v2460 = vpop.xlane.xlu0 %2459
        %v2461 = vadd.f32 %v2234, %v2236
        %2462 = vadd.xlane.f32.xlu0 %v2461
        %v2463 = vpop.xlane.xlu0 %2462
        %v2464 = vadd.f32 %v2238, %v2240
        %2465 = vadd.xlane.f32.xlu0 %v2464
        %v2466 = vpop.xlane.xlu0 %2465
        %v2467 = vadd.f32 %v2242, %v2244
        %2468 = vadd.xlane.f32.xlu0 %v2467
        %v2469 = vpop.xlane.xlu0 %2468
        %v2470 = vadd.f32 %v2246, %v2248
        %2471 = vadd.xlane.f32.xlu0 %v2470
        %v2472 = vpop.xlane.xlu0 %2471
        %v2473 = vadd.f32 %v2250, %v2252
        %2474 = vadd.xlane.f32.xlu0 %v2473
        %v2475 = vpop.xlane.xlu0 %2474
        %v2476 = vadd.f32 %v2254, %v2256
        %2477 = vadd.xlane.f32.xlu0 %v2476
        %v2478 = vpop.xlane.xlu0 %2477
        %v2479 = vadd.f32 %v2258, %v2260
        %2480 = vadd.xlane.f32.xlu0 %v2479
        %v2481 = vpop.xlane.xlu0 %2480
        %v2482 = vadd.f32 %v2262, %v2264
        %2483 = vadd.xlane.f32.xlu0 %v2482
        %v2484 = vpop.xlane.xlu0 %2483
        %v2485 = vadd.f32 %v2266, %v2268
        %2486 = vadd.xlane.f32.xlu0 %v2485
        %v2487 = vpop.xlane.xlu0 %2486
        %v2488 = vadd.f32 %v2270, %v2272
        %2489 = vadd.xlane.f32.xlu0 %v2488
        %v2490 = vpop.xlane.xlu0 %2489
        %v2491 = vadd.f32 %v2274, %v2276
        %2492 = vadd.xlane.f32.xlu0 %v2491
        %v2493 = vpop.xlane.xlu0 %2492
        %v2494 = vadd.f32 %v2278, %v2280
        %2495 = vadd.xlane.f32.xlu0 %v2494
        %v2496 = vpop.xlane.xlu0 %2495
        %v2497 = vadd.f32 %v2282, %v2284
        %2498 = vadd.xlane.f32.xlu0 %v2497
        %v2499 = vpop.xlane.xlu0 %2498
        %v2500 = vadd.f32 %v2286, %v2288
        %2501 = vadd.xlane.f32.xlu0 %v2500
        %v2502 = vpop.xlane.xlu0 %2501
        %v2503 = vadd.f32 %v2290, %v2292
        %2504 = vadd.xlane.f32.xlu0 %v2503
        %v2505 = vpop.xlane.xlu0 %2504
        %v2506 = vadd.f32 %v2294, %v2296
        %2507 = vadd.xlane.f32.xlu0 %v2506
        %v2508 = vpop.xlane.xlu0 %2507
        %v2509 = vadd.f32 %v2298, %v2300
        %2510 = vadd.xlane.f32.xlu0 %v2509
        %v2511 = vpop.xlane.xlu0 %2510
        %v2512 = vadd.f32 %v2302, %v2304
        %2513 = vadd.xlane.f32.xlu0 %v2512
        %v2514 = vpop.xlane.xlu0 %2513
        %v2515 = vadd.f32 %v2306, %v2308
        %2516 = vadd.xlane.f32.xlu0 %v2515
        %v2517 = vpop.xlane.xlu0 %2516
        %v2518 = vadd.f32 %v2310, %v2312
        %2519 = vadd.xlane.f32.xlu0 %v2518
        %v2520 = vpop.xlane.xlu0 %2519
        %v2521 = vadd.f32 %v2314, %v2316
        %2522 = vadd.xlane.f32.xlu0 %v2521
        %v2523 = vpop.xlane.xlu0 %2522
        %v2524 = vadd.f32 %v2318, %v2320
        %2525 = vadd.xlane.f32.xlu0 %v2524
        %v2526 = vpop.xlane.xlu0 %2525
        %v2527 = vadd.f32 %v2322, %v2324
        %2528 = vadd.xlane.f32.xlu0 %v2527
        %v2529 = vpop.xlane.xlu0 %2528
        %v2530 = vadd.f32 %v2326, %v2328
        %2531 = vadd.xlane.f32.xlu0 %v2530
        %v2532 = vpop.xlane.xlu0 %2531
        %v2533 = vadd.f32 %v2330, %v2332
        %2534 = vadd.xlane.f32.xlu0 %v2533
        %v2535 = vpop.xlane.xlu0 %2534
        %v2536 = vadd.f32 %v2334, %v2336
        %2537 = vadd.xlane.f32.xlu0 %v2536
        %v2538 = vpop.xlane.xlu0 %2537
        %v2539 = vadd.f32 %v2338, %v2340
        %2540 = vadd.xlane.f32.xlu0 %v2539
        %v2541 = vpop.xlane.xlu0 %2540
        %v2542 = vadd.f32 %v2342, %v2344
        %2543 = vadd.xlane.f32.xlu0 %v2542
        %v2544 = vpop.xlane.xlu0 %2543
        %v2545 = vadd.f32 %v2346, %v2348
        %2546 = vadd.xlane.f32.xlu0 %v2545
        %v2547 = vpop.xlane.xlu0 %2546
        %v2548 = vadd.f32 %v2350, %v2352
        %2549 = vadd.xlane.f32.xlu0 %v2548
        %v2550 = vpop.xlane.xlu0 %2549
        %v2551 = vadd.f32 %v2354, %v2356
        %2552 = vadd.xlane.f32.xlu0 %v2551
        %v2553 = vpop.xlane.xlu0 %2552
        %v2554 = vadd.f32 %v2358, %v2360
        %2555 = vadd.xlane.f32.xlu0 %v2554
        %v2556 = vpop.xlane.xlu0 %2555
        %v2557 = vadd.f32 %v2362, %v2364
        %2558 = vadd.xlane.f32.xlu0 %v2557
        %v2559 = vpop.xlane.xlu0 %2558
        %v2560 = vadd.f32 %v2366, %v2368
        %2561 = vadd.xlane.f32.xlu0 %v2560
        %v2562 = vpop.xlane.xlu0 %2561
        %v2563 = vadd.f32 %v2370, %v2372
        %2564 = vadd.xlane.f32.xlu0 %v2563
        %v2565 = vpop.xlane.xlu0 %2564
        %v2566 = vadd.f32 %v2374, %v2376
        %2567 = vadd.xlane.f32.xlu0 %v2566
        %v2568 = vpop.xlane.xlu0 %2567
        %v2569 = vrcp.pop %v2379
        %v2570 = vrcp.pop %v2382
        %v2571 = vrcp.pop %v2385
        %v2572 = vrcp.pop %v2388
        %v2573 = vrcp.pop %v2391
        %v2574 = vrcp.pop %v2394
        %v2575 = vrcp.pop %v2397
        %v2576 = vrcp.pop %v2400
        %v2577 = vrcp.pop %v2403
        %v2578 = vrcp.pop %v2406
        %v2579 = vrcp.pop %v2409
        %v2580 = vrcp.pop %v2412
        %v2581 = vrcp.pop %v2415
        %v2582 = vrcp.pop %v2418
        %v2583 = vrcp.pop %v2421
        %v2584 = vrcp.pop %v2424
        %v2585 = vrcp.pop %v2427
        %v2586 = vrcp.pop %v2430
        %v2587 = vrcp.pop %v2433
        %v2588 = vrcp.pop %v2436
        %v2589 = vrcp.pop %v2439
        %v2590 = vrcp.pop %v2442
        %v2591 = vrcp.pop %v2445
        %v2592 = vrcp.pop %v2448
        %v2593 = vrcp.pop %v2451
        %v2594 = vrcp.pop %v2454
        %v2595 = vrcp.pop %v2457
        %v2596 = vrcp.pop %v2460
        %v2597 = vrcp.pop %v2463
        %v2598 = vrcp.pop %v2466
        %v2599 = vrcp.pop %v2469
        %v2600 = vrcp.pop %v2472
        %v2601 = vrcp.pop %v2475
        %v2602 = vrcp.pop %v2478
        %v2603 = vrcp.pop %v2481
        %v2604 = vrcp.pop %v2484
        %v2605 = vrcp.pop %v2487
        %v2606 = vrcp.pop %v2490
        %v2607 = vrcp.pop %v2493
        %v2608 = vrcp.pop %v2496
        %v2609 = vrcp.pop %v2499
        %v2610 = vrcp.pop %v2502
        %v2611 = vrcp.pop %v2505
        %v2612 = vrcp.pop %v2508
        %v2613 = vrcp.pop %v2511
        %v2614 = vrcp.pop %v2514
        %v2615 = vrcp.pop %v2517
        %v2616 = vrcp.pop %v2520
        %v2617 = vrcp.pop %v2523
        %v2618 = vrcp.pop %v2526
        %v2619 = vrcp.pop %v2529
        %v2620 = vrcp.pop %v2532
        %v2621 = vrcp.pop %v2535
        %v2622 = vrcp.pop %v2538
        %v2623 = vrcp.pop %v2541
        %v2624 = vrcp.pop %v2544
        %v2625 = vrcp.pop %v2547
        %v2626 = vrcp.pop %v2550
        %v2627 = vrcp.pop %v2553
        %v2628 = vrcp.pop %v2556
        %v2629 = vrcp.pop %v2559
        %v2630 = vrcp.pop %v2562
        %v2631 = vrcp.pop %v2565
        %v2632 = vrcp.pop %v2568
        %v2633 = vmul.f32 %v2122, %v2569
        %v2634 = vmul.f32 %v2124, %v2569
        %v2635 = vmul.f32 %v2126, %v2570
        %v2636 = vmul.f32 %v2128, %v2570
        %v2637 = vmul.f32 %v2130, %v2571
        %v2638 = vmul.f32 %v2132, %v2571
        %v2639 = vmul.f32 %v2134, %v2572
        %v2640 = vmul.f32 %v2136, %v2572
        %v2641 = vmul.f32 %v2138, %v2573
        %v2642 = vmul.f32 %v2140, %v2573
        %v2643 = vmul.f32 %v2142, %v2574
        %v2644 = vmul.f32 %v2144, %v2574
        %v2645 = vmul.f32 %v2146, %v2575
        %v2646 = vmul.f32 %v2148, %v2575
        %v2647 = vmul.f32 %v2150, %v2576
        %v2648 = vmul.f32 %v2152, %v2576
        %v2649 = vmul.f32 %v2154, %v2577
        %v2650 = vmul.f32 %v2156, %v2577
        %v2651 = vmul.f32 %v2158, %v2578
        %v2652 = vmul.f32 %v2160, %v2578
        %v2653 = vmul.f32 %v2162, %v2579
        %v2654 = vmul.f32 %v2164, %v2579
        %v2655 = vmul.f32 %v2166, %v2580
        %v2656 = vmul.f32 %v2168, %v2580
        %v2657 = vmul.f32 %v2170, %v2581
        %v2658 = vmul.f32 %v2172, %v2581
        %v2659 = vmul.f32 %v2174, %v2582
        %v2660 = vmul.f32 %v2176, %v2582
        %v2661 = vmul.f32 %v2178, %v2583
        %v2662 = vmul.f32 %v2180, %v2583
        %v2663 = vmul.f32 %v2182, %v2584
        %v2664 = vmul.f32 %v2184, %v2584
        %v2665 = vmul.f32 %v2186, %v2585
        %v2666 = vmul.f32 %v2188, %v2585
        %v2667 = vmul.f32 %v2190, %v2586
        %v2668 = vmul.f32 %v2192, %v2586
        %v2669 = vmul.f32 %v2194, %v2587
        %v2670 = vmul.f32 %v2196, %v2587
        %v2671 = vmul.f32 %v2198, %v2588
        %v2672 = vmul.f32 %v2200, %v2588
        %v2673 = vmul.f32 %v2202, %v2589
        %v2674 = vmul.f32 %v2204, %v2589
        %v2675 = vmul.f32 %v2206, %v2590
        %v2676 = vmul.f32 %v2208, %v2590
        %v2677 = vmul.f32 %v2210, %v2591
        %v2678 = vmul.f32 %v2212, %v2591
        %v2679 = vmul.f32 %v2214, %v2592
        %v2680 = vmul.f32 %v2216, %v2592
        %v2681 = vmul.f32 %v2218, %v2593
        %v2682 = vmul.f32 %v2220, %v2593
        %v2683 = vmul.f32 %v2222, %v2594
        %v2684 = vmul.f32 %v2224, %v2594
        %v2685 = vmul.f32 %v2226, %v2595
        %v2686 = vmul.f32 %v2228, %v2595
        %v2687 = vmul.f32 %v2230, %v2596
        %v2688 = vmul.f32 %v2232, %v2596
        %v2689 = vmul.f32 %v2234, %v2597
        %v2690 = vmul.f32 %v2236, %v2597
        %v2691 = vmul.f32 %v2238, %v2598
        %v2692 = vmul.f32 %v2240, %v2598
        %v2693 = vmul.f32 %v2242, %v2599
        %v2694 = vmul.f32 %v2244, %v2599
        %v2695 = vmul.f32 %v2246, %v2600
        %v2696 = vmul.f32 %v2248, %v2600
        %v2697 = vmul.f32 %v2250, %v2601
        %v2698 = vmul.f32 %v2252, %v2601
        %v2699 = vmul.f32 %v2254, %v2602
        %v2700 = vmul.f32 %v2256, %v2602
        %v2701 = vmul.f32 %v2258, %v2603
        %v2702 = vmul.f32 %v2260, %v2603
        %v2703 = vmul.f32 %v2262, %v2604
        %v2704 = vmul.f32 %v2264, %v2604
        %v2705 = vmul.f32 %v2266, %v2605
        %v2706 = vmul.f32 %v2268, %v2605
        %v2707 = vmul.f32 %v2270, %v2606
        %v2708 = vmul.f32 %v2272, %v2606
        %v2709 = vmul.f32 %v2274, %v2607
        %v2710 = vmul.f32 %v2276, %v2607
        %v2711 = vmul.f32 %v2278, %v2608
        %v2712 = vmul.f32 %v2280, %v2608
        %v2713 = vmul.f32 %v2282, %v2609
        %v2714 = vmul.f32 %v2284, %v2609
        %v2715 = vmul.f32 %v2286, %v2610
        %v2716 = vmul.f32 %v2288, %v2610
        %v2717 = vmul.f32 %v2290, %v2611
        %v2718 = vmul.f32 %v2292, %v2611
        %v2719 = vmul.f32 %v2294, %v2612
        %v2720 = vmul.f32 %v2296, %v2612
        %v2721 = vmul.f32 %v2298, %v2613
        %v2722 = vmul.f32 %v2300, %v2613
        %v2723 = vmul.f32 %v2302, %v2614
        %v2724 = vmul.f32 %v2304, %v2614
        %v2725 = vmul.f32 %v2306, %v2615
        %v2726 = vmul.f32 %v2308, %v2615
        %v2727 = vmul.f32 %v2310, %v2616
        %v2728 = vmul.f32 %v2312, %v2616
        %v2729 = vmul.f32 %v2314, %v2617
        %v2730 = vmul.f32 %v2316, %v2617
        %v2731 = vmul.f32 %v2318, %v2618
        %v2732 = vmul.f32 %v2320, %v2618
        %v2733 = vmul.f32 %v2322, %v2619
        %v2734 = vmul.f32 %v2324, %v2619
        %v2735 = vmul.f32 %v2326, %v2620
        %v2736 = vmul.f32 %v2328, %v2620
        %v2737 = vmul.f32 %v2330, %v2621
        %v2738 = vmul.f32 %v2332, %v2621
        %v2739 = vmul.f32 %v2334, %v2622
        %v2740 = vmul.f32 %v2336, %v2622
        %v2741 = vmul.f32 %v2338, %v2623
        %v2742 = vmul.f32 %v2340, %v2623
        %v2743 = vmul.f32 %v2342, %v2624
        %v2744 = vmul.f32 %v2344, %v2624
        %v2745 = vmul.f32 %v2346, %v2625
        %v2746 = vmul.f32 %v2348, %v2625
        %v2747 = vmul.f32 %v2350, %v2626
        %v2748 = vmul.f32 %v2352, %v2626
        %v2749 = vmul.f32 %v2354, %v2627
        %v2750 = vmul.f32 %v2356, %v2627
        %v2751 = vmul.f32 %v2358, %v2628
        %v2752 = vmul.f32 %v2360, %v2628
        %v2753 = vmul.f32 %v2362, %v2629
        %v2754 = vmul.f32 %v2364, %v2629
        %v2755 = vmul.f32 %v2366, %v2630
        %v2756 = vmul.f32 %v2368, %v2630
        %v2757 = vmul.f32 %v2370, %v2631
        %v2758 = vmul.f32 %v2372, %v2631
        %v2759 = vmul.f32 %v2374, %v2632
        %v2760 = vmul.f32 %v2376, %v2632
        %v2761 = vpack.c.bf16 %v2634, %v2633
        %v2762 = vpack.c.bf16 %v2636, %v2635
        %v2763 = vpack.c.bf16 %v2638, %v2637
        %v2764 = vpack.c.bf16 %v2640, %v2639
        %v2765 = vpack.c.bf16 %v2642, %v2641
        %v2766 = vpack.c.bf16 %v2644, %v2643
        %v2767 = vpack.c.bf16 %v2646, %v2645
        %v2768 = vpack.c.bf16 %v2648, %v2647
        %v2769 = vpack.c.bf16 %v2650, %v2649
        %v2770 = vpack.c.bf16 %v2652, %v2651
        %v2771 = vpack.c.bf16 %v2654, %v2653
        %v2772 = vpack.c.bf16 %v2656, %v2655
        %v2773 = vpack.c.bf16 %v2658, %v2657
        %v2774 = vpack.c.bf16 %v2660, %v2659
        %v2775 = vpack.c.bf16 %v2662, %v2661
        %v2776 = vpack.c.bf16 %v2664, %v2663
        %v2777 = vpack.c.bf16 %v2666, %v2665
        %v2778 = vpack.c.bf16 %v2668, %v2667
        %v2779 = vpack.c.bf16 %v2670, %v2669
        %v2780 = vpack.c.bf16 %v2672, %v2671
        %v2781 = vpack.c.bf16 %v2674, %v2673
        %v2782 = vpack.c.bf16 %v2676, %v2675
        %v2783 = vpack.c.bf16 %v2678, %v2677
        %v2784 = vpack.c.bf16 %v2680, %v2679
        %v2785 = vpack.c.bf16 %v2682, %v2681
        %v2786 = vpack.c.bf16 %v2684, %v2683
        %v2787 = vpack.c.bf16 %v2686, %v2685
        %v2788 = vpack.c.bf16 %v2688, %v2687
        %v2789 = vpack.c.bf16 %v2690, %v2689
        %v2790 = vpack.c.bf16 %v2692, %v2691
        %v2791 = vpack.c.bf16 %v2694, %v2693
        %v2792 = vpack.c.bf16 %v2696, %v2695
        %v2793 = vpack.c.bf16 %v2698, %v2697
        %v2794 = vpack.c.bf16 %v2700, %v2699
        %v2795 = vpack.c.bf16 %v2702, %v2701
        %v2796 = vpack.c.bf16 %v2704, %v2703
        %v2797 = vpack.c.bf16 %v2706, %v2705
        %v2798 = vpack.c.bf16 %v2708, %v2707
        %v2799 = vpack.c.bf16 %v2710, %v2709
        %v2800 = vpack.c.bf16 %v2712, %v2711
        %v2801 = vpack.c.bf16 %v2714, %v2713
        %v2802 = vpack.c.bf16 %v2716, %v2715
        %v2803 = vpack.c.bf16 %v2718, %v2717
        %v2804 = vpack.c.bf16 %v2720, %v2719
        %v2805 = vpack.c.bf16 %v2722, %v2721
        %v2806 = vpack.c.bf16 %v2724, %v2723
        %v2807 = vpack.c.bf16 %v2726, %v2725
        %v2808 = vpack.c.bf16 %v2728, %v2727
        %v2809 = vpack.c.bf16 %v2730, %v2729
        %v2810 = vpack.c.bf16 %v2732, %v2731
        %v2811 = vpack.c.bf16 %v2734, %v2733
        %v2812 = vpack.c.bf16 %v2736, %v2735
        %v2813 = vpack.c.bf16 %v2738, %v2737
        %v2814 = vpack.c.bf16 %v2740, %v2739
        %v2815 = vpack.c.bf16 %v2742, %v2741
        %v2816 = vpack.c.bf16 %v2744, %v2743
        %v2817 = vpack.c.bf16 %v2746, %v2745
        %v2818 = vpack.c.bf16 %v2748, %v2747
        %v2819 = vpack.c.bf16 %v2750, %v2749
        %v2820 = vpack.c.bf16 %v2752, %v2751
        %v2821 = vpack.c.bf16 %v2754, %v2753
        %v2822 = vpack.c.bf16 %v2756, %v2755
        %v2823 = vpack.c.bf16 %v2758, %v2757
        %v2824 = vpack.c.bf16 %v2760, %v2759
        %v2829 = vunpack.c.l.b16 %v1056
        %v2830 = vunpack.c.h.b16 %v1056
        %v2831 = vunpack.c.l.b16 %v1057
        %v2832 = vunpack.c.h.b16 %v1057
        %v2833 = vunpack.c.l.b16 %v1058
        %v2834 = vunpack.c.h.b16 %v1058
        %v2835 = vunpack.c.l.b16 %v1059
        %v2836 = vunpack.c.h.b16 %v1059
        %v2837 = vpack.c.b16 %v2831, %v2829
        %v2838 = vpack.c.b16 %v2832, %v2830
        %v2839 = vpack.c.b16 %v2835, %v2833
        %v2840 = vpack.c.b16 %v2836, %v2834
        %v2861 = vunpack.c.l.b16 %v2761
        %v2862 = vunpack.c.h.b16 %v2761
        %v2863 = vunpack.c.l.b16 %v2762
        %v2864 = vunpack.c.h.b16 %v2762
        %v2865 = vunpack.c.l.b16 %v2763
        %v2866 = vunpack.c.h.b16 %v2763
        %v2867 = vunpack.c.l.b16 %v2764
        %v2868 = vunpack.c.h.b16 %v2764
        %v2869 = vunpack.c.l.b16 %v2765
        %v2870 = vunpack.c.h.b16 %v2765
        %v2871 = vunpack.c.l.b16 %v2766
        %v2872 = vunpack.c.h.b16 %v2766
        %v2873 = vunpack.c.l.b16 %v2767
        %v2874 = vunpack.c.h.b16 %v2767
        %v2875 = vunpack.c.l.b16 %v2768
        %v2876 = vunpack.c.h.b16 %v2768
        %v2877 = vunpack.c.l.b16 %v2769
        %v2878 = vunpack.c.h.b16 %v2769
        %v2879 = vunpack.c.l.b16 %v2770
        %v2880 = vunpack.c.h.b16 %v2770
        %v2881 = vunpack.c.l.b16 %v2771
        %v2882 = vunpack.c.h.b16 %v2771
        %v2883 = vunpack.c.l.b16 %v2772
        %v2884 = vunpack.c.h.b16 %v2772
        %v2885 = vunpack.c.l.b16 %v2773
        %v2886 = vunpack.c.h.b16 %v2773
        %v2887 = vunpack.c.l.b16 %v2774
        %v2888 = vunpack.c.h.b16 %v2774
        %v2889 = vunpack.c.l.b16 %v2775
        %v2890 = vunpack.c.h.b16 %v2775
        %v2891 = vunpack.c.l.b16 %v2776
        %v2892 = vunpack.c.h.b16 %v2776
        %v2893 = vpack.c.b16 %v2863, %v2861
        %v2894 = vpack.c.b16 %v2864, %v2862
        %v2895 = vpack.c.b16 %v2867, %v2865
        %v2896 = vpack.c.b16 %v2868, %v2866
        %v2897 = vpack.c.b16 %v2871, %v2869
        %v2898 = vpack.c.b16 %v2872, %v2870
        %v2899 = vpack.c.b16 %v2875, %v2873
        %v2900 = vpack.c.b16 %v2876, %v2874
        %v2901 = vpack.c.b16 %v2879, %v2877
        %v2902 = vpack.c.b16 %v2880, %v2878
        %v2903 = vpack.c.b16 %v2883, %v2881
        %v2904 = vpack.c.b16 %v2884, %v2882
        %v2905 = vpack.c.b16 %v2887, %v2885
        %v2906 = vpack.c.b16 %v2888, %v2886
        %v2907 = vpack.c.b16 %v2891, %v2889
        %v2908 = vpack.c.b16 %v2892, %v2890
        %2925 = vmatpush.bf16.xpose.msra.mxu0 %v2907
        %2926 = vmatpush.bf16.xpose.msra.mxu0 %v2905
        %2927 = vmatpush.bf16.xpose.msra.mxu0 %v2903
        %2928 = vmatpush.bf16.xpose.msra.mxu0 %v2901
        %2929 = vmatpush.bf16.xpose.msra.mxu0 %v2899
        %2930 = vmatpush.bf16.xpose.msra.mxu0 %v2897
        %2931 = vmatpush.bf16.xpose.msra.mxu0 %v2895
        %2932 = vmatpush.bf16.xpose.msra.mxu0 %v2893
        %2933 = vmatmul.bf16.gmra.mxu0 %v2837
        %v2934 = vpop.f32.mrf.mxu0
        %v2935 = vadd.f32 0.0, %v2934
        %v2936 = vpop.f32.mrf.mxu0
        %v2937 = vadd.f32 0.0, %v2936
        %2938 = vmatmul.bf16.gmra.mxu0 %v2839
        %v2939 = vpop.f32.mrf.mxu0
        %v2940 = vadd.f32 0.0, %v2939
        %v2941 = vpop.f32.mrf.mxu0
        %v2942 = vadd.f32 0.0, %v2941
        %2943 = vdwg.mxu0
        %2944 = vmatpush.bf16.xpose.msra.mxu0 %v2908
        %2945 = vmatpush.bf16.xpose.msra.mxu0 %v2906
        %2946 = vmatpush.bf16.xpose.msra.mxu0 %v2904
        %2947 = vmatpush.bf16.xpose.msra.mxu0 %v2902
        %2948 = vmatpush.bf16.xpose.msra.mxu0 %v2900
        %2949 = vmatpush.bf16.xpose.msra.mxu0 %v2898
        %2950 = vmatpush.bf16.xpose.msra.mxu0 %v2896
        %2951 = vmatpush.bf16.xpose.msra.mxu0 %v2894
        %2952 = vmatmul.bf16.gmra.mxu0 %v2838
        %v2953 = vpop.f32.mrf.mxu0
        %v2954 = vadd.f32 %v2935, %v2953
        %v2955 = vpop.f32.mrf.mxu0
        %v2956 = vadd.f32 %v2937, %v2955
        %2957 = vmatmul.bf16.gmra.mxu0 %v2840
        %v2958 = vpop.f32.mrf.mxu0
        %v2959 = vadd.f32 %v2940, %v2958
        %v2960 = vpop.f32.mrf.mxu0
        %v2961 = vadd.f32 %v2942, %v2960
        %2962 = vdwg.mxu0
        %v2967 = vunpack.c.l.b16 %v1060
        %v2968 = vunpack.c.h.b16 %v1060
        %v2969 = vunpack.c.l.b16 %v1061
        %v2970 = vunpack.c.h.b16 %v1061
        %v2971 = vunpack.c.l.b16 %v1062
        %v2972 = vunpack.c.h.b16 %v1062
        %v2973 = vunpack.c.l.b16 %v1063
        %v2974 = vunpack.c.h.b16 %v1063
        %v2975 = vpack.c.b16 %v2969, %v2967
        %v2976 = vpack.c.b16 %v2970, %v2968
        %v2977 = vpack.c.b16 %v2973, %v2971
        %v2978 = vpack.c.b16 %v2974, %v2972
        %v2999 = vunpack.c.l.b16 %v2777
        %v3000 = vunpack.c.h.b16 %v2777
        %v3001 = vunpack.c.l.b16 %v2778
        %v3002 = vunpack.c.h.b16 %v2778
        %v3003 = vunpack.c.l.b16 %v2779
        %v3004 = vunpack.c.h.b16 %v2779
        %v3005 = vunpack.c.l.b16 %v2780
        %v3006 = vunpack.c.h.b16 %v2780
        %v3007 = vunpack.c.l.b16 %v2781
        %v3008 = vunpack.c.h.b16 %v2781
        %v3009 = vunpack.c.l.b16 %v2782
        %v3010 = vunpack.c.h.b16 %v2782
        %v3011 = vunpack.c.l.b16 %v2783
        %v3012 = vunpack.c.h.b16 %v2783
        %v3013 = vunpack.c.l.b16 %v2784
        %v3014 = vunpack.c.h.b16 %v2784
        %v3015 = vunpack.c.l.b16 %v2785
        %v3016 = vunpack.c.h.b16 %v2785
        %v3017 = vunpack.c.l.b16 %v2786
        %v3018 = vunpack.c.h.b16 %v2786
        %v3019 = vunpack.c.l.b16 %v2787
        %v3020 = vunpack.c.h.b16 %v2787
        %v3021 = vunpack.c.l.b16 %v2788
        %v3022 = vunpack.c.h.b16 %v2788
        %v3023 = vunpack.c.l.b16 %v2789
        %v3024 = vunpack.c.h.b16 %v2789
        %v3025 = vunpack.c.l.b16 %v2790
        %v3026 = vunpack.c.h.b16 %v2790
        %v3027 = vunpack.c.l.b16 %v2791
        %v3028 = vunpack.c.h.b16 %v2791
        %v3029 = vunpack.c.l.b16 %v2792
        %v3030 = vunpack.c.h.b16 %v2792
        %v3031 = vpack.c.b16 %v3001, %v2999
        %v3032 = vpack.c.b16 %v3002, %v3000
        %v3033 = vpack.c.b16 %v3005, %v3003
        %v3034 = vpack.c.b16 %v3006, %v3004
        %v3035 = vpack.c.b16 %v3009, %v3007
        %v3036 = vpack.c.b16 %v3010, %v3008
        %v3037 = vpack.c.b16 %v3013, %v3011
        %v3038 = vpack.c.b16 %v3014, %v3012
        %v3039 = vpack.c.b16 %v3017, %v3015
        %v3040 = vpack.c.b16 %v3018, %v3016
        %v3041 = vpack.c.b16 %v3021, %v3019
        %v3042 = vpack.c.b16 %v3022, %v3020
        %v3043 = vpack.c.b16 %v3025, %v3023
        %v3044 = vpack.c.b16 %v3026, %v3024
        %v3045 = vpack.c.b16 %v3029, %v3027
        %v3046 = vpack.c.b16 %v3030, %v3028
        %3063 = vmatpush.bf16.xpose.msra.mxu0 %v3045
        %3064 = vmatpush.bf16.xpose.msra.mxu0 %v3043
        %3065 = vmatpush.bf16.xpose.msra.mxu0 %v3041
        %3066 = vmatpush.bf16.xpose.msra.mxu0 %v3039
        %3067 = vmatpush.bf16.xpose.msra.mxu0 %v3037
        %3068 = vmatpush.bf16.xpose.msra.mxu0 %v3035
        %3069 = vmatpush.bf16.xpose.msra.mxu0 %v3033
        %3070 = vmatpush.bf16.xpose.msra.mxu0 %v3031
        %3071 = vmatmul.bf16.gmra.mxu0 %v2975
        %v3072 = vpop.f32.mrf.mxu0
        %v3073 = vadd.f32 0.0, %v3072
        %v3074 = vpop.f32.mrf.mxu0
        %v3075 = vadd.f32 0.0, %v3074
        %3076 = vmatmul.bf16.gmra.mxu0 %v2977
        %v3077 = vpop.f32.mrf.mxu0
        %v3078 = vadd.f32 0.0, %v3077
        %v3079 = vpop.f32.mrf.mxu0
        %v3080 = vadd.f32 0.0, %v3079
        %3081 = vdwg.mxu0
        %3082 = vmatpush.bf16.xpose.msra.mxu0 %v3046
        %3083 = vmatpush.bf16.xpose.msra.mxu0 %v3044
        %3084 = vmatpush.bf16.xpose.msra.mxu0 %v3042
        %3085 = vmatpush.bf16.xpose.msra.mxu0 %v3040
        %3086 = vmatpush.bf16.xpose.msra.mxu0 %v3038
        %3087 = vmatpush.bf16.xpose.msra.mxu0 %v3036
        %3088 = vmatpush.bf16.xpose.msra.mxu0 %v3034
        %3089 = vmatpush.bf16.xpose.msra.mxu0 %v3032
        %3090 = vmatmul.bf16.gmra.mxu0 %v2976
        %v3091 = vpop.f32.mrf.mxu0
        %v3092 = vadd.f32 %v3073, %v3091
        %v3093 = vpop.f32.mrf.mxu0
        %v3094 = vadd.f32 %v3075, %v3093
        %3095 = vmatmul.bf16.gmra.mxu0 %v2978
        %v3096 = vpop.f32.mrf.mxu0
        %v3097 = vadd.f32 %v3078, %v3096
        %v3098 = vpop.f32.mrf.mxu0
        %v3099 = vadd.f32 %v3080, %v3098
        %3100 = vdwg.mxu0
        %v3105 = vunpack.c.l.b16 %v1064
        %v3106 = vunpack.c.h.b16 %v1064
        %v3107 = vunpack.c.l.b16 %v1065
        %v3108 = vunpack.c.h.b16 %v1065
        %v3109 = vunpack.c.l.b16 %v1066
        %v3110 = vunpack.c.h.b16 %v1066
        %v3111 = vunpack.c.l.b16 %v1067
        %v3112 = vunpack.c.h.b16 %v1067
        %v3113 = vpack.c.b16 %v3107, %v3105
        %v3114 = vpack.c.b16 %v3108, %v3106
        %v3115 = vpack.c.b16 %v3111, %v3109
        %v3116 = vpack.c.b16 %v3112, %v3110
        %v3137 = vunpack.c.l.b16 %v2793
        %v3138 = vunpack.c.h.b16 %v2793
        %v3139 = vunpack.c.l.b16 %v2794
        %v3140 = vunpack.c.h.b16 %v2794
        %v3141 = vunpack.c.l.b16 %v2795
        %v3142 = vunpack.c.h.b16 %v2795
        %v3143 = vunpack.c.l.b16 %v2796
        %v3144 = vunpack.c.h.b16 %v2796
        %v3145 = vunpack.c.l.b16 %v2797
        %v3146 = vunpack.c.h.b16 %v2797
        %v3147 = vunpack.c.l.b16 %v2798
        %v3148 = vunpack.c.h.b16 %v2798
        %v3149 = vunpack.c.l.b16 %v2799
        %v3150 = vunpack.c.h.b16 %v2799
        %v3151 = vunpack.c.l.b16 %v2800
        %v3152 = vunpack.c.h.b16 %v2800
        %v3153 = vunpack.c.l.b16 %v2801
        %v3154 = vunpack.c.h.b16 %v2801
        %v3155 = vunpack.c.l.b16 %v2802
        %v3156 = vunpack.c.h.b16 %v2802
        %v3157 = vunpack.c.l.b16 %v2803
        %v3158 = vunpack.c.h.b16 %v2803
        %v3159 = vunpack.c.l.b16 %v2804
        %v3160 = vunpack.c.h.b16 %v2804
        %v3161 = vunpack.c.l.b16 %v2805
        %v3162 = vunpack.c.h.b16 %v2805
        %v3163 = vunpack.c.l.b16 %v2806
        %v3164 = vunpack.c.h.b16 %v2806
        %v3165 = vunpack.c.l.b16 %v2807
        %v3166 = vunpack.c.h.b16 %v2807
        %v3167 = vunpack.c.l.b16 %v2808
        %v3168 = vunpack.c.h.b16 %v2808
        %v3169 = vpack.c.b16 %v3139, %v3137
        %v3170 = vpack.c.b16 %v3140, %v3138
        %v3171 = vpack.c.b16 %v3143, %v3141
        %v3172 = vpack.c.b16 %v3144, %v3142
        %v3173 = vpack.c.b16 %v3147, %v3145
        %v3174 = vpack.c.b16 %v3148, %v3146
        %v3175 = vpack.c.b16 %v3151, %v3149
        %v3176 = vpack.c.b16 %v3152, %v3150
        %v3177 = vpack.c.b16 %v3155, %v3153
        %v3178 = vpack.c.b16 %v3156, %v3154
        %v3179 = vpack.c.b16 %v3159, %v3157
        %v3180 = vpack.c.b16 %v3160, %v3158
        %v3181 = vpack.c.b16 %v3163, %v3161
        %v3182 = vpack.c.b16 %v3164, %v3162
        %v3183 = vpack.c.b16 %v3167, %v3165
        %v3184 = vpack.c.b16 %v3168, %v3166
        %3201 = vmatpush.bf16.xpose.msra.mxu0 %v3183
        %3202 = vmatpush.bf16.xpose.msra.mxu0 %v3181
        %3203 = vmatpush.bf16.xpose.msra.mxu0 %v3179
        %3204 = vmatpush.bf16.xpose.msra.mxu0 %v3177
        %3205 = vmatpush.bf16.xpose.msra.mxu0 %v3175
        %3206 = vmatpush.bf16.xpose.msra.mxu0 %v3173
        %3207 = vmatpush.bf16.xpose.msra.mxu0 %v3171
        %3208 = vmatpush.bf16.xpose.msra.mxu0 %v3169
        %3209 = vmatmul.bf16.gmra.mxu0 %v3113
        %v3210 = vpop.f32.mrf.mxu0
        %v3211 = vadd.f32 0.0, %v3210
        %v3212 = vpop.f32.mrf.mxu0
        %v3213 = vadd.f32 0.0, %v3212
        %3214 = vmatmul.bf16.gmra.mxu0 %v3115
        %v3215 = vpop.f32.mrf.mxu0
        %v3216 = vadd.f32 0.0, %v3215
        %v3217 = vpop.f32.mrf.mxu0
        %v3218 = vadd.f32 0.0, %v3217
        %3219 = vdwg.mxu0
        %3220 = vmatpush.bf16.xpose.msra.mxu0 %v3184
        %3221 = vmatpush.bf16.xpose.msra.mxu0 %v3182
        %3222 = vmatpush.bf16.xpose.msra.mxu0 %v3180
        %3223 = vmatpush.bf16.xpose.msra.mxu0 %v3178
        %3224 = vmatpush.bf16.xpose.msra.mxu0 %v3176
        %3225 = vmatpush.bf16.xpose.msra.mxu0 %v3174
        %3226 = vmatpush.bf16.xpose.msra.mxu0 %v3172
        %3227 = vmatpush.bf16.xpose.msra.mxu0 %v3170
        %3228 = vmatmul.bf16.gmra.mxu0 %v3114
        %v3229 = vpop.f32.mrf.mxu0
        %v3230 = vadd.f32 %v3211, %v3229
        %v3231 = vpop.f32.mrf.mxu0
        %v3232 = vadd.f32 %v3213, %v3231
        %3233 = vmatmul.bf16.gmra.mxu0 %v3116
        %v3234 = vpop.f32.mrf.mxu0
        %v3235 = vadd.f32 %v3216, %v3234
        %v3236 = vpop.f32.mrf.mxu0
        %v3237 = vadd.f32 %v3218, %v3236
        %3238 = vdwg.mxu0
        %v3243 = vunpack.c.l.b16 %v1068
        %v3244 = vunpack.c.h.b16 %v1068
        %v3245 = vunpack.c.l.b16 %v1069
        %v3246 = vunpack.c.h.b16 %v1069
        %v3247 = vunpack.c.l.b16 %v1070
        %v3248 = vunpack.c.h.b16 %v1070
        %v3249 = vunpack.c.l.b16 %v1071
        %v3250 = vunpack.c.h.b16 %v1071
        %v3251 = vpack.c.b16 %v3245, %v3243
        %v3252 = vpack.c.b16 %v3246, %v3244
        %v3253 = vpack.c.b16 %v3249, %v3247
        %v3254 = vpack.c.b16 %v3250, %v3248
        %v3275 = vunpack.c.l.b16 %v2809
        %v3276 = vunpack.c.h.b16 %v2809
        %v3277 = vunpack.c.l.b16 %v2810
        %v3278 = vunpack.c.h.b16 %v2810
        %v3279 = vunpack.c.l.b16 %v2811
        %v3280 = vunpack.c.h.b16 %v2811
        %v3281 = vunpack.c.l.b16 %v2812
        %v3282 = vunpack.c.h.b16 %v2812
        %v3283 = vunpack.c.l.b16 %v2813
        %v3284 = vunpack.c.h.b16 %v2813
        %v3285 = vunpack.c.l.b16 %v2814
        %v3286 = vunpack.c.h.b16 %v2814
        %v3287 = vunpack.c.l.b16 %v2815
        %v3288 = vunpack.c.h.b16 %v2815
        %v3289 = vunpack.c.l.b16 %v2816
        %v3290 = vunpack.c.h.b16 %v2816
        %v3291 = vunpack.c.l.b16 %v2817
        %v3292 = vunpack.c.h.b16 %v2817
        %v3293 = vunpack.c.l.b16 %v2818
        %v3294 = vunpack.c.h.b16 %v2818
        %v3295 = vunpack.c.l.b16 %v2819
        %v3296 = vunpack.c.h.b16 %v2819
        %v3297 = vunpack.c.l.b16 %v2820
        %v3298 = vunpack.c.h.b16 %v2820
        %v3299 = vunpack.c.l.b16 %v2821
        %v3300 = vunpack.c.h.b16 %v2821
        %v3301 = vunpack.c.l.b16 %v2822
        %v3302 = vunpack.c.h.b16 %v2822
        %v3303 = vunpack.c.l.b16 %v2823
        %v3304 = vunpack.c.h.b16 %v2823
        %v3305 = vunpack.c.l.b16 %v2824
        %v3306 = vunpack.c.h.b16 %v2824
        %v3307 = vpack.c.b16 %v3277, %v3275
        %v3308 = vpack.c.b16 %v3278, %v3276
        %v3309 = vpack.c.b16 %v3281, %v3279
        %v3310 = vpack.c.b16 %v3282, %v3280
        %v3311 = vpack.c.b16 %v3285, %v3283
        %v3312 = vpack.c.b16 %v3286, %v3284
        %v3313 = vpack.c.b16 %v3289, %v3287
        %v3314 = vpack.c.b16 %v3290, %v3288
        %v3315 = vpack.c.b16 %v3293, %v3291
        %v3316 = vpack.c.b16 %v3294, %v3292
        %v3317 = vpack.c.b16 %v3297, %v3295
        %v3318 = vpack.c.b16 %v3298, %v3296
        %v3319 = vpack.c.b16 %v3301, %v3299
        %v3320 = vpack.c.b16 %v3302, %v3300
        %v3321 = vpack.c.b16 %v3305, %v3303
        %v3322 = vpack.c.b16 %v3306, %v3304
        %3339 = vmatpush.bf16.xpose.msra.mxu0 %v3321
        %3340 = vmatpush.bf16.xpose.msra.mxu0 %v3319
        %3341 = vmatpush.bf16.xpose.msra.mxu0 %v3317
        %3342 = vmatpush.bf16.xpose.msra.mxu0 %v3315
        %3343 = vmatpush.bf16.xpose.msra.mxu0 %v3313
        %3344 = vmatpush.bf16.xpose.msra.mxu0 %v3311
        %3345 = vmatpush.bf16.xpose.msra.mxu0 %v3309
        %3346 = vmatpush.bf16.xpose.msra.mxu0 %v3307
        %3347 = vmatmul.bf16.gmra.mxu0 %v3251
        %v3348 = vpop.f32.mrf.mxu0
        %v3349 = vadd.f32 0.0, %v3348
        %v3350 = vpop.f32.mrf.mxu0
        %v3351 = vadd.f32 0.0, %v3350
        %3352 = vmatmul.bf16.gmra.mxu0 %v3253
        %v3353 = vpop.f32.mrf.mxu0
        %v3354 = vadd.f32 0.0, %v3353
        %v3355 = vpop.f32.mrf.mxu0
        %v3356 = vadd.f32 0.0, %v3355
        %3357 = vdwg.mxu0
        %3358 = vmatpush.bf16.xpose.msra.mxu0 %v3322
        %3359 = vmatpush.bf16.xpose.msra.mxu0 %v3320
        %3360 = vmatpush.bf16.xpose.msra.mxu0 %v3318
        %3361 = vmatpush.bf16.xpose.msra.mxu0 %v3316
        %3362 = vmatpush.bf16.xpose.msra.mxu0 %v3314
        %3363 = vmatpush.bf16.xpose.msra.mxu0 %v3312
        %3364 = vmatpush.bf16.xpose.msra.mxu0 %v3310
        %3365 = vmatpush.bf16.xpose.msra.mxu0 %v3308
        %3366 = vmatmul.bf16.gmra.mxu0 %v3252
        %v3367 = vpop.f32.mrf.mxu0
        %v3368 = vadd.f32 %v3349, %v3367
        %v3369 = vpop.f32.mrf.mxu0
        %v3370 = vadd.f32 %v3351, %v3369
        %3371 = vmatmul.bf16.gmra.mxu0 %v3254
        %v3372 = vpop.f32.mrf.mxu0
        %v3373 = vadd.f32 %v3354, %v3372
        %v3374 = vpop.f32.mrf.mxu0
        %v3375 = vadd.f32 %v3356, %v3374
        %3376 = vdwg.mxu0
        %v3377 = vpack.c.bf16 %v2956, %v2954
        %v3378 = vpack.c.bf16 %v2961, %v2959
        %v3379 = vpack.c.bf16 %v3094, %v3092
        %v3380 = vpack.c.bf16 %v3099, %v3097
        %v3381 = vpack.c.bf16 %v3232, %v3230
        %v3382 = vpack.c.bf16 %v3237, %v3235
        %v3383 = vpack.c.bf16 %v3370, %v3368
        %v3384 = vpack.c.bf16 %v3375, %v3373
        %v3385 = vld [vmem:[%s4] sm:$0x3]
        %v3386 = vld [vmem:[%s5] sm:$0xf]
        %3388 = vset.pattern.permute.xlu0 0
        %3389 = vperm.xlu0 %3388, %v3386
        %v3390 = vpop.permute.xlu0 %3389
        %3392 = vmatpush.bf16.msra.mxu0 %v3384
        %3393 = vmatpush.bf16.msra.mxu0 %v3383
        %3394 = vmatpush.bf16.msra.mxu0 %v3382
        %3395 = vmatpush.bf16.msra.mxu0 %v3381
        %3396 = vmatpush.bf16.msra.mxu0 %v3380
        %3397 = vmatpush.bf16.msra.mxu0 %v3379
        %3398 = vmatpush.bf16.msra.mxu0 %v3378
        %3399 = vmatpush.bf16.msra.mxu0 %v3377
        %3400 = vmatmul.bf16.gmra.mxu0 %v3385
        %v3401 = vpop.f32.mrf.mxu0
        %v3402 = vadd.f32 %v3390, %v3401
        %v3403 = vpop.f32.mrf.mxu0
        %3404 = vdwg.mxu0
        %3405 = vst [vmem:[%s281] sm:$0xf] %v3402
        %s3406 = sand.u32 %s180, 1
        %s3407 = scalar_lea.sflag [#allocation5], %s3406
        %s3408 = sand.u32 %s180, 1
        %s3409 = smul.addr %s3408, 4
        %s3410 = scalar_lea.vmem [#allocation4], %s3409
        // Predicated region
        $region49: #{tpu_custom_call.1} parent=43 // pred_check
          %p3411 = pneg %p190
        $region50: #{tpu_custom_call.1} parent=43 // pred_check_branch
          %3413 = sbr.rel (%p3411) target = $region52
        $region51: #{tpu_custom_call.1} parent=43 // pred_region
          %3415 = vsyncadd %s3407, 0
          %s3416 = smul.addr %s24, 2
          %s3417 = sadd.s32 %s25, %s3416
          %s3418 = smul.addr %s3417, 4
          %s3419 = scalar_lea.hbm %s6, %s3418
          %s3421 = sshll.u32 %s3410, 4
          %s3422 = int_to_ptr.vmem [resolvable:$true] %s3421
          %s3423 = sshll.u32 %s3419, 4
          %s3424 = int_to_ptr.hbm [resolvable:$true] %s3423
          %3426 = dma.vmem_to_hbm [thread:$0]  %s3422, 64, %s3424, %s3407
        $region52: #{tpu_custom_call.1} parent=43 // pred_fallthru
          _
      $region44: #{tpu_custom_call.1} parent=5 // pred_fallthru
        _
      %p3427 = scmp.le.s32.totalorder 2, %s15
      // Predicated region
      $region53: #{tpu_custom_call.1} parent=5 // pred_check
        %p3428 = pneg %p3427
      $region54: #{tpu_custom_call.1} parent=5 // pred_check_branch
        %3430 = sbr.rel (%p3428) target = $region56
      $region55: #{tpu_custom_call.1} parent=5 // pred_region
        %s3431 = ssub.s32 %s15, 2
        // Predicated region
        $region57: #{tpu_custom_call.1} parent=55 // pred_check
          %p3432 = pneg %p196
        $region58: #{tpu_custom_call.1} parent=55 // pred_check_branch
          %3434 = sbr.rel (%p3432) target = $region60
        $region59: #{tpu_custom_call.1} parent=55 // pred_region
          %s3435 = sand.u32 %s181, 1
          %s3436 = scalar_lea.sflag [#allocation5], %s3435
          %s3437 = sand.u32 %s181, 1
          %s3438 = smul.addr %s3437, 4
          %s3439 = scalar_lea.vmem [#allocation4], %s3438
          %3441 = dma.done %s3436, 64
        $region60: #{tpu_custom_call.1} parent=55 // pred_fallthru
          _
      $region56: #{tpu_custom_call.1} parent=5 // pred_fallthru
        _
    $region6: #{tpu_custom_call.1} parent=1 // loop_footer
      %s19 = sadd.s32 1, %s15
    $region7: #{tpu_custom_call.1} parent=1 // loop_footer_branch
      %14 = sbr.rel target = $region3
    $region8: #{tpu_custom_call.1} parent=1 // loop_exit
      _
    %3442 = vsyncpa [#allocation5], 1
    %s3443 = scalar_lea.sflag [#allocation5], 1
    %3444 = vsyncpa %s3443, 1

</llo_original>
